<compile_context>
chip_gen: v7x
topology: tpu7x:2x2x1
jax: 0.10.0
libtpu: 0.0.40
codegen_flags: <defaults>
</compile_context>

<pallas_src>
import math

import jax
import jax.numpy as jnp
from jax.experimental import pallas as pl
from jax.experimental.pallas import tpu as pltpu

# ---- model hyper-params (small, deterministic) -------------------------------
B, C, H, W = 2, 3, 16, 32     # batch, RGB channels, image height (=seq len), width (=embed dim)
NH, HD = 4, 8                 # heads, head dim  (NH * HD == W)
MLP = 4 * W                   # MLP hidden dim (= 128: one full lane tile)
LN_EPS = 1e-5
NEG_INF = -1e30

# rows of the packed parameter-vector block (each row padded to MLP = 128 lanes)
(VEC_BQ, VEC_BK, VEC_BV, VEC_BO,
 VEC_G1, VEC_BE1, VEC_G2, VEC_BE2,
 VEC_B2, VEC_B1) = range(10)


# ---- Pallas kernel ------------------------------------------------------------
def _make_kernel(nb, lane_dense_out):
    """Kernel over n = nb*C*H stacked row-tokens (nb batch elements per grid step)."""
    n = nb * C * H

    def kernel(x_ref, wqkv_ref, wo_ref, w1_ref, w2_ref, vecs_ref, mask_ref,
               combw_ref, out_ref):
        x = x_ref[...]                                   # (n, W) f32

        # Packed bias / LayerNorm rows.  Each row is consumed exactly once below,
        # so its (1, width) -> (n, width) broadcast happens once per parameter
        # (no repeated, un-CSE'd broadcast_in_dim inside loops).
        def vrow(r, width=W):
            return vecs_ref[r:r + 1, :width]

        bq, bk, bv, bo = vrow(VEC_BQ), vrow(VEC_BK), vrow(VEC_BV), vrow(VEC_BO)
        g1, be1 = vrow(VEC_G1), vrow(VEC_BE1)
        g2, be2 = vrow(VEC_G2), vrow(VEC_BE2)
        b2 = vrow(VEC_B2)
        b1 = vrow(VEC_B1, MLP)                           # (1, MLP)

        # ---- LayerNorm 1 over all row-tokens (f32 elementwise; bf16 only on MXU) ----
        mu = jnp.mean(x, axis=-1, keepdims=True)
        var = jnp.mean((x - mu) ** 2, axis=-1, keepdims=True)
        xn = (x - mu) * jax.lax.rsqrt(var + LN_EPS) * g1 + be1
        xn_b = xn.astype(jnp.bfloat16)

        # ---- q/k/v: three separate 32-lane-wide matmuls (no lane slicing of a
        # fused (n, 3W) output).  The 1/sqrt(HD) scale is folded into wq/bq on host.
        q = jnp.dot(xn_b, wqkv_ref[0], preferred_element_type=jnp.float32) + bq
        k = jnp.dot(xn_b, wqkv_ref[1], preferred_element_type=jnp.float32) + bk
        v = jnp.dot(xn_b, wqkv_ref[2], preferred_element_type=jnp.float32) + bv

        # ---- MHSA: all (batch, channel) blocks batched into one (n, n) score
        # matrix per head; the precomputed additive block-diagonal mask (0 / -1e30)
        # keeps each token attending only inside its own H-row image block.
        # TODO(synk): if a bundle dump shows EUP/VPU binding, shrink the softmax to
        # the H=16 valid keys per token instead of the masked (n, n) block.
        mask = mask_ref[...]                             # (n, n) f32
        attn = None
        for h in range(NH):                              # NH = 4, unrolled
            sl = slice(h * HD, (h + 1) * HD)
            qh = q[:, sl].astype(jnp.bfloat16)           # (n, HD)
            kh = k[:, sl].astype(jnp.bfloat16)
            vh = v[:, sl].astype(jnp.bfloat16)
            s = jax.lax.dot_general(qh, kh, (((1,), (1,)), ((), ())),
                                    preferred_element_type=jnp.float32)
            s = s + mask
            m = jnp.max(s, axis=-1, keepdims=True)
            e = jnp.exp(s - m)
            p = e * pl.reciprocal(jnp.sum(e, axis=-1, keepdims=True), approx=True)
            oh = jnp.dot(p.astype(jnp.bfloat16), vh,
                         preferred_element_type=jnp.float32)        # (n, HD)
            # Per-head slice of the output projection (wo pre-split + pre-cast to
            # (NH, HD, W) bf16 on the host): concat_h(oh) @ wo == sum_h oh @ wo[h].
            contrib = jnp.dot(oh.astype(jnp.bfloat16), wo_ref[h],
                              preferred_element_type=jnp.float32)
            attn = contrib if attn is None else attn + contrib
        x1 = x + attn + bo                               # residual

        # ---- LayerNorm 2 + GELU MLP ----
        mu2 = jnp.mean(x1, axis=-1, keepdims=True)
        var2 = jnp.mean((x1 - mu2) ** 2, axis=-1, keepdims=True)
        xn2 = (x1 - mu2) * jax.lax.rsqrt(var2 + LN_EPS) * g2 + be2
        hdn = jnp.dot(xn2.astype(jnp.bfloat16), w1_ref[...],
                      preferred_element_type=jnp.float32) + b1
        # TODO(synk): PyTorch nn.GELU defaults to the exact erf form; tanh approx kept.
        hdn = jax.nn.gelu(hdn, approximate=True)
        mlp = jnp.dot(hdn.astype(jnp.bfloat16), w2_ref[...],
                      preferred_element_type=jnp.float32) + b2
        y = x1 + mlp                                     # (n, W) encoder output

        # ---- ThreeChannelsCombinator: per-batch weighted sum over channel blocks ----
        for b in range(nb):                              # nb <= 2, unrolled
            base = b * C * H
            comb = combw_ref[0] * y[base:base + H, :]
            for c in range(1, C):
                comb = comb + combw_ref[c] * y[base + c * H: base + (c + 1) * H, :]
            if lane_dense_out:
                # Lane-dense store: (H, W) -> (H*W//128, 128) so the output slab is
                # written with full-width (unmasked) vector stores.
                out_ref[b] = comb.reshape(H * W // 128, 128)
            else:
                out_ref[b] = comb

    return kernel


# ---- host-side one-time setup ---------------------------------------------------
def _batches_per_step(batch):
    """v7x has 2 TensorCores per chip -> give each core one batch element via a
    parallel grid; single-TC v5e/v6e merge the whole batch into one grid step."""
    try:
        kind = jax.devices()[0].device_kind.lower()
    except Exception:
        kind = ""
    return 1 if "v7" in kind else batch


def pack_params(p, batch):
    """One-time host-side parameter packing (hoisted out of the forward call path)."""
    nb = _batches_per_step(batch)
    scale = 1.0 / math.sqrt(HD)

    # Fold the softmax scale into the q projection; stack q/k/v weights; pre-cast.
    wqkv = jnp.stack([p["wq"] * scale, p["wk"], p["wv"]]).astype(jnp.bfloat16)  # (3,W,W)
    wo = p["wo"].reshape(NH, HD, W).astype(jnp.bfloat16)        # pre-split per head
    w1 = p["w1"].astype(jnp.bfloat16)
    w2 = p["w2"].astype(jnp.bfloat16)

    def row(v):  # pad a (1, k) vector to (1, MLP)
        v = v.astype(jnp.float32)
        return jnp.pad(v, ((0, 0), (0, MLP - v.shape[1])))

    vecs = jnp.concatenate(
        [row(p["bq"] * scale), row(p["bk"]), row(p["bv"]), row(p["bo"]),
         row(p["g1"]), row(p["be1"]), row(p["g2"]), row(p["be2"]),
         row(p["b2"]), row(p["b1"])], axis=0)                   # (10, MLP) f32

    # Additive block-diagonal attention mask: tokens attend only within their own
    # (batch, channel) image block of H rows.
    n = nb * C * H
    r = jax.lax.broadcasted_iota(jnp.int32, (n, n), 0) // H
    c = jax.lax.broadcasted_iota(jnp.int32, (n, n), 1) // H
    mask = jnp.where(r == c, 0.0, NEG_INF).astype(jnp.float32)

    packed = {"nb": nb, "wqkv": wqkv, "wo": wo, "w1": w1, "w2": w2,
              "vecs": vecs, "mask": mask, "combw": p["combw"].astype(jnp.float32)}
    # Materialize now so no packing work remains on the per-call path.
    jax.block_until_ready([v for v in packed.values() if isinstance(v, jax.Array)])
    return packed


# ---- wrapper -------------------------------------------------------------------
def rgb_combinator(x, packed, *, lane_dense_out=True):
    bx, cx, hx, wx = x.shape
    assert (cx, hx, wx) == (C, H, W), (x.shape, (C, H, W))
    nb = packed["nb"]
    assert bx % nb == 0
    n = nb * C * H

    # Stack all channel images along the row (token) axis -> no in-kernel reshape.
    x_rows = x.reshape(bx * C * H, W).astype(jnp.float32)

    def full(arr):
        return pl.BlockSpec(arr.shape, lambda *_: (0,) * arr.ndim)

    in_specs = [
        pl.BlockSpec((n, W), lambda i: (i, 0)),                 # row-token slab
        full(packed["wqkv"]),
        full(packed["wo"]),
        full(packed["w1"]),
        full(packed["w2"]),
        full(packed["vecs"]),
        full(packed["mask"]),
        pl.BlockSpec(memory_space=pltpu.MemorySpace.SMEM),      # combinator weights
    ]

    rows_out = H * W // 128
    if lane_dense_out:
        out_shape = jax.ShapeDtypeStruct((bx, rows_out, 128), jnp.float32)
        out_spec = pl.BlockSpec((nb, rows_out, 128), lambda i: (i, 0, 0))
    else:
        out_shape = jax.ShapeDtypeStruct((bx, H, W), jnp.float32)
        out_spec = pl.BlockSpec((nb, H, W), lambda i: (i, 0, 0))

    out = pl.pallas_call(
        _make_kernel(nb, lane_dense_out),
        out_shape=out_shape,
        grid_spec=pltpu.PrefetchScalarGridSpec(
            num_scalar_prefetch=0,
            grid=(bx // nb,),
            in_specs=in_specs,
            out_specs=out_spec,
        ),
        compiler_params=pltpu.CompilerParams(
            # one batch element per step on multi-TC v7x (parallel across cores),
            # a single merged step on single-TC v5e/v6e.
            dimension_semantics=("parallel",) if nb == 1 else ("arbitrary",)),
    )(x_rows, packed["wqkv"], packed["wo"], packed["w1"], packed["w2"],
      packed["vecs"], packed["mask"], packed["combw"])

    return out.reshape(bx, H, W)


# ---- pure-JAX reference (same math, for sanity check) ---------------------------
def ref_forward(x, p):
    _B, _C, _H, _W = x.shape
    xx = x.reshape(_B * _C, _H, _W).astype(jnp.float32)

    mu = xx.mean(-1, keepdims=True)
    var = ((xx - mu) ** 2).mean(-1, keepdims=True)
    xn = (xx - mu) * jax.lax.rsqrt(var + LN_EPS) * p["g1"] + p["be1"]

    q = xn @ p["wq"] + p["bq"]
    k = xn @ p["wk"] + p["bk"]
    v = xn @ p["wv"] + p["bv"]
    q = q.reshape(_B * _C, _H, NH, HD).transpose(0, 2, 1, 3)
    k = k.reshape(_B * _C, _H, NH, HD).transpose(0, 2, 1, 3)
    v = v.reshape(_B * _C, _H, NH, HD).transpose(0, 2, 1, 3)
    s = jnp.einsum("bnqd,bnkd->bnqk", q, k) / jnp.sqrt(jnp.float32(HD))
    pr = jax.nn.softmax(s, axis=-1)
    a = jnp.einsum("bnqk,bnkd->bnqd", pr, v).transpose(0, 2, 1, 3).reshape(_B * _C, _H, _W)
    a = a @ p["wo"] + p["bo"]
    x1 = xx + a

    mu2 = x1.mean(-1, keepdims=True)
    var2 = ((x1 - mu2) ** 2).mean(-1, keepdims=True)
    xn2 = (x1 - mu2) * jax.lax.rsqrt(var2 + LN_EPS) * p["g2"] + p["be2"]
    hdn = jax.nn.gelu(xn2 @ p["w1"] + p["b1"], approximate=True)
    y = (x1 + hdn @ p["w2"] + p["b2"]).reshape(_B, _C, _H, _W)

    return jnp.einsum("bchw,c->bhw", y, p["combw"])


# ---- parameter init (deterministic, synthetic) -----------------------------------
def init_params(key):
    ks = jax.random.split(key, 12)
    n = lambda k, shape, s=0.05: (s * jax.random.normal(k, shape)).astype(jnp.float32)
    return {
        "wq": n(ks[0], (W, W)), "wk": n(ks[1], (W, W)),
        "wv": n(ks[2], (W, W)), "wo": n(ks[3], (W, W)),
        "bq": n(ks[4], (1, W)), "bk": n(ks[5], (1, W)),
        "bv": n(ks[6], (1, W)), "bo": n(ks[7], (1, W)),
        "g1": jnp.ones((1, W), jnp.float32), "be1": jnp.zeros((1, W), jnp.float32),
        "g2": jnp.ones((1, W), jnp.float32), "be2": jnp.zeros((1, W), jnp.float32),
        "w1": n(ks[8], (W, MLP)), "b1": n(ks[9], (1, MLP)),
        "w2": n(ks[10], (MLP, W)), "b2": n(ks[11], (1, W)),
        "combw": jnp.array([0.5, 0.3, 0.2], jnp.float32),
    }


if __name__ == "__main__":
    key = jax.random.PRNGKey(0)
    kx, kp = jax.random.split(key)
    x = jax.random.normal(kx, (B, C, H, W), dtype=jnp.float32)
    params = init_params(kp)
    packed = pack_params(params, B)          # one-time packing, off the call path

    try:
        out = jax.block_until_ready(rgb_combinator(x, packed, lane_dense_out=True))
    except Exception:
        # TODO(synk): drop this fallback once the (H, W) -> (H*W//128, 128)
        # lane-dense value reshape lowers on every Mosaic toolchain.
        out = jax.block_until_ready(rgb_combinator(x, packed, lane_dense_out=False))

    ref = jax.block_until_ready(ref_forward(x, params))

    assert out.shape == (B, H, W), out.shape
    max_err = float(jnp.max(jnp.abs(out - ref)))
    assert jnp.allclose(out, ref, atol=5e-2, rtol=5e-2), max_err
    print("KERNEL_OK")
</pallas_src>

<mosaic_0001>
module attributes {stable_mosaic.version = 11 : i64} {
  func.func @kernel(%arg0: i32, %arg1: memref<96x32xf32, #tpu.memory_space<vmem>>, %arg2: memref<3x32x32xbf16, #tpu.memory_space<vmem>>, %arg3: memref<4x8x32xbf16, #tpu.memory_space<vmem>>, %arg4: memref<32x128xbf16, #tpu.memory_space<vmem>>, %arg5: memref<128x32xbf16, #tpu.memory_space<vmem>>, %arg6: memref<10x128xf32, #tpu.memory_space<vmem>>, %arg7: memref<96x96xf32, #tpu.memory_space<vmem>>, %arg8: memref<3xf32, #tpu.memory_space<smem>>, %arg9: memref<2x4x128xf32, #tpu.memory_space<vmem>>) attributes {dimension_semantics = [#tpu.dimension_semantics<arbitrary>], iteration_bounds = array<i64: 1>, scalar_prefetch = 0 : i64, scratch_operands = 0 : i64, tpu.core_type = #tpu.core_type<tc>, window_params = [{transform_indices = @transform_0, window_bounds = array<i64: 96, 32>}, {pipeline_mode = #tpu.pipeline_mode<synchronous>, transform_indices = @transform_1, window_bounds = array<i64: 3, 32, 32>}, {pipeline_mode = #tpu.pipeline_mode<synchronous>, transform_indices = @transform_2, window_bounds = array<i64: 4, 8, 32>}, {pipeline_mode = #tpu.pipeline_mode<synchronous>, transform_indices = @transform_3, window_bounds = array<i64: 32, 128>}, {pipeline_mode = #tpu.pipeline_mode<synchronous>, transform_indices = @transform_4, window_bounds = array<i64: 128, 32>}, {pipeline_mode = #tpu.pipeline_mode<synchronous>, transform_indices = @transform_5, window_bounds = array<i64: 10, 128>}, {pipeline_mode = #tpu.pipeline_mode<synchronous>, transform_indices = @transform_6, window_bounds = array<i64: 96, 96>}, {transform_indices = @transform_7, window_bounds = array<i64: 3>}, {transform_indices = @transform_8, window_bounds = array<i64: 2, 4, 128>}]} {
    %c0 = arith.constant 0 : index
    %c0_0 = arith.constant 0 : index
    %0 = vector.load %arg1[%c0, %c0_0] : memref<96x32xf32, #tpu.memory_space<vmem>>, vector<96x32xf32>
    %c0_1 = arith.constant 0 : index
    %c0_2 = arith.constant 0 : index
    %1 = vector.load %arg6[%c0_1, %c0_2] : memref<10x128xf32, #tpu.memory_space<vmem>>, vector<1x32xf32>
    %c1 = arith.constant 1 : index
    %c0_3 = arith.constant 0 : index
    %2 = vector.load %arg6[%c1, %c0_3] : memref<10x128xf32, #tpu.memory_space<vmem>>, vector<1x32xf32>
    %c2 = arith.constant 2 : index
    %c0_4 = arith.constant 0 : index
    %3 = vector.load %arg6[%c2, %c0_4] : memref<10x128xf32, #tpu.memory_space<vmem>>, vector<1x32xf32>
    %c3 = arith.constant 3 : index
    %c0_5 = arith.constant 0 : index
    %4 = vector.load %arg6[%c3, %c0_5] : memref<10x128xf32, #tpu.memory_space<vmem>>, vector<1x32xf32>
    %c4 = arith.constant 4 : index
    %c0_6 = arith.constant 0 : index
    %5 = vector.load %arg6[%c4, %c0_6] : memref<10x128xf32, #tpu.memory_space<vmem>>, vector<1x32xf32>
    %c5 = arith.constant 5 : index
    %c0_7 = arith.constant 0 : index
    %6 = vector.load %arg6[%c5, %c0_7] : memref<10x128xf32, #tpu.memory_space<vmem>>, vector<1x32xf32>
    %c6 = arith.constant 6 : index
    %c0_8 = arith.constant 0 : index
    %7 = vector.load %arg6[%c6, %c0_8] : memref<10x128xf32, #tpu.memory_space<vmem>>, vector<1x32xf32>
    %c7 = arith.constant 7 : index
    %c0_9 = arith.constant 0 : index
    %8 = vector.load %arg6[%c7, %c0_9] : memref<10x128xf32, #tpu.memory_space<vmem>>, vector<1x32xf32>
    %c8 = arith.constant 8 : index
    %c0_10 = arith.constant 0 : index
    %9 = vector.load %arg6[%c8, %c0_10] : memref<10x128xf32, #tpu.memory_space<vmem>>, vector<1x32xf32>
    %c9 = arith.constant 9 : index
    %c0_11 = arith.constant 0 : index
    %10 = vector.load %arg6[%c9, %c0_11] : memref<10x128xf32, #tpu.memory_space<vmem>>, vector<1x128xf32>
    %cst = arith.constant dense<0.000000e+00> : vector<96xf32>
    %11 = vector.multi_reduction <add>, %0, %cst [1] : vector<96x32xf32> to vector<96xf32>
    %12 = vector.shape_cast %11 : vector<96xf32> to vector<96x1xf32>
    %cst_12 = arith.constant 3.200000e+01 : f32
    %13 = vector.broadcast %cst_12 : f32 to vector<96x1xf32>
    %14 = arith.divf %12, %13 : vector<96x1xf32>
    %15 = vector.broadcast %14 : vector<96x1xf32> to vector<96x32xf32>
    %16 = arith.subf %0, %15 : vector<96x32xf32>
    %17 = arith.mulf %16, %16 : vector<96x32xf32>
    %cst_13 = arith.constant dense<0.000000e+00> : vector<96xf32>
    %18 = vector.multi_reduction <add>, %17, %cst_13 [1] : vector<96x32xf32> to vector<96xf32>
    %19 = vector.shape_cast %18 : vector<96xf32> to vector<96x1xf32>
    %cst_14 = arith.constant 3.200000e+01 : f32
    %20 = vector.broadcast %cst_14 : f32 to vector<96x1xf32>
    %21 = arith.divf %19, %20 : vector<96x1xf32>
    %22 = vector.broadcast %14 : vector<96x1xf32> to vector<96x32xf32>
    %23 = arith.subf %0, %22 : vector<96x32xf32>
    %cst_15 = arith.constant 9.99999974E-6 : f32
    %24 = vector.broadcast %cst_15 : f32 to vector<96x1xf32>
    %25 = arith.addf %21, %24 : vector<96x1xf32>
    %26 = math.rsqrt %25 : vector<96x1xf32>
    %27 = vector.broadcast %26 : vector<96x1xf32> to vector<96x32xf32>
    %28 = arith.mulf %23, %27 : vector<96x32xf32>
    %29 = vector.broadcast %5 : vector<1x32xf32> to vector<96x32xf32>
    %30 = arith.mulf %28, %29 : vector<96x32xf32>
    %31 = vector.broadcast %6 : vector<1x32xf32> to vector<96x32xf32>
    %32 = arith.addf %30, %31 : vector<96x32xf32>
    %33 = arith.truncf %32 : vector<96x32xf32> to vector<96x32xbf16>
    %c0_16 = arith.constant 0 : index
    %c0_17 = arith.constant 0 : index
    %c0_18 = arith.constant 0 : index
    %34 = vector.load %arg2[%c0_16, %c0_17, %c0_18] : memref<3x32x32xbf16, #tpu.memory_space<vmem>>, vector<1x32x32xbf16>
    %35 = vector.shape_cast %34 : vector<1x32x32xbf16> to vector<32x32xbf16>
    %cst_19 = arith.constant dense<0.000000e+00> : vector<96x32xf32>
    %36 = tpu.matmul %33, %35, %cst_19 {dimension_numbers = #tpu.dot_dimension_numbers<[1], [0], [0], [1], [0, 0, 1, 1], [], []>} : vector<96x32xbf16>, vector<32x32xbf16>, vector<96x32xf32> -> vector<96x32xf32>
    %37 = vector.broadcast %1 : vector<1x32xf32> to vector<96x32xf32>
    %38 = arith.addf %36, %37 : vector<96x32xf32>
    %c1_20 = arith.constant 1 : index
    %c0_21 = arith.constant 0 : index
    %c0_22 = arith.constant 0 : index
    %39 = vector.load %arg2[%c1_20, %c0_21, %c0_22] : memref<3x32x32xbf16, #tpu.memory_space<vmem>>, vector<1x32x32xbf16>
    %40 = vector.shape_cast %39 : vector<1x32x32xbf16> to vector<32x32xbf16>
    %cst_23 = arith.constant dense<0.000000e+00> : vector<96x32xf32>
    %41 = tpu.matmul %33, %40, %cst_23 {dimension_numbers = #tpu.dot_dimension_numbers<[1], [0], [0], [1], [0, 0, 1, 1], [], []>} : vector<96x32xbf16>, vector<32x32xbf16>, vector<96x32xf32> -> vector<96x32xf32>
    %42 = vector.broadcast %2 : vector<1x32xf32> to vector<96x32xf32>
    %43 = arith.addf %41, %42 : vector<96x32xf32>
    %c2_24 = arith.constant 2 : index
    %c0_25 = arith.constant 0 : index
    %c0_26 = arith.constant 0 : index
    %44 = vector.load %arg2[%c2_24, %c0_25, %c0_26] : memref<3x32x32xbf16, #tpu.memory_space<vmem>>, vector<1x32x32xbf16>
    %45 = vector.shape_cast %44 : vector<1x32x32xbf16> to vector<32x32xbf16>
    %cst_27 = arith.constant dense<0.000000e+00> : vector<96x32xf32>
    %46 = tpu.matmul %33, %45, %cst_27 {dimension_numbers = #tpu.dot_dimension_numbers<[1], [0], [0], [1], [0, 0, 1, 1], [], []>} : vector<96x32xbf16>, vector<32x32xbf16>, vector<96x32xf32> -> vector<96x32xf32>
    %47 = vector.broadcast %3 : vector<1x32xf32> to vector<96x32xf32>
    %48 = arith.addf %46, %47 : vector<96x32xf32>
    %c0_28 = arith.constant 0 : index
    %c0_29 = arith.constant 0 : index
    %49 = vector.load %arg7[%c0_28, %c0_29] : memref<96x96xf32, #tpu.memory_space<vmem>>, vector<96x96xf32>
    %50 = vector.extract_strided_slice %38 {offsets = [0, 0], sizes = [96, 8], strides = [1, 1]} : vector<96x32xf32> to vector<96x8xf32>
    %51 = arith.truncf %50 : vector<96x8xf32> to vector<96x8xbf16>
    %52 = vector.extract_strided_slice %43 {offsets = [0, 0], sizes = [96, 8], strides = [1, 1]} : vector<96x32xf32> to vector<96x8xf32>
    %53 = arith.truncf %52 : vector<96x8xf32> to vector<96x8xbf16>
    %54 = vector.extract_strided_slice %48 {offsets = [0, 0], sizes = [96, 8], strides = [1, 1]} : vector<96x32xf32> to vector<96x8xf32>
    %55 = arith.truncf %54 : vector<96x8xf32> to vector<96x8xbf16>
    %cst_30 = arith.constant dense<0.000000e+00> : vector<96x96xf32>
    %56 = tpu.matmul %51, %53, %cst_30 {dimension_numbers = #tpu.dot_dimension_numbers<[1], [1], [0], [0], [0, 0, 1, 0], [], []>} : vector<96x8xbf16>, vector<96x8xbf16>, vector<96x96xf32> -> vector<96x96xf32>
    %57 = arith.addf %56, %49 : vector<96x96xf32>
    %cst_31 = arith.constant dense<0xFF800000> : vector<96xf32>
    %58 = vector.multi_reduction <maximumf>, %57, %cst_31 [1] : vector<96x96xf32> to vector<96xf32>
    %59 = vector.shape_cast %58 : vector<96xf32> to vector<96x1xf32>
    %60 = vector.broadcast %59 : vector<96x1xf32> to vector<96x96xf32>
    %61 = arith.subf %57, %60 : vector<96x96xf32>
    %62 = math.exp %61 : vector<96x96xf32>
    %cst_32 = arith.constant dense<0.000000e+00> : vector<96xf32>
    %63 = vector.multi_reduction <add>, %62, %cst_32 [1] : vector<96x96xf32> to vector<96xf32>
    %64 = vector.shape_cast %63 : vector<96xf32> to vector<96x1xf32>
    %65 = tpu.reciprocal %64 {approx = true} : vector<96x1xf32> -> vector<96x1xf32>
    %66 = vector.broadcast %65 : vector<96x1xf32> to vector<96x96xf32>
    %67 = arith.mulf %62, %66 : vector<96x96xf32>
    %68 = arith.truncf %67 : vector<96x96xf32> to vector<96x96xbf16>
    %cst_33 = arith.constant dense<0.000000e+00> : vector<96x8xf32>
    %69 = tpu.matmul %68, %55, %cst_33 {dimension_numbers = #tpu.dot_dimension_numbers<[1], [0], [0], [1], [0, 0, 1, 1], [], []>} : vector<96x96xbf16>, vector<96x8xbf16>, vector<96x8xf32> -> vector<96x8xf32>
    %70 = arith.truncf %69 : vector<96x8xf32> to vector<96x8xbf16>
    %c0_34 = arith.constant 0 : index
    %c0_35 = arith.constant 0 : index
    %c0_36 = arith.constant 0 : index
    %71 = vector.load %arg3[%c0_34, %c0_35, %c0_36] : memref<4x8x32xbf16, #tpu.memory_space<vmem>>, vector<1x8x32xbf16>
    %72 = vector.shape_cast %71 : vector<1x8x32xbf16> to vector<8x32xbf16>
    %cst_37 = arith.constant dense<0.000000e+00> : vector<96x32xf32>
    %73 = tpu.matmul %70, %72, %cst_37 {dimension_numbers = #tpu.dot_dimension_numbers<[1], [0], [0], [1], [0, 0, 1, 1], [], []>} : vector<96x8xbf16>, vector<8x32xbf16>, vector<96x32xf32> -> vector<96x32xf32>
    %74 = vector.extract_strided_slice %38 {offsets = [0, 8], sizes = [96, 8], strides = [1, 1]} : vector<96x32xf32> to vector<96x8xf32>
    %75 = arith.truncf %74 : vector<96x8xf32> to vector<96x8xbf16>
    %76 = vector.extract_strided_slice %43 {offsets = [0, 8], sizes = [96, 8], strides = [1, 1]} : vector<96x32xf32> to vector<96x8xf32>
    %77 = arith.truncf %76 : vector<96x8xf32> to vector<96x8xbf16>
    %78 = vector.extract_strided_slice %48 {offsets = [0, 8], sizes = [96, 8], strides = [1, 1]} : vector<96x32xf32> to vector<96x8xf32>
    %79 = arith.truncf %78 : vector<96x8xf32> to vector<96x8xbf16>
    %cst_38 = arith.constant dense<0.000000e+00> : vector<96x96xf32>
    %80 = tpu.matmul %75, %77, %cst_38 {dimension_numbers = #tpu.dot_dimension_numbers<[1], [1], [0], [0], [0, 0, 1, 0], [], []>} : vector<96x8xbf16>, vector<96x8xbf16>, vector<96x96xf32> -> vector<96x96xf32>
    %81 = arith.addf %80, %49 : vector<96x96xf32>
    %cst_39 = arith.constant dense<0xFF800000> : vector<96xf32>
    %82 = vector.multi_reduction <maximumf>, %81, %cst_39 [1] : vector<96x96xf32> to vector<96xf32>
    %83 = vector.shape_cast %82 : vector<96xf32> to vector<96x1xf32>
    %84 = vector.broadcast %83 : vector<96x1xf32> to vector<96x96xf32>
    %85 = arith.subf %81, %84 : vector<96x96xf32>
    %86 = math.exp %85 : vector<96x96xf32>
    %cst_40 = arith.constant dense<0.000000e+00> : vector<96xf32>
    %87 = vector.multi_reduction <add>, %86, %cst_40 [1] : vector<96x96xf32> to vector<96xf32>
    %88 = vector.shape_cast %87 : vector<96xf32> to vector<96x1xf32>
    %89 = tpu.reciprocal %88 {approx = true} : vector<96x1xf32> -> vector<96x1xf32>
    %90 = vector.broadcast %89 : vector<96x1xf32> to vector<96x96xf32>
    %91 = arith.mulf %86, %90 : vector<96x96xf32>
    %92 = arith.truncf %91 : vector<96x96xf32> to vector<96x96xbf16>
    %cst_41 = arith.constant dense<0.000000e+00> : vector<96x8xf32>
    %93 = tpu.matmul %92, %79, %cst_41 {dimension_numbers = #tpu.dot_dimension_numbers<[1], [0], [0], [1], [0, 0, 1, 1], [], []>} : vector<96x96xbf16>, vector<96x8xbf16>, vector<96x8xf32> -> vector<96x8xf32>
    %94 = arith.truncf %93 : vector<96x8xf32> to vector<96x8xbf16>
    %c1_42 = arith.constant 1 : index
    %c0_43 = arith.constant 0 : index
    %c0_44 = arith.constant 0 : index
    %95 = vector.load %arg3[%c1_42, %c0_43, %c0_44] : memref<4x8x32xbf16, #tpu.memory_space<vmem>>, vector<1x8x32xbf16>
    %96 = vector.shape_cast %95 : vector<1x8x32xbf16> to vector<8x32xbf16>
    %cst_45 = arith.constant dense<0.000000e+00> : vector<96x32xf32>
    %97 = tpu.matmul %94, %96, %cst_45 {dimension_numbers = #tpu.dot_dimension_numbers<[1], [0], [0], [1], [0, 0, 1, 1], [], []>} : vector<96x8xbf16>, vector<8x32xbf16>, vector<96x32xf32> -> vector<96x32xf32>
    %98 = arith.addf %73, %97 : vector<96x32xf32>
    %99 = vector.extract_strided_slice %38 {offsets = [0, 16], sizes = [96, 8], strides = [1, 1]} : vector<96x32xf32> to vector<96x8xf32>
    %100 = arith.truncf %99 : vector<96x8xf32> to vector<96x8xbf16>
    %101 = vector.extract_strided_slice %43 {offsets = [0, 16], sizes = [96, 8], strides = [1, 1]} : vector<96x32xf32> to vector<96x8xf32>
    %102 = arith.truncf %101 : vector<96x8xf32> to vector<96x8xbf16>
    %103 = vector.extract_strided_slice %48 {offsets = [0, 16], sizes = [96, 8], strides = [1, 1]} : vector<96x32xf32> to vector<96x8xf32>
    %104 = arith.truncf %103 : vector<96x8xf32> to vector<96x8xbf16>
    %cst_46 = arith.constant dense<0.000000e+00> : vector<96x96xf32>
    %105 = tpu.matmul %100, %102, %cst_46 {dimension_numbers = #tpu.dot_dimension_numbers<[1], [1], [0], [0], [0, 0, 1, 0], [], []>} : vector<96x8xbf16>, vector<96x8xbf16>, vector<96x96xf32> -> vector<96x96xf32>
    %106 = arith.addf %105, %49 : vector<96x96xf32>
    %cst_47 = arith.constant dense<0xFF800000> : vector<96xf32>
    %107 = vector.multi_reduction <maximumf>, %106, %cst_47 [1] : vector<96x96xf32> to vector<96xf32>
    %108 = vector.shape_cast %107 : vector<96xf32> to vector<96x1xf32>
    %109 = vector.broadcast %108 : vector<96x1xf32> to vector<96x96xf32>
    %110 = arith.subf %106, %109 : vector<96x96xf32>
    %111 = math.exp %110 : vector<96x96xf32>
    %cst_48 = arith.constant dense<0.000000e+00> : vector<96xf32>
    %112 = vector.multi_reduction <add>, %111, %cst_48 [1] : vector<96x96xf32> to vector<96xf32>
    %113 = vector.shape_cast %112 : vector<96xf32> to vector<96x1xf32>
    %114 = tpu.reciprocal %113 {approx = true} : vector<96x1xf32> -> vector<96x1xf32>
    %115 = vector.broadcast %114 : vector<96x1xf32> to vector<96x96xf32>
    %116 = arith.mulf %111, %115 : vector<96x96xf32>
    %117 = arith.truncf %116 : vector<96x96xf32> to vector<96x96xbf16>
    %cst_49 = arith.constant dense<0.000000e+00> : vector<96x8xf32>
    %118 = tpu.matmul %117, %104, %cst_49 {dimension_numbers = #tpu.dot_dimension_numbers<[1], [0], [0], [1], [0, 0, 1, 1], [], []>} : vector<96x96xbf16>, vector<96x8xbf16>, vector<96x8xf32> -> vector<96x8xf32>
    %119 = arith.truncf %118 : vector<96x8xf32> to vector<96x8xbf16>
    %c2_50 = arith.constant 2 : index
    %c0_51 = arith.constant 0 : index
    %c0_52 = arith.constant 0 : index
    %120 = vector.load %arg3[%c2_50, %c0_51, %c0_52] : memref<4x8x32xbf16, #tpu.memory_space<vmem>>, vector<1x8x32xbf16>
    %121 = vector.shape_cast %120 : vector<1x8x32xbf16> to vector<8x32xbf16>
    %cst_53 = arith.constant dense<0.000000e+00> : vector<96x32xf32>
    %122 = tpu.matmul %119, %121, %cst_53 {dimension_numbers = #tpu.dot_dimension_numbers<[1], [0], [0], [1], [0, 0, 1, 1], [], []>} : vector<96x8xbf16>, vector<8x32xbf16>, vector<96x32xf32> -> vector<96x32xf32>
    %123 = arith.addf %98, %122 : vector<96x32xf32>
    %124 = vector.extract_strided_slice %38 {offsets = [0, 24], sizes = [96, 8], strides = [1, 1]} : vector<96x32xf32> to vector<96x8xf32>
    %125 = arith.truncf %124 : vector<96x8xf32> to vector<96x8xbf16>
    %126 = vector.extract_strided_slice %43 {offsets = [0, 24], sizes = [96, 8], strides = [1, 1]} : vector<96x32xf32> to vector<96x8xf32>
    %127 = arith.truncf %126 : vector<96x8xf32> to vector<96x8xbf16>
    %128 = vector.extract_strided_slice %48 {offsets = [0, 24], sizes = [96, 8], strides = [1, 1]} : vector<96x32xf32> to vector<96x8xf32>
    %129 = arith.truncf %128 : vector<96x8xf32> to vector<96x8xbf16>
    %cst_54 = arith.constant dense<0.000000e+00> : vector<96x96xf32>
    %130 = tpu.matmul %125, %127, %cst_54 {dimension_numbers = #tpu.dot_dimension_numbers<[1], [1], [0], [0], [0, 0, 1, 0], [], []>} : vector<96x8xbf16>, vector<96x8xbf16>, vector<96x96xf32> -> vector<96x96xf32>
    %131 = arith.addf %130, %49 : vector<96x96xf32>
    %cst_55 = arith.constant dense<0xFF800000> : vector<96xf32>
    %132 = vector.multi_reduction <maximumf>, %131, %cst_55 [1] : vector<96x96xf32> to vector<96xf32>
    %133 = vector.shape_cast %132 : vector<96xf32> to vector<96x1xf32>
    %134 = vector.broadcast %133 : vector<96x1xf32> to vector<96x96xf32>
    %135 = arith.subf %131, %134 : vector<96x96xf32>
    %136 = math.exp %135 : vector<96x96xf32>
    %cst_56 = arith.constant dense<0.000000e+00> : vector<96xf32>
    %137 = vector.multi_reduction <add>, %136, %cst_56 [1] : vector<96x96xf32> to vector<96xf32>
    %138 = vector.shape_cast %137 : vector<96xf32> to vector<96x1xf32>
    %139 = tpu.reciprocal %138 {approx = true} : vector<96x1xf32> -> vector<96x1xf32>
    %140 = vector.broadcast %139 : vector<96x1xf32> to vector<96x96xf32>
    %141 = arith.mulf %136, %140 : vector<96x96xf32>
    %142 = arith.truncf %141 : vector<96x96xf32> to vector<96x96xbf16>
    %cst_57 = arith.constant dense<0.000000e+00> : vector<96x8xf32>
    %143 = tpu.matmul %142, %129, %cst_57 {dimension_numbers = #tpu.dot_dimension_numbers<[1], [0], [0], [1], [0, 0, 1, 1], [], []>} : vector<96x96xbf16>, vector<96x8xbf16>, vector<96x8xf32> -> vector<96x8xf32>
    %144 = arith.truncf %143 : vector<96x8xf32> to vector<96x8xbf16>
    %c3_58 = arith.constant 3 : index
    %c0_59 = arith.constant 0 : index
    %c0_60 = arith.constant 0 : index
    %145 = vector.load %arg3[%c3_58, %c0_59, %c0_60] : memref<4x8x32xbf16, #tpu.memory_space<vmem>>, vector<1x8x32xbf16>
    %146 = vector.shape_cast %145 : vector<1x8x32xbf16> to vector<8x32xbf16>
    %cst_61 = arith.constant dense<0.000000e+00> : vector<96x32xf32>
    %147 = tpu.matmul %144, %146, %cst_61 {dimension_numbers = #tpu.dot_dimension_numbers<[1], [0], [0], [1], [0, 0, 1, 1], [], []>} : vector<96x8xbf16>, vector<8x32xbf16>, vector<96x32xf32> -> vector<96x32xf32>
    %148 = arith.addf %123, %147 : vector<96x32xf32>
    %149 = arith.addf %0, %148 : vector<96x32xf32>
    %150 = vector.broadcast %4 : vector<1x32xf32> to vector<96x32xf32>
    %151 = arith.addf %149, %150 : vector<96x32xf32>
    %cst_62 = arith.constant dense<0.000000e+00> : vector<96xf32>
    %152 = vector.multi_reduction <add>, %151, %cst_62 [1] : vector<96x32xf32> to vector<96xf32>
    %153 = vector.shape_cast %152 : vector<96xf32> to vector<96x1xf32>
    %cst_63 = arith.constant 3.200000e+01 : f32
    %154 = vector.broadcast %cst_63 : f32 to vector<96x1xf32>
    %155 = arith.divf %153, %154 : vector<96x1xf32>
    %156 = vector.broadcast %155 : vector<96x1xf32> to vector<96x32xf32>
    %157 = arith.subf %151, %156 : vector<96x32xf32>
    %158 = arith.mulf %157, %157 : vector<96x32xf32>
    %cst_64 = arith.constant dense<0.000000e+00> : vector<96xf32>
    %159 = vector.multi_reduction <add>, %158, %cst_64 [1] : vector<96x32xf32> to vector<96xf32>
    %160 = vector.shape_cast %159 : vector<96xf32> to vector<96x1xf32>
    %cst_65 = arith.constant 3.200000e+01 : f32
    %161 = vector.broadcast %cst_65 : f32 to vector<96x1xf32>
    %162 = arith.divf %160, %161 : vector<96x1xf32>
    %163 = vector.broadcast %155 : vector<96x1xf32> to vector<96x32xf32>
    %164 = arith.subf %151, %163 : vector<96x32xf32>
    %cst_66 = arith.constant 9.99999974E-6 : f32
    %165 = vector.broadcast %cst_66 : f32 to vector<96x1xf32>
    %166 = arith.addf %162, %165 : vector<96x1xf32>
    %167 = math.rsqrt %166 : vector<96x1xf32>
    %168 = vector.broadcast %167 : vector<96x1xf32> to vector<96x32xf32>
    %169 = arith.mulf %164, %168 : vector<96x32xf32>
    %170 = vector.broadcast %7 : vector<1x32xf32> to vector<96x32xf32>
    %171 = arith.mulf %169, %170 : vector<96x32xf32>
    %172 = vector.broadcast %8 : vector<1x32xf32> to vector<96x32xf32>
    %173 = arith.addf %171, %172 : vector<96x32xf32>
    %174 = arith.truncf %173 : vector<96x32xf32> to vector<96x32xbf16>
    %c0_67 = arith.constant 0 : index
    %c0_68 = arith.constant 0 : index
    %175 = vector.load %arg4[%c0_67, %c0_68] : memref<32x128xbf16, #tpu.memory_space<vmem>>, vector<32x128xbf16>
    %cst_69 = arith.constant dense<0.000000e+00> : vector<96x128xf32>
    %176 = tpu.matmul %174, %175, %cst_69 {dimension_numbers = #tpu.dot_dimension_numbers<[1], [0], [0], [1], [0, 0, 1, 1], [], []>} : vector<96x32xbf16>, vector<32x128xbf16>, vector<96x128xf32> -> vector<96x128xf32>
    %177 = vector.broadcast %10 : vector<1x128xf32> to vector<96x128xf32>
    %178 = arith.addf %176, %177 : vector<96x128xf32>
    %179 = arith.mulf %178, %178 : vector<96x128xf32>
    %180 = arith.mulf %178, %179 : vector<96x128xf32>
    %cst_70 = arith.constant 4.471500e-02 : f32
    %181 = vector.broadcast %cst_70 : f32 to vector<96x128xf32>
    %182 = arith.mulf %181, %180 : vector<96x128xf32>
    %183 = arith.addf %178, %182 : vector<96x128xf32>
    %cst_71 = arith.constant 0.797884583 : f32
    %184 = vector.broadcast %cst_71 : f32 to vector<96x128xf32>
    %185 = arith.mulf %184, %183 : vector<96x128xf32>
    %186 = math.tanh %185 : vector<96x128xf32>
    %cst_72 = arith.constant 1.000000e+00 : f32
    %187 = vector.broadcast %cst_72 : f32 to vector<96x128xf32>
    %188 = arith.addf %187, %186 : vector<96x128xf32>
    %cst_73 = arith.constant 5.000000e-01 : f32
    %189 = vector.broadcast %cst_73 : f32 to vector<96x128xf32>
    %190 = arith.mulf %189, %188 : vector<96x128xf32>
    %191 = arith.mulf %178, %190 : vector<96x128xf32>
    %192 = arith.truncf %191 : vector<96x128xf32> to vector<96x128xbf16>
    %c0_74 = arith.constant 0 : index
    %c0_75 = arith.constant 0 : index
    %193 = vector.load %arg5[%c0_74, %c0_75] : memref<128x32xbf16, #tpu.memory_space<vmem>>, vector<128x32xbf16>
    %cst_76 = arith.constant dense<0.000000e+00> : vector<96x32xf32>
    %194 = tpu.matmul %192, %193, %cst_76 {dimension_numbers = #tpu.dot_dimension_numbers<[1], [0], [0], [1], [0, 0, 1, 1], [], []>} : vector<96x128xbf16>, vector<128x32xbf16>, vector<96x32xf32> -> vector<96x32xf32>
    %195 = vector.broadcast %9 : vector<1x32xf32> to vector<96x32xf32>
    %196 = arith.addf %194, %195 : vector<96x32xf32>
    %197 = arith.addf %151, %196 : vector<96x32xf32>
    %c0_77 = arith.constant 0 : index
    %198 = memref.load %arg8[%c0_77] : memref<3xf32, #tpu.memory_space<smem>>
    %199 = vector.extract_strided_slice %197 {offsets = [0, 0], sizes = [16, 32], strides = [1, 1]} : vector<96x32xf32> to vector<16x32xf32>
    %200 = vector.broadcast %198 : f32 to vector<16x32xf32>
    %201 = arith.mulf %200, %199 : vector<16x32xf32>
    %c1_78 = arith.constant 1 : index
    %202 = memref.load %arg8[%c1_78] : memref<3xf32, #tpu.memory_space<smem>>
    %203 = vector.extract_strided_slice %197 {offsets = [16, 0], sizes = [16, 32], strides = [1, 1]} : vector<96x32xf32> to vector<16x32xf32>
    %204 = vector.broadcast %202 : f32 to vector<16x32xf32>
    %205 = arith.mulf %204, %203 : vector<16x32xf32>
    %206 = arith.addf %201, %205 : vector<16x32xf32>
    %c2_79 = arith.constant 2 : index
    %207 = memref.load %arg8[%c2_79] : memref<3xf32, #tpu.memory_space<smem>>
    %208 = vector.extract_strided_slice %197 {offsets = [32, 0], sizes = [16, 32], strides = [1, 1]} : vector<96x32xf32> to vector<16x32xf32>
    %209 = vector.broadcast %207 : f32 to vector<16x32xf32>
    %210 = arith.mulf %209, %208 : vector<16x32xf32>
    %211 = arith.addf %206, %210 : vector<16x32xf32>
    %212 = vector.shape_cast %211 : vector<16x32xf32> to vector<4x128xf32>
    %c0_80 = arith.constant 0 : index
    %c0_81 = arith.constant 0 : index
    %c0_82 = arith.constant 0 : index
    %213 = vector.load %arg9[%c0_80, %c0_81, %c0_82] : memref<2x4x128xf32, #tpu.memory_space<vmem>>, vector<1x4x128xf32>
    %214 = vector.shape_cast %213 : vector<1x4x128xf32> to vector<4x128xf32>
    %215 = vector.shape_cast %212 : vector<4x128xf32> to vector<1x4x128xf32>
    tpu.vector_store %arg9[%c0_80, %c0_81, %c0_82], %215 {strides = array<i32>} : memref<2x4x128xf32, #tpu.memory_space<vmem>>, vector<1x4x128xf32>,
    %c0_83 = arith.constant 0 : index
    %216 = memref.load %arg8[%c0_83] : memref<3xf32, #tpu.memory_space<smem>>
    %217 = vector.extract_strided_slice %197 {offsets = [48, 0], sizes = [16, 32], strides = [1, 1]} : vector<96x32xf32> to vector<16x32xf32>
    %218 = vector.broadcast %216 : f32 to vector<16x32xf32>
    %219 = arith.mulf %218, %217 : vector<16x32xf32>
    %c1_84 = arith.constant 1 : index
    %220 = memref.load %arg8[%c1_84] : memref<3xf32, #tpu.memory_space<smem>>
    %221 = vector.extract_strided_slice %197 {offsets = [64, 0], sizes = [16, 32], strides = [1, 1]} : vector<96x32xf32> to vector<16x32xf32>
    %222 = vector.broadcast %220 : f32 to vector<16x32xf32>
    %223 = arith.mulf %222, %221 : vector<16x32xf32>
    %224 = arith.addf %219, %223 : vector<16x32xf32>
    %c2_85 = arith.constant 2 : index
    %225 = memref.load %arg8[%c2_85] : memref<3xf32, #tpu.memory_space<smem>>
    %226 = vector.extract_strided_slice %197 {offsets = [80, 0], sizes = [16, 32], strides = [1, 1]} : vector<96x32xf32> to vector<16x32xf32>
    %227 = vector.broadcast %225 : f32 to vector<16x32xf32>
    %228 = arith.mulf %227, %226 : vector<16x32xf32>
    %229 = arith.addf %224, %228 : vector<16x32xf32>
    %230 = vector.shape_cast %229 : vector<16x32xf32> to vector<4x128xf32>
    %c1_86 = arith.constant 1 : index
    %c0_87 = arith.constant 0 : index
    %c0_88 = arith.constant 0 : index
    %231 = vector.load %arg9[%c1_86, %c0_87, %c0_88] : memref<2x4x128xf32, #tpu.memory_space<vmem>>, vector<1x4x128xf32>
    %232 = vector.shape_cast %231 : vector<1x4x128xf32> to vector<4x128xf32>
    %233 = vector.shape_cast %230 : vector<4x128xf32> to vector<1x4x128xf32>
    tpu.vector_store %arg9[%c1_86, %c0_87, %c0_88], %233 {strides = array<i32>} : memref<2x4x128xf32, #tpu.memory_space<vmem>>, vector<1x4x128xf32>,
    return
  }
  func.func @transform_0(%arg0: i32) -> (i32, i32) {
    %c0_i32 = arith.constant 0 : i32
    %c0_i32_0 = arith.constant 0 : i32
    return %arg0, %c0_i32 : i32, i32
  }
  func.func @transform_1(%arg0: i32) -> (i32, i32, i32) {
    %c0_i32 = arith.constant 0 : i32
    %c0_i32_0 = arith.constant 0 : i32
    %c0_i32_1 = arith.constant 0 : i32
    %c0_i32_2 = arith.constant 0 : i32
    return %c0_i32, %c0_i32_0, %c0_i32_1 : i32, i32, i32
  }
  func.func @transform_2(%arg0: i32) -> (i32, i32, i32) {
    %c0_i32 = arith.constant 0 : i32
    %c0_i32_0 = arith.constant 0 : i32
    %c0_i32_1 = arith.constant 0 : i32
    %c0_i32_2 = arith.constant 0 : i32
    return %c0_i32, %c0_i32_0, %c0_i32_1 : i32, i32, i32
  }
  func.func @transform_3(%arg0: i32) -> (i32, i32) {
    %c0_i32 = arith.constant 0 : i32
    %c0_i32_0 = arith.constant 0 : i32
    %c0_i32_1 = arith.constant 0 : i32
    return %c0_i32, %c0_i32_0 : i32, i32
  }
  func.func @transform_4(%arg0: i32) -> (i32, i32) {
    %c0_i32 = arith.constant 0 : i32
    %c0_i32_0 = arith.constant 0 : i32
    %c0_i32_1 = arith.constant 0 : i32
    return %c0_i32, %c0_i32_0 : i32, i32
  }
  func.func @transform_5(%arg0: i32) -> (i32, i32) {
    %c0_i32 = arith.constant 0 : i32
    %c0_i32_0 = arith.constant 0 : i32
    %c0_i32_1 = arith.constant 0 : i32
    return %c0_i32, %c0_i32_0 : i32, i32
  }
  func.func @transform_6(%arg0: i32) -> (i32, i32) {
    %c0_i32 = arith.constant 0 : i32
    %c0_i32_0 = arith.constant 0 : i32
    %c0_i32_1 = arith.constant 0 : i32
    return %c0_i32, %c0_i32_0 : i32, i32
  }
  func.func @transform_7(%arg0: i32) -> i32 {
    %c0_i32 = arith.constant 0 : i32
    %c0_i32_0 = arith.constant 0 : i32
    return %c0_i32 : i32
  }
  func.func @transform_8(%arg0: i32) -> (i32, i32, i32) {
    %c0_i32 = arith.constant 0 : i32
    %c0_i32_0 = arith.constant 0 : i32
    %c0_i32_1 = arith.constant 0 : i32
    return %arg0, %c0_i32, %c0_i32_0 : i32, i32, i32
  }
}

module attributes {stable_mosaic.version = 11 : i64} {
  func.func @kernel(%arg0: i32, %arg1: memref<96x32xf32, #tpu.memory_space<vmem>>, %arg2: memref<3x32x32xbf16, #tpu.memory_space<vmem>>, %arg3: memref<4x8x32xbf16, #tpu.memory_space<vmem>>, %arg4: memref<32x128xbf16, #tpu.memory_space<vmem>>, %arg5: memref<128x32xbf16, #tpu.memory_space<vmem>>, %arg6: memref<10x128xf32, #tpu.memory_space<vmem>>, %arg7: memref<96x96xf32, #tpu.memory_space<vmem>>, %arg8: memref<3xf32, #tpu.memory_space<smem>>, %arg9: memref<2x16x32xf32, #tpu.memory_space<vmem>>) attributes {dimension_semantics = [#tpu.dimension_semantics<arbitrary>], iteration_bounds = array<i64: 1>, scalar_prefetch = 0 : i64, scratch_operands = 0 : i64, tpu.core_type = #tpu.core_type<tc>, window_params = [{transform_indices = @transform_0, window_bounds = array<i64: 96, 32>}, {pipeline_mode = #tpu.pipeline_mode<synchronous>, transform_indices = @transform_1, window_bounds = array<i64: 3, 32, 32>}, {pipeline_mode = #tpu.pipeline_mode<synchronous>, transform_indices = @transform_2, window_bounds = array<i64: 4, 8, 32>}, {pipeline_mode = #tpu.pipeline_mode<synchronous>, transform_indices = @transform_3, window_bounds = array<i64: 32, 128>}, {pipeline_mode = #tpu.pipeline_mode<synchronous>, transform_indices = @transform_4, window_bounds = array<i64: 128, 32>}, {pipeline_mode = #tpu.pipeline_mode<synchronous>, transform_indices = @transform_5, window_bounds = array<i64: 10, 128>}, {pipeline_mode = #tpu.pipeline_mode<synchronous>, transform_indices = @transform_6, window_bounds = array<i64: 96, 96>}, {transform_indices = @transform_7, window_bounds = array<i64: 3>}, {transform_indices = @transform_8, window_bounds = array<i64: 2, 16, 32>}]} {
    %c0 = arith.constant 0 : index
    %c0_0 = arith.constant 0 : index
    %0 = vector.load %arg1[%c0, %c0_0] : memref<96x32xf32, #tpu.memory_space<vmem>>, vector<96x32xf32>
    %c0_1 = arith.constant 0 : index
    %c0_2 = arith.constant 0 : index
    %1 = vector.load %arg6[%c0_1, %c0_2] : memref<10x128xf32, #tpu.memory_space<vmem>>, vector<1x32xf32>
    %c1 = arith.constant 1 : index
    %c0_3 = arith.constant 0 : index
    %2 = vector.load %arg6[%c1, %c0_3] : memref<10x128xf32, #tpu.memory_space<vmem>>, vector<1x32xf32>
    %c2 = arith.constant 2 : index
    %c0_4 = arith.constant 0 : index
    %3 = vector.load %arg6[%c2, %c0_4] : memref<10x128xf32, #tpu.memory_space<vmem>>, vector<1x32xf32>
    %c3 = arith.constant 3 : index
    %c0_5 = arith.constant 0 : index
    %4 = vector.load %arg6[%c3, %c0_5] : memref<10x128xf32, #tpu.memory_space<vmem>>, vector<1x32xf32>
    %c4 = arith.constant 4 : index
    %c0_6 = arith.constant 0 : index
    %5 = vector.load %arg6[%c4, %c0_6] : memref<10x128xf32, #tpu.memory_space<vmem>>, vector<1x32xf32>
    %c5 = arith.constant 5 : index
    %c0_7 = arith.constant 0 : index
    %6 = vector.load %arg6[%c5, %c0_7] : memref<10x128xf32, #tpu.memory_space<vmem>>, vector<1x32xf32>
    %c6 = arith.constant 6 : index
    %c0_8 = arith.constant 0 : index
    %7 = vector.load %arg6[%c6, %c0_8] : memref<10x128xf32, #tpu.memory_space<vmem>>, vector<1x32xf32>
    %c7 = arith.constant 7 : index
    %c0_9 = arith.constant 0 : index
    %8 = vector.load %arg6[%c7, %c0_9] : memref<10x128xf32, #tpu.memory_space<vmem>>, vector<1x32xf32>
    %c8 = arith.constant 8 : index
    %c0_10 = arith.constant 0 : index
    %9 = vector.load %arg6[%c8, %c0_10] : memref<10x128xf32, #tpu.memory_space<vmem>>, vector<1x32xf32>
    %c9 = arith.constant 9 : index
    %c0_11 = arith.constant 0 : index
    %10 = vector.load %arg6[%c9, %c0_11] : memref<10x128xf32, #tpu.memory_space<vmem>>, vector<1x128xf32>
    %cst = arith.constant dense<0.000000e+00> : vector<96xf32>
    %11 = vector.multi_reduction <add>, %0, %cst [1] : vector<96x32xf32> to vector<96xf32>
    %12 = vector.shape_cast %11 : vector<96xf32> to vector<96x1xf32>
    %cst_12 = arith.constant 3.200000e+01 : f32
    %13 = vector.broadcast %cst_12 : f32 to vector<96x1xf32>
    %14 = arith.divf %12, %13 : vector<96x1xf32>
    %15 = vector.broadcast %14 : vector<96x1xf32> to vector<96x32xf32>
    %16 = arith.subf %0, %15 : vector<96x32xf32>
    %17 = arith.mulf %16, %16 : vector<96x32xf32>
    %cst_13 = arith.constant dense<0.000000e+00> : vector<96xf32>
    %18 = vector.multi_reduction <add>, %17, %cst_13 [1] : vector<96x32xf32> to vector<96xf32>
    %19 = vector.shape_cast %18 : vector<96xf32> to vector<96x1xf32>
    %cst_14 = arith.constant 3.200000e+01 : f32
    %20 = vector.broadcast %cst_14 : f32 to vector<96x1xf32>
    %21 = arith.divf %19, %20 : vector<96x1xf32>
    %22 = vector.broadcast %14 : vector<96x1xf32> to vector<96x32xf32>
    %23 = arith.subf %0, %22 : vector<96x32xf32>
    %cst_15 = arith.constant 9.99999974E-6 : f32
    %24 = vector.broadcast %cst_15 : f32 to vector<96x1xf32>
    %25 = arith.addf %21, %24 : vector<96x1xf32>
    %26 = math.rsqrt %25 : vector<96x1xf32>
    %27 = vector.broadcast %26 : vector<96x1xf32> to vector<96x32xf32>
    %28 = arith.mulf %23, %27 : vector<96x32xf32>
    %29 = vector.broadcast %5 : vector<1x32xf32> to vector<96x32xf32>
    %30 = arith.mulf %28, %29 : vector<96x32xf32>
    %31 = vector.broadcast %6 : vector<1x32xf32> to vector<96x32xf32>
    %32 = arith.addf %30, %31 : vector<96x32xf32>
    %33 = arith.truncf %32 : vector<96x32xf32> to vector<96x32xbf16>
    %c0_16 = arith.constant 0 : index
    %c0_17 = arith.constant 0 : index
    %c0_18 = arith.constant 0 : index
    %34 = vector.load %arg2[%c0_16, %c0_17, %c0_18] : memref<3x32x32xbf16, #tpu.memory_space<vmem>>, vector<1x32x32xbf16>
    %35 = vector.shape_cast %34 : vector<1x32x32xbf16> to vector<32x32xbf16>
    %cst_19 = arith.constant dense<0.000000e+00> : vector<96x32xf32>
    %36 = tpu.matmul %33, %35, %cst_19 {dimension_numbers = #tpu.dot_dimension_numbers<[1], [0], [0], [1], [0, 0, 1, 1], [], []>} : vector<96x32xbf16>, vector<32x32xbf16>, vector<96x32xf32> -> vector<96x32xf32>
    %37 = vector.broadcast %1 : vector<1x32xf32> to vector<96x32xf32>
    %38 = arith.addf %36, %37 : vector<96x32xf32>
    %c1_20 = arith.constant 1 : index
    %c0_21 = arith.constant 0 : index
    %c0_22 = arith.constant 0 : index
    %39 = vector.load %arg2[%c1_20, %c0_21, %c0_22] : memref<3x32x32xbf16, #tpu.memory_space<vmem>>, vector<1x32x32xbf16>
    %40 = vector.shape_cast %39 : vector<1x32x32xbf16> to vector<32x32xbf16>
    %cst_23 = arith.constant dense<0.000000e+00> : vector<96x32xf32>
    %41 = tpu.matmul %33, %40, %cst_23 {dimension_numbers = #tpu.dot_dimension_numbers<[1], [0], [0], [1], [0, 0, 1, 1], [], []>} : vector<96x32xbf16>, vector<32x32xbf16>, vector<96x32xf32> -> vector<96x32xf32>
    %42 = vector.broadcast %2 : vector<1x32xf32> to vector<96x32xf32>
    %43 = arith.addf %41, %42 : vector<96x32xf32>
    %c2_24 = arith.constant 2 : index
    %c0_25 = arith.constant 0 : index
    %c0_26 = arith.constant 0 : index
    %44 = vector.load %arg2[%c2_24, %c0_25, %c0_26] : memref<3x32x32xbf16, #tpu.memory_space<vmem>>, vector<1x32x32xbf16>
    %45 = vector.shape_cast %44 : vector<1x32x32xbf16> to vector<32x32xbf16>
    %cst_27 = arith.constant dense<0.000000e+00> : vector<96x32xf32>
    %46 = tpu.matmul %33, %45, %cst_27 {dimension_numbers = #tpu.dot_dimension_numbers<[1], [0], [0], [1], [0, 0, 1, 1], [], []>} : vector<96x32xbf16>, vector<32x32xbf16>, vector<96x32xf32> -> vector<96x32xf32>
    %47 = vector.broadcast %3 : vector<1x32xf32> to vector<96x32xf32>
    %48 = arith.addf %46, %47 : vector<96x32xf32>
    %c0_28 = arith.constant 0 : index
    %c0_29 = arith.constant 0 : index
    %49 = vector.load %arg7[%c0_28, %c0_29] : memref<96x96xf32, #tpu.memory_space<vmem>>, vector<96x96xf32>
    %50 = vector.extract_strided_slice %38 {offsets = [0, 0], sizes = [96, 8], strides = [1, 1]} : vector<96x32xf32> to vector<96x8xf32>
    %51 = arith.truncf %50 : vector<96x8xf32> to vector<96x8xbf16>
    %52 = vector.extract_strided_slice %43 {offsets = [0, 0], sizes = [96, 8], strides = [1, 1]} : vector<96x32xf32> to vector<96x8xf32>
    %53 = arith.truncf %52 : vector<96x8xf32> to vector<96x8xbf16>
    %54 = vector.extract_strided_slice %48 {offsets = [0, 0], sizes = [96, 8], strides = [1, 1]} : vector<96x32xf32> to vector<96x8xf32>
    %55 = arith.truncf %54 : vector<96x8xf32> to vector<96x8xbf16>
    %cst_30 = arith.constant dense<0.000000e+00> : vector<96x96xf32>
    %56 = tpu.matmul %51, %53, %cst_30 {dimension_numbers = #tpu.dot_dimension_numbers<[1], [1], [0], [0], [0, 0, 1, 0], [], []>} : vector<96x8xbf16>, vector<96x8xbf16>, vector<96x96xf32> -> vector<96x96xf32>
    %57 = arith.addf %56, %49 : vector<96x96xf32>
    %cst_31 = arith.constant dense<0xFF800000> : vector<96xf32>
    %58 = vector.multi_reduction <maximumf>, %57, %cst_31 [1] : vector<96x96xf32> to vector<96xf32>
    %59 = vector.shape_cast %58 : vector<96xf32> to vector<96x1xf32>
    %60 = vector.broadcast %59 : vector<96x1xf32> to vector<96x96xf32>
    %61 = arith.subf %57, %60 : vector<96x96xf32>
    %62 = math.exp %61 : vector<96x96xf32>
    %cst_32 = arith.constant dense<0.000000e+00> : vector<96xf32>
    %63 = vector.multi_reduction <add>, %62, %cst_32 [1] : vector<96x96xf32> to vector<96xf32>
    %64 = vector.shape_cast %63 : vector<96xf32> to vector<96x1xf32>
    %65 = tpu.reciprocal %64 {approx = true} : vector<96x1xf32> -> vector<96x1xf32>
    %66 = vector.broadcast %65 : vector<96x1xf32> to vector<96x96xf32>
    %67 = arith.mulf %62, %66 : vector<96x96xf32>
    %68 = arith.truncf %67 : vector<96x96xf32> to vector<96x96xbf16>
    %cst_33 = arith.constant dense<0.000000e+00> : vector<96x8xf32>
    %69 = tpu.matmul %68, %55, %cst_33 {dimension_numbers = #tpu.dot_dimension_numbers<[1], [0], [0], [1], [0, 0, 1, 1], [], []>} : vector<96x96xbf16>, vector<96x8xbf16>, vector<96x8xf32> -> vector<96x8xf32>
    %70 = arith.truncf %69 : vector<96x8xf32> to vector<96x8xbf16>
    %c0_34 = arith.constant 0 : index
    %c0_35 = arith.constant 0 : index
    %c0_36 = arith.constant 0 : index
    %71 = vector.load %arg3[%c0_34, %c0_35, %c0_36] : memref<4x8x32xbf16, #tpu.memory_space<vmem>>, vector<1x8x32xbf16>
    %72 = vector.shape_cast %71 : vector<1x8x32xbf16> to vector<8x32xbf16>
    %cst_37 = arith.constant dense<0.000000e+00> : vector<96x32xf32>
    %73 = tpu.matmul %70, %72, %cst_37 {dimension_numbers = #tpu.dot_dimension_numbers<[1], [0], [0], [1], [0, 0, 1, 1], [], []>} : vector<96x8xbf16>, vector<8x32xbf16>, vector<96x32xf32> -> vector<96x32xf32>
    %74 = vector.extract_strided_slice %38 {offsets = [0, 8], sizes = [96, 8], strides = [1, 1]} : vector<96x32xf32> to vector<96x8xf32>
    %75 = arith.truncf %74 : vector<96x8xf32> to vector<96x8xbf16>
    %76 = vector.extract_strided_slice %43 {offsets = [0, 8], sizes = [96, 8], strides = [1, 1]} : vector<96x32xf32> to vector<96x8xf32>
    %77 = arith.truncf %76 : vector<96x8xf32> to vector<96x8xbf16>
    %78 = vector.extract_strided_slice %48 {offsets = [0, 8], sizes = [96, 8], strides = [1, 1]} : vector<96x32xf32> to vector<96x8xf32>
    %79 = arith.truncf %78 : vector<96x8xf32> to vector<96x8xbf16>
    %cst_38 = arith.constant dense<0.000000e+00> : vector<96x96xf32>
    %80 = tpu.matmul %75, %77, %cst_38 {dimension_numbers = #tpu.dot_dimension_numbers<[1], [1], [0], [0], [0, 0, 1, 0], [], []>} : vector<96x8xbf16>, vector<96x8xbf16>, vector<96x96xf32> -> vector<96x96xf32>
    %81 = arith.addf %80, %49 : vector<96x96xf32>
    %cst_39 = arith.constant dense<0xFF800000> : vector<96xf32>
    %82 = vector.multi_reduction <maximumf>, %81, %cst_39 [1] : vector<96x96xf32> to vector<96xf32>
    %83 = vector.shape_cast %82 : vector<96xf32> to vector<96x1xf32>
    %84 = vector.broadcast %83 : vector<96x1xf32> to vector<96x96xf32>
    %85 = arith.subf %81, %84 : vector<96x96xf32>
    %86 = math.exp %85 : vector<96x96xf32>
    %cst_40 = arith.constant dense<0.000000e+00> : vector<96xf32>
    %87 = vector.multi_reduction <add>, %86, %cst_40 [1] : vector<96x96xf32> to vector<96xf32>
    %88 = vector.shape_cast %87 : vector<96xf32> to vector<96x1xf32>
    %89 = tpu.reciprocal %88 {approx = true} : vector<96x1xf32> -> vector<96x1xf32>
    %90 = vector.broadcast %89 : vector<96x1xf32> to vector<96x96xf32>
    %91 = arith.mulf %86, %90 : vector<96x96xf32>
    %92 = arith.truncf %91 : vector<96x96xf32> to vector<96x96xbf16>
    %cst_41 = arith.constant dense<0.000000e+00> : vector<96x8xf32>
    %93 = tpu.matmul %92, %79, %cst_41 {dimension_numbers = #tpu.dot_dimension_numbers<[1], [0], [0], [1], [0, 0, 1, 1], [], []>} : vector<96x96xbf16>, vector<96x8xbf16>, vector<96x8xf32> -> vector<96x8xf32>
    %94 = arith.truncf %93 : vector<96x8xf32> to vector<96x8xbf16>
    %c1_42 = arith.constant 1 : index
    %c0_43 = arith.constant 0 : index
    %c0_44 = arith.constant 0 : index
    %95 = vector.load %arg3[%c1_42, %c0_43, %c0_44] : memref<4x8x32xbf16, #tpu.memory_space<vmem>>, vector<1x8x32xbf16>
    %96 = vector.shape_cast %95 : vector<1x8x32xbf16> to vector<8x32xbf16>
    %cst_45 = arith.constant dense<0.000000e+00> : vector<96x32xf32>
    %97 = tpu.matmul %94, %96, %cst_45 {dimension_numbers = #tpu.dot_dimension_numbers<[1], [0], [0], [1], [0, 0, 1, 1], [], []>} : vector<96x8xbf16>, vector<8x32xbf16>, vector<96x32xf32> -> vector<96x32xf32>
    %98 = arith.addf %73, %97 : vector<96x32xf32>
    %99 = vector.extract_strided_slice %38 {offsets = [0, 16], sizes = [96, 8], strides = [1, 1]} : vector<96x32xf32> to vector<96x8xf32>
    %100 = arith.truncf %99 : vector<96x8xf32> to vector<96x8xbf16>
    %101 = vector.extract_strided_slice %43 {offsets = [0, 16], sizes = [96, 8], strides = [1, 1]} : vector<96x32xf32> to vector<96x8xf32>
    %102 = arith.truncf %101 : vector<96x8xf32> to vector<96x8xbf16>
    %103 = vector.extract_strided_slice %48 {offsets = [0, 16], sizes = [96, 8], strides = [1, 1]} : vector<96x32xf32> to vector<96x8xf32>
    %104 = arith.truncf %103 : vector<96x8xf32> to vector<96x8xbf16>
    %cst_46 = arith.constant dense<0.000000e+00> : vector<96x96xf32>
    %105 = tpu.matmul %100, %102, %cst_46 {dimension_numbers = #tpu.dot_dimension_numbers<[1], [1], [0], [0], [0, 0, 1, 0], [], []>} : vector<96x8xbf16>, vector<96x8xbf16>, vector<96x96xf32> -> vector<96x96xf32>
    %106 = arith.addf %105, %49 : vector<96x96xf32>
    %cst_47 = arith.constant dense<0xFF800000> : vector<96xf32>
    %107 = vector.multi_reduction <maximumf>, %106, %cst_47 [1] : vector<96x96xf32> to vector<96xf32>
    %108 = vector.shape_cast %107 : vector<96xf32> to vector<96x1xf32>
    %109 = vector.broadcast %108 : vector<96x1xf32> to vector<96x96xf32>
    %110 = arith.subf %106, %109 : vector<96x96xf32>
    %111 = math.exp %110 : vector<96x96xf32>
    %cst_48 = arith.constant dense<0.000000e+00> : vector<96xf32>
    %112 = vector.multi_reduction <add>, %111, %cst_48 [1] : vector<96x96xf32> to vector<96xf32>
    %113 = vector.shape_cast %112 : vector<96xf32> to vector<96x1xf32>
    %114 = tpu.reciprocal %113 {approx = true} : vector<96x1xf32> -> vector<96x1xf32>
    %115 = vector.broadcast %114 : vector<96x1xf32> to vector<96x96xf32>
    %116 = arith.mulf %111, %115 : vector<96x96xf32>
    %117 = arith.truncf %116 : vector<96x96xf32> to vector<96x96xbf16>
    %cst_49 = arith.constant dense<0.000000e+00> : vector<96x8xf32>
    %118 = tpu.matmul %117, %104, %cst_49 {dimension_numbers = #tpu.dot_dimension_numbers<[1], [0], [0], [1], [0, 0, 1, 1], [], []>} : vector<96x96xbf16>, vector<96x8xbf16>, vector<96x8xf32> -> vector<96x8xf32>
    %119 = arith.truncf %118 : vector<96x8xf32> to vector<96x8xbf16>
    %c2_50 = arith.constant 2 : index
    %c0_51 = arith.constant 0 : index
    %c0_52 = arith.constant 0 : index
    %120 = vector.load %arg3[%c2_50, %c0_51, %c0_52] : memref<4x8x32xbf16, #tpu.memory_space<vmem>>, vector<1x8x32xbf16>
    %121 = vector.shape_cast %120 : vector<1x8x32xbf16> to vector<8x32xbf16>
    %cst_53 = arith.constant dense<0.000000e+00> : vector<96x32xf32>
    %122 = tpu.matmul %119, %121, %cst_53 {dimension_numbers = #tpu.dot_dimension_numbers<[1], [0], [0], [1], [0, 0, 1, 1], [], []>} : vector<96x8xbf16>, vector<8x32xbf16>, vector<96x32xf32> -> vector<96x32xf32>
    %123 = arith.addf %98, %122 : vector<96x32xf32>
    %124 = vector.extract_strided_slice %38 {offsets = [0, 24], sizes = [96, 8], strides = [1, 1]} : vector<96x32xf32> to vector<96x8xf32>
    %125 = arith.truncf %124 : vector<96x8xf32> to vector<96x8xbf16>
    %126 = vector.extract_strided_slice %43 {offsets = [0, 24], sizes = [96, 8], strides = [1, 1]} : vector<96x32xf32> to vector<96x8xf32>
    %127 = arith.truncf %126 : vector<96x8xf32> to vector<96x8xbf16>
    %128 = vector.extract_strided_slice %48 {offsets = [0, 24], sizes = [96, 8], strides = [1, 1]} : vector<96x32xf32> to vector<96x8xf32>
    %129 = arith.truncf %128 : vector<96x8xf32> to vector<96x8xbf16>
    %cst_54 = arith.constant dense<0.000000e+00> : vector<96x96xf32>
    %130 = tpu.matmul %125, %127, %cst_54 {dimension_numbers = #tpu.dot_dimension_numbers<[1], [1], [0], [0], [0, 0, 1, 0], [], []>} : vector<96x8xbf16>, vector<96x8xbf16>, vector<96x96xf32> -> vector<96x96xf32>
    %131 = arith.addf %130, %49 : vector<96x96xf32>
    %cst_55 = arith.constant dense<0xFF800000> : vector<96xf32>
    %132 = vector.multi_reduction <maximumf>, %131, %cst_55 [1] : vector<96x96xf32> to vector<96xf32>
    %133 = vector.shape_cast %132 : vector<96xf32> to vector<96x1xf32>
    %134 = vector.broadcast %133 : vector<96x1xf32> to vector<96x96xf32>
    %135 = arith.subf %131, %134 : vector<96x96xf32>
    %136 = math.exp %135 : vector<96x96xf32>
    %cst_56 = arith.constant dense<0.000000e+00> : vector<96xf32>
    %137 = vector.multi_reduction <add>, %136, %cst_56 [1] : vector<96x96xf32> to vector<96xf32>
    %138 = vector.shape_cast %137 : vector<96xf32> to vector<96x1xf32>
    %139 = tpu.reciprocal %138 {approx = true} : vector<96x1xf32> -> vector<96x1xf32>
    %140 = vector.broadcast %139 : vector<96x1xf32> to vector<96x96xf32>
    %141 = arith.mulf %136, %140 : vector<96x96xf32>
    %142 = arith.truncf %141 : vector<96x96xf32> to vector<96x96xbf16>
    %cst_57 = arith.constant dense<0.000000e+00> : vector<96x8xf32>
    %143 = tpu.matmul %142, %129, %cst_57 {dimension_numbers = #tpu.dot_dimension_numbers<[1], [0], [0], [1], [0, 0, 1, 1], [], []>} : vector<96x96xbf16>, vector<96x8xbf16>, vector<96x8xf32> -> vector<96x8xf32>
    %144 = arith.truncf %143 : vector<96x8xf32> to vector<96x8xbf16>
    %c3_58 = arith.constant 3 : index
    %c0_59 = arith.constant 0 : index
    %c0_60 = arith.constant 0 : index
    %145 = vector.load %arg3[%c3_58, %c0_59, %c0_60] : memref<4x8x32xbf16, #tpu.memory_space<vmem>>, vector<1x8x32xbf16>
    %146 = vector.shape_cast %145 : vector<1x8x32xbf16> to vector<8x32xbf16>
    %cst_61 = arith.constant dense<0.000000e+00> : vector<96x32xf32>
    %147 = tpu.matmul %144, %146, %cst_61 {dimension_numbers = #tpu.dot_dimension_numbers<[1], [0], [0], [1], [0, 0, 1, 1], [], []>} : vector<96x8xbf16>, vector<8x32xbf16>, vector<96x32xf32> -> vector<96x32xf32>
    %148 = arith.addf %123, %147 : vector<96x32xf32>
    %149 = arith.addf %0, %148 : vector<96x32xf32>
    %150 = vector.broadcast %4 : vector<1x32xf32> to vector<96x32xf32>
    %151 = arith.addf %149, %150 : vector<96x32xf32>
    %cst_62 = arith.constant dense<0.000000e+00> : vector<96xf32>
    %152 = vector.multi_reduction <add>, %151, %cst_62 [1] : vector<96x32xf32> to vector<96xf32>
    %153 = vector.shape_cast %152 : vector<96xf32> to vector<96x1xf32>
    %cst_63 = arith.constant 3.200000e+01 : f32
    %154 = vector.broadcast %cst_63 : f32 to vector<96x1xf32>
    %155 = arith.divf %153, %154 : vector<96x1xf32>
    %156 = vector.broadcast %155 : vector<96x1xf32> to vector<96x32xf32>
    %157 = arith.subf %151, %156 : vector<96x32xf32>
    %158 = arith.mulf %157, %157 : vector<96x32xf32>
    %cst_64 = arith.constant dense<0.000000e+00> : vector<96xf32>
    %159 = vector.multi_reduction <add>, %158, %cst_64 [1] : vector<96x32xf32> to vector<96xf32>
    %160 = vector.shape_cast %159 : vector<96xf32> to vector<96x1xf32>
    %cst_65 = arith.constant 3.200000e+01 : f32
    %161 = vector.broadcast %cst_65 : f32 to vector<96x1xf32>
    %162 = arith.divf %160, %161 : vector<96x1xf32>
    %163 = vector.broadcast %155 : vector<96x1xf32> to vector<96x32xf32>
    %164 = arith.subf %151, %163 : vector<96x32xf32>
    %cst_66 = arith.constant 9.99999974E-6 : f32
    %165 = vector.broadcast %cst_66 : f32 to vector<96x1xf32>
    %166 = arith.addf %162, %165 : vector<96x1xf32>
    %167 = math.rsqrt %166 : vector<96x1xf32>
    %168 = vector.broadcast %167 : vector<96x1xf32> to vector<96x32xf32>
    %169 = arith.mulf %164, %168 : vector<96x32xf32>
    %170 = vector.broadcast %7 : vector<1x32xf32> to vector<96x32xf32>
    %171 = arith.mulf %169, %170 : vector<96x32xf32>
    %172 = vector.broadcast %8 : vector<1x32xf32> to vector<96x32xf32>
    %173 = arith.addf %171, %172 : vector<96x32xf32>
    %174 = arith.truncf %173 : vector<96x32xf32> to vector<96x32xbf16>
    %c0_67 = arith.constant 0 : index
    %c0_68 = arith.constant 0 : index
    %175 = vector.load %arg4[%c0_67, %c0_68] : memref<32x128xbf16, #tpu.memory_space<vmem>>, vector<32x128xbf16>
    %cst_69 = arith.constant dense<0.000000e+00> : vector<96x128xf32>
    %176 = tpu.matmul %174, %175, %cst_69 {dimension_numbers = #tpu.dot_dimension_numbers<[1], [0], [0], [1], [0, 0, 1, 1], [], []>} : vector<96x32xbf16>, vector<32x128xbf16>, vector<96x128xf32> -> vector<96x128xf32>
    %177 = vector.broadcast %10 : vector<1x128xf32> to vector<96x128xf32>
    %178 = arith.addf %176, %177 : vector<96x128xf32>
    %179 = arith.mulf %178, %178 : vector<96x128xf32>
    %180 = arith.mulf %178, %179 : vector<96x128xf32>
    %cst_70 = arith.constant 4.471500e-02 : f32
    %181 = vector.broadcast %cst_70 : f32 to vector<96x128xf32>
    %182 = arith.mulf %181, %180 : vector<96x128xf32>
    %183 = arith.addf %178, %182 : vector<96x128xf32>
    %cst_71 = arith.constant 0.797884583 : f32
    %184 = vector.broadcast %cst_71 : f32 to vector<96x128xf32>
    %185 = arith.mulf %184, %183 : vector<96x128xf32>
    %186 = math.tanh %185 : vector<96x128xf32>
    %cst_72 = arith.constant 1.000000e+00 : f32
    %187 = vector.broadcast %cst_72 : f32 to vector<96x128xf32>
    %188 = arith.addf %187, %186 : vector<96x128xf32>
    %cst_73 = arith.constant 5.000000e-01 : f32
    %189 = vector.broadcast %cst_73 : f32 to vector<96x128xf32>
    %190 = arith.mulf %189, %188 : vector<96x128xf32>
    %191 = arith.mulf %178, %190 : vector<96x128xf32>
    %192 = arith.truncf %191 : vector<96x128xf32> to vector<96x128xbf16>
    %c0_74 = arith.constant 0 : index
    %c0_75 = arith.constant 0 : index
    %193 = vector.load %arg5[%c0_74, %c0_75] : memref<128x32xbf16, #tpu.memory_space<vmem>>, vector<128x32xbf16>
    %cst_76 = arith.constant dense<0.000000e+00> : vector<96x32xf32>
    %194 = tpu.matmul %192, %193, %cst_76 {dimension_numbers = #tpu.dot_dimension_numbers<[1], [0], [0], [1], [0, 0, 1, 1], [], []>} : vector<96x128xbf16>, vector<128x32xbf16>, vector<96x32xf32> -> vector<96x32xf32>
    %195 = vector.broadcast %9 : vector<1x32xf32> to vector<96x32xf32>
    %196 = arith.addf %194, %195 : vector<96x32xf32>
    %197 = arith.addf %151, %196 : vector<96x32xf32>
    %c0_77 = arith.constant 0 : index
    %198 = memref.load %arg8[%c0_77] : memref<3xf32, #tpu.memory_space<smem>>
    %199 = vector.extract_strided_slice %197 {offsets = [0, 0], sizes = [16, 32], strides = [1, 1]} : vector<96x32xf32> to vector<16x32xf32>
    %200 = vector.broadcast %198 : f32 to vector<16x32xf32>
    %201 = arith.mulf %200, %199 : vector<16x32xf32>
    %c1_78 = arith.constant 1 : index
    %202 = memref.load %arg8[%c1_78] : memref<3xf32, #tpu.memory_space<smem>>
    %203 = vector.extract_strided_slice %197 {offsets = [16, 0], sizes = [16, 32], strides = [1, 1]} : vector<96x32xf32> to vector<16x32xf32>
    %204 = vector.broadcast %202 : f32 to vector<16x32xf32>
    %205 = arith.mulf %204, %203 : vector<16x32xf32>
    %206 = arith.addf %201, %205 : vector<16x32xf32>
    %c2_79 = arith.constant 2 : index
    %207 = memref.load %arg8[%c2_79] : memref<3xf32, #tpu.memory_space<smem>>
    %208 = vector.extract_strided_slice %197 {offsets = [32, 0], sizes = [16, 32], strides = [1, 1]} : vector<96x32xf32> to vector<16x32xf32>
    %209 = vector.broadcast %207 : f32 to vector<16x32xf32>
    %210 = arith.mulf %209, %208 : vector<16x32xf32>
    %211 = arith.addf %206, %210 : vector<16x32xf32>
    %c0_80 = arith.constant 0 : index
    %c0_81 = arith.constant 0 : index
    %c0_82 = arith.constant 0 : index
    %212 = vector.load %arg9[%c0_80, %c0_81, %c0_82] : memref<2x16x32xf32, #tpu.memory_space<vmem>>, vector<1x16x32xf32>
    %213 = vector.shape_cast %212 : vector<1x16x32xf32> to vector<16x32xf32>
    %214 = vector.shape_cast %211 : vector<16x32xf32> to vector<1x16x32xf32>
    tpu.vector_store %arg9[%c0_80, %c0_81, %c0_82], %214 {strides = array<i32>} : memref<2x16x32xf32, #tpu.memory_space<vmem>>, vector<1x16x32xf32>,
    %c0_83 = arith.constant 0 : index
    %215 = memref.load %arg8[%c0_83] : memref<3xf32, #tpu.memory_space<smem>>
    %216 = vector.extract_strided_slice %197 {offsets = [48, 0], sizes = [16, 32], strides = [1, 1]} : vector<96x32xf32> to vector<16x32xf32>
    %217 = vector.broadcast %215 : f32 to vector<16x32xf32>
    %218 = arith.mulf %217, %216 : vector<16x32xf32>
    %c1_84 = arith.constant 1 : index
    %219 = memref.load %arg8[%c1_84] : memref<3xf32, #tpu.memory_space<smem>>
    %220 = vector.extract_strided_slice %197 {offsets = [64, 0], sizes = [16, 32], strides = [1, 1]} : vector<96x32xf32> to vector<16x32xf32>
    %221 = vector.broadcast %219 : f32 to vector<16x32xf32>
    %222 = arith.mulf %221, %220 : vector<16x32xf32>
    %223 = arith.addf %218, %222 : vector<16x32xf32>
    %c2_85 = arith.constant 2 : index
    %224 = memref.load %arg8[%c2_85] : memref<3xf32, #tpu.memory_space<smem>>
    %225 = vector.extract_strided_slice %197 {offsets = [80, 0], sizes = [16, 32], strides = [1, 1]} : vector<96x32xf32> to vector<16x32xf32>
    %226 = vector.broadcast %224 : f32 to vector<16x32xf32>
    %227 = arith.mulf %226, %225 : vector<16x32xf32>
    %228 = arith.addf %223, %227 : vector<16x32xf32>
    %c1_86 = arith.constant 1 : index
    %c0_87 = arith.constant 0 : index
    %c0_88 = arith.constant 0 : index
    %229 = vector.load %arg9[%c1_86, %c0_87, %c0_88] : memref<2x16x32xf32, #tpu.memory_space<vmem>>, vector<1x16x32xf32>
    %230 = vector.shape_cast %229 : vector<1x16x32xf32> to vector<16x32xf32>
    %231 = vector.shape_cast %228 : vector<16x32xf32> to vector<1x16x32xf32>
    tpu.vector_store %arg9[%c1_86, %c0_87, %c0_88], %231 {strides = array<i32>} : memref<2x16x32xf32, #tpu.memory_space<vmem>>, vector<1x16x32xf32>,
    return
  }
  func.func @transform_0(%arg0: i32) -> (i32, i32) {
    %c0_i32 = arith.constant 0 : i32
    %c0_i32_0 = arith.constant 0 : i32
    return %arg0, %c0_i32 : i32, i32
  }
  func.func @transform_1(%arg0: i32) -> (i32, i32, i32) {
    %c0_i32 = arith.constant 0 : i32
    %c0_i32_0 = arith.constant 0 : i32
    %c0_i32_1 = arith.constant 0 : i32
    %c0_i32_2 = arith.constant 0 : i32
    return %c0_i32, %c0_i32_0, %c0_i32_1 : i32, i32, i32
  }
  func.func @transform_2(%arg0: i32) -> (i32, i32, i32) {
    %c0_i32 = arith.constant 0 : i32
    %c0_i32_0 = arith.constant 0 : i32
    %c0_i32_1 = arith.constant 0 : i32
    %c0_i32_2 = arith.constant 0 : i32
    return %c0_i32, %c0_i32_0, %c0_i32_1 : i32, i32, i32
  }
  func.func @transform_3(%arg0: i32) -> (i32, i32) {
    %c0_i32 = arith.constant 0 : i32
    %c0_i32_0 = arith.constant 0 : i32
    %c0_i32_1 = arith.constant 0 : i32
    return %c0_i32, %c0_i32_0 : i32, i32
  }
  func.func @transform_4(%arg0: i32) -> (i32, i32) {
    %c0_i32 = arith.constant 0 : i32
    %c0_i32_0 = arith.constant 0 : i32
    %c0_i32_1 = arith.constant 0 : i32
    return %c0_i32, %c0_i32_0 : i32, i32
  }
  func.func @transform_5(%arg0: i32) -> (i32, i32) {
    %c0_i32 = arith.constant 0 : i32
    %c0_i32_0 = arith.constant 0 : i32
    %c0_i32_1 = arith.constant 0 : i32
    return %c0_i32, %c0_i32_0 : i32, i32
  }
  func.func @transform_6(%arg0: i32) -> (i32, i32) {
    %c0_i32 = arith.constant 0 : i32
    %c0_i32_0 = arith.constant 0 : i32
    %c0_i32_1 = arith.constant 0 : i32
    return %c0_i32, %c0_i32_0 : i32, i32
  }
  func.func @transform_7(%arg0: i32) -> i32 {
    %c0_i32 = arith.constant 0 : i32
    %c0_i32_0 = arith.constant 0 : i32
    return %c0_i32 : i32
  }
  func.func @transform_8(%arg0: i32) -> (i32, i32, i32) {
    %c0_i32 = arith.constant 0 : i32
    %c0_i32_0 = arith.constant 0 : i32
    %c0_i32_1 = arith.constant 0 : i32
    return %arg0, %c0_i32, %c0_i32_0 : i32, i32, i32
  }
}

</mosaic_0001>

<llo_original>
// kernel: tpu_custom_call.1
$region0: #{tpu_custom_call.1}
  #allocation0 [shape = 'u32[]', space=smem, size = 0x4, offset = 0x4, fixed_abs, tag = 'smem constant byte address 0x4 - core index']
  #allocation1 [shape = 'u32[144,128]{1,0:T(1,128)}', space=vmem, size = 0x12000, scoped, tag = 'internal scratch']
  %s0 = inlined_call_operand.vmem [shape: f32[96,32], index: 0, kind: input, shape index: {}]
  %s1 = inlined_call_operand.vmem [shape: bf16[3,32,32], index: 1, kind: input, shape index: {}]
  %s2 = inlined_call_operand.vmem [shape: bf16[4,8,32], index: 2, kind: input, shape index: {}]
  %s3 = inlined_call_operand.vmem [shape: bf16[32,128], index: 3, kind: input, shape index: {}]
  %s4 = inlined_call_operand.vmem [shape: bf16[128,32], index: 4, kind: input, shape index: {}]
  %s5 = inlined_call_operand.vmem [shape: f32[10,128], index: 5, kind: input, shape index: {}]
  %s6 = inlined_call_operand.vmem [shape: f32[96,96], index: 6, kind: input, shape index: {}]
  %s7 = inlined_call_operand.vmem [shape: f32[3], index: 7, kind: input, shape index: {}]
  %s8 = inlined_call_operand.hbm [shape: f32[2,16,32], index: 8, kind: output, shape index: {}]
  %s9 = sld [smem:[#allocation0]]
  $region46: #{tpu_custom_call.1} parent=0
    _
  %s11 = ssub.s32 1, %s9
  %s12 = scalar_select 0, %s11, %s9
  $region1: #{tpu_custom_call.1} parent=0
    #allocation2 [shape = 'u8[512]{0}', space=smem, size = 0x200, scoped, tag = 'input window, operand 7, single buffered']
    #allocation3 [shape = 's32[1]{0}', space=sflag, size = 0x4, scoped, tag = 'scoped memory for tpu_custom_call.1']
    #allocation4 [shape = 's32[1]{0}', space=sflag, size = 0x4, scoped, tag = 'scoped memory for tpu_custom_call.1']
    #allocation5 [shape = 'u8[16384]{0}', space=vmem, size = 0x4000, scoped, tag = 'output window, operand 0, single buffered']
    %13 = vsyncpa [#allocation4], 0
    %14 = vsyncpa [#allocation3], 0
    // Predicated region
    $region2: #{tpu_custom_call.1} parent=1 // pred_check
      _
    $region3: #{tpu_custom_call.1} parent=1 // pred_check_branch
      %16 = sbr.rel (0) target = $region5
    $region4: #{tpu_custom_call.1} parent=1 // pred_region
      _
    $region5: #{tpu_custom_call.1} parent=1 // pred_fallthru
      _
    // Predicated region
    $region6: #{tpu_custom_call.1} parent=1 // pred_check
      _
    $region7: #{tpu_custom_call.1} parent=1 // pred_check_branch
      %18 = sbr.rel (0) target = $region9
    $region8: #{tpu_custom_call.1} parent=1 // pred_region
      _
    $region9: #{tpu_custom_call.1} parent=1 // pred_fallthru
      _
    // Predicated region
    $region10: #{tpu_custom_call.1} parent=1 // pred_check
      _
    $region11: #{tpu_custom_call.1} parent=1 // pred_check_branch
      %20 = sbr.rel (0) target = $region13
    $region12: #{tpu_custom_call.1} parent=1 // pred_region
      _
    $region13: #{tpu_custom_call.1} parent=1 // pred_fallthru
      _
    // Predicated region
    $region14: #{tpu_custom_call.1} parent=1 // pred_check
      _
    $region15: #{tpu_custom_call.1} parent=1 // pred_check_branch
      %22 = sbr.rel (0) target = $region17
    $region16: #{tpu_custom_call.1} parent=1 // pred_region
      _
    $region17: #{tpu_custom_call.1} parent=1 // pred_fallthru
      _
    // Predicated region
    $region18: #{tpu_custom_call.1} parent=1 // pred_check
      _
    $region19: #{tpu_custom_call.1} parent=1 // pred_check_branch
      %24 = sbr.rel (0) target = $region21
    $region20: #{tpu_custom_call.1} parent=1 // pred_region
      _
    $region21: #{tpu_custom_call.1} parent=1 // pred_fallthru
      _
    // Predicated region
    $region22: #{tpu_custom_call.1} parent=1 // pred_check
      _
    $region23: #{tpu_custom_call.1} parent=1 // pred_check_branch
      %26 = sbr.rel (0) target = $region25
    $region24: #{tpu_custom_call.1} parent=1 // pred_region
      _
    $region25: #{tpu_custom_call.1} parent=1 // pred_fallthru
      _
    // Predicated region
    $region26: #{tpu_custom_call.1} parent=1 // pred_check
      _
    $region27: #{tpu_custom_call.1} parent=1 // pred_check_branch
      %28 = sbr.rel (0) target = $region29
    $region28: #{tpu_custom_call.1} parent=1 // pred_region
      _
    $region29: #{tpu_custom_call.1} parent=1 // pred_fallthru
      _
    // Predicated region
    $region30: #{tpu_custom_call.1} parent=1 // pred_check
      _
    $region31: #{tpu_custom_call.1} parent=1 // pred_check_branch
      %30 = sbr.rel (0) target = $region33
    $region32: #{tpu_custom_call.1} parent=1 // pred_region
      %s32 = ssub.s32 16, 16
      %33 = vsyncadd [#allocation4], %s32
      %s35 = sshll.u32 %s7, 4
      %s36 = int_to_ptr.vmem [resolvable:$true] %s35
      %38 = dma.vmem_to_smem %s36, 16, [#allocation2], [#allocation4]
    $region33: #{tpu_custom_call.1} parent=1 // pred_fallthru
      _
    // Predicated region
    $region34: #{tpu_custom_call.1} parent=1 // pred_check
      _
    $region35: #{tpu_custom_call.1} parent=1 // pred_check_branch
      %40 = sbr.rel (0) target = $region37
    $region36: #{tpu_custom_call.1} parent=1 // pred_region
      %41 = dma.done [#allocation4], 16
    $region37: #{tpu_custom_call.1} parent=1 // pred_fallthru
      _
    %42 = sfence
    %v44 = vld [vmem:[%s0] sm:$0xff]
    %v45 = vld [vmem:[%s0 + $0x8] sm:$0xff]
    %v46 = vld [vmem:[%s0 + $0x10] sm:$0xff]
    %v47 = vld [vmem:[%s0 + $0x18] sm:$0xff]
    %v48 = vld [vmem:[%s0 + $0x20] sm:$0xff]
    %v49 = vld [vmem:[%s0 + $0x28] sm:$0xff]
    %v50 = vld [vmem:[%s0 + $0x30] sm:$0xff]
    %v51 = vld [vmem:[%s0 + $0x38] sm:$0xff]
    %v52 = vld [vmem:[%s0 + $0x40] sm:$0xff]
    %v53 = vld [vmem:[%s0 + $0x48] sm:$0xff]
    %v54 = vld [vmem:[%s0 + $0x50] sm:$0xff]
    %v55 = vld [vmem:[%s0 + $0x58] sm:$0xff]
    %v56 = vld [vmem:[%s5] sm:$0x1]
    %v57 = vld [vmem:[%s5 + $0x1] sm:$0x1]
    %v58 = vld [vmem:[%s5 + $0x2] sm:$0x1]
    %v59 = vld [vmem:[%s5 + $0x3] sm:$0x1]
    %v60 = vld [vmem:[%s5 + $0x4] sm:$0x1]
    %v61 = vld [vmem:[%s5 + $0x5] sm:$0x1]
    %v62 = vld [vmem:[%s5 + $0x6] sm:$0x1]
    %v63 = vld [vmem:[%s5 + $0x7] sm:$0x1]
    %v64 = vld [vmem:[%s5 + $0x8] sm:$0x1]
    %v65 = vld [vmem:[%s5 + $0x9] sm:$0x1]
    %vm66 = vcmask 261120
    %v67 = vsel %vm66, %v44, 0.0
    %68 = vadd.xlane.f32.xlu0 %v67
    %v69 = vpop.xlane.xlu0 %68
    %v70 = vsel %vm66, %v45, 0.0
    %71 = vadd.xlane.f32.xlu0 %v70
    %v72 = vpop.xlane.xlu0 %71
    %v73 = vsel %vm66, %v46, 0.0
    %74 = vadd.xlane.f32.xlu0 %v73
    %v75 = vpop.xlane.xlu0 %74
    %v76 = vsel %vm66, %v47, 0.0
    %77 = vadd.xlane.f32.xlu0 %v76
    %v78 = vpop.xlane.xlu0 %77
    %v79 = vsel %vm66, %v48, 0.0
    %80 = vadd.xlane.f32.xlu0 %v79
    %v81 = vpop.xlane.xlu0 %80
    %v82 = vsel %vm66, %v49, 0.0
    %83 = vadd.xlane.f32.xlu0 %v82
    %v84 = vpop.xlane.xlu0 %83
    %v85 = vsel %vm66, %v50, 0.0
    %86 = vadd.xlane.f32.xlu0 %v85
    %v87 = vpop.xlane.xlu0 %86
    %v88 = vsel %vm66, %v51, 0.0
    %89 = vadd.xlane.f32.xlu0 %v88
    %v90 = vpop.xlane.xlu0 %89
    %v91 = vsel %vm66, %v52, 0.0
    %92 = vadd.xlane.f32.xlu0 %v91
    %v93 = vpop.xlane.xlu0 %92
    %v94 = vsel %vm66, %v53, 0.0
    %95 = vadd.xlane.f32.xlu0 %v94
    %v96 = vpop.xlane.xlu0 %95
    %v97 = vsel %vm66, %v54, 0.0
    %98 = vadd.xlane.f32.xlu0 %v97
    %v99 = vpop.xlane.xlu0 %98
    %v100 = vsel %vm66, %v55, 0.0
    %101 = vadd.xlane.f32.xlu0 %v100
    %v102 = vpop.xlane.xlu0 %101
    %v103 = vrcp.pop 32.0
    %v104 = vmul.f32 %v69, %v103
    %v105 = vmul.f32 %v72, %v103
    %v106 = vmul.f32 %v75, %v103
    %v107 = vmul.f32 %v78, %v103
    %v108 = vmul.f32 %v81, %v103
    %v109 = vmul.f32 %v84, %v103
    %v110 = vmul.f32 %v87, %v103
    %v111 = vmul.f32 %v90, %v103
    %v112 = vmul.f32 %v93, %v103
    %v113 = vmul.f32 %v96, %v103
    %v114 = vmul.f32 %v99, %v103
    %v115 = vmul.f32 %v102, %v103
    %v116 = vsub.f32 %v44, %v104
    %v117 = vsub.f32 %v45, %v105
    %v118 = vsub.f32 %v46, %v106
    %v119 = vsub.f32 %v47, %v107
    %v120 = vsub.f32 %v48, %v108
    %v121 = vsub.f32 %v49, %v109
    %v122 = vsub.f32 %v50, %v110
    %v123 = vsub.f32 %v51, %v111
    %v124 = vsub.f32 %v52, %v112
    %v125 = vsub.f32 %v53, %v113
    %v126 = vsub.f32 %v54, %v114
    %v127 = vsub.f32 %v55, %v115
    %v128 = vmul.f32 %v116, %v116
    %v129 = vmul.f32 %v117, %v117
    %v130 = vmul.f32 %v118, %v118
    %v131 = vmul.f32 %v119, %v119
    %v132 = vmul.f32 %v120, %v120
    %v133 = vmul.f32 %v121, %v121
    %v134 = vmul.f32 %v122, %v122
    %v135 = vmul.f32 %v123, %v123
    %v136 = vmul.f32 %v124, %v124
    %v137 = vmul.f32 %v125, %v125
    %v138 = vmul.f32 %v126, %v126
    %v139 = vmul.f32 %v127, %v127
    %v140 = vsel %vm66, %v128, 0.0
    %141 = vadd.xlane.f32.xlu0 %v140
    %v142 = vpop.xlane.xlu0 %141
    %v143 = vsel %vm66, %v129, 0.0
    %144 = vadd.xlane.f32.xlu0 %v143
    %v145 = vpop.xlane.xlu0 %144
    %v146 = vsel %vm66, %v130, 0.0
    %147 = vadd.xlane.f32.xlu0 %v146
    %v148 = vpop.xlane.xlu0 %147
    %v149 = vsel %vm66, %v131, 0.0
    %150 = vadd.xlane.f32.xlu0 %v149
    %v151 = vpop.xlane.xlu0 %150
    %v152 = vsel %vm66, %v132, 0.0
    %153 = vadd.xlane.f32.xlu0 %v152
    %v154 = vpop.xlane.xlu0 %153
    %v155 = vsel %vm66, %v133, 0.0
    %156 = vadd.xlane.f32.xlu0 %v155
    %v157 = vpop.xlane.xlu0 %156
    %v158 = vsel %vm66, %v134, 0.0
    %159 = vadd.xlane.f32.xlu0 %v158
    %v160 = vpop.xlane.xlu0 %159
    %v161 = vsel %vm66, %v135, 0.0
    %162 = vadd.xlane.f32.xlu0 %v161
    %v163 = vpop.xlane.xlu0 %162
    %v164 = vsel %vm66, %v136, 0.0
    %165 = vadd.xlane.f32.xlu0 %v164
    %v166 = vpop.xlane.xlu0 %165
    %v167 = vsel %vm66, %v137, 0.0
    %168 = vadd.xlane.f32.xlu0 %v167
    %v169 = vpop.xlane.xlu0 %168
    %v170 = vsel %vm66, %v138, 0.0
    %171 = vadd.xlane.f32.xlu0 %v170
    %v172 = vpop.xlane.xlu0 %171
    %v173 = vsel %vm66, %v139, 0.0
    %174 = vadd.xlane.f32.xlu0 %v173
    %v175 = vpop.xlane.xlu0 %174
    %v176 = vmul.f32 %v142, %v103
    %v177 = vmul.f32 %v145, %v103
    %v178 = vmul.f32 %v148, %v103
    %v179 = vmul.f32 %v151, %v103
    %v180 = vmul.f32 %v154, %v103
    %v181 = vmul.f32 %v157, %v103
    %v182 = vmul.f32 %v160, %v103
    %v183 = vmul.f32 %v163, %v103
    %v184 = vmul.f32 %v166, %v103
    %v185 = vmul.f32 %v169, %v103
    %v186 = vmul.f32 %v172, %v103
    %v187 = vmul.f32 %v175, %v103
    %v188 = vadd.f32 %v176, 1e-05
    %v189 = vadd.f32 %v177, 1e-05
    %v190 = vadd.f32 %v178, 1e-05
    %v191 = vadd.f32 %v179, 1e-05
    %v192 = vadd.f32 %v180, 1e-05
    %v193 = vadd.f32 %v181, 1e-05
    %v194 = vadd.f32 %v182, 1e-05
    %v195 = vadd.f32 %v183, 1e-05
    %v196 = vadd.f32 %v184, 1e-05
    %v197 = vadd.f32 %v185, 1e-05
    %v198 = vadd.f32 %v186, 1e-05
    %v199 = vadd.f32 %v187, 1e-05
    %v200 = vrsqrt.pop %v188
    %v201 = vrsqrt.pop %v189
    %v202 = vrsqrt.pop %v190
    %v203 = vrsqrt.pop %v191
    %v204 = vrsqrt.pop %v192
    %v205 = vrsqrt.pop %v193
    %v206 = vrsqrt.pop %v194
    %v207 = vrsqrt.pop %v195
    %v208 = vrsqrt.pop %v196
    %v209 = vrsqrt.pop %v197
    %v210 = vrsqrt.pop %v198
    %v211 = vrsqrt.pop %v199
    %v212 = vmul.f32 %v116, %v200
    %v213 = vmul.f32 %v117, %v201
    %v214 = vmul.f32 %v118, %v202
    %v215 = vmul.f32 %v119, %v203
    %v216 = vmul.f32 %v120, %v204
    %v217 = vmul.f32 %v121, %v205
    %v218 = vmul.f32 %v122, %v206
    %v219 = vmul.f32 %v123, %v207
    %v220 = vmul.f32 %v124, %v208
    %v221 = vmul.f32 %v125, %v209
    %v222 = vmul.f32 %v126, %v210
    %v223 = vmul.f32 %v127, %v211
    %v224 = vlaneseq
    %v225 = vshrl.u32 %v224, 7
    %v226 = vsub.s32 0, %v225
    %v227 = vrot.slane %v60, %v226
    %v228 = vmul.f32 %v212, %v227
    %v229 = vmul.f32 %v213, %v227
    %v230 = vmul.f32 %v214, %v227
    %v231 = vmul.f32 %v215, %v227
    %v232 = vmul.f32 %v216, %v227
    %v233 = vmul.f32 %v217, %v227
    %v234 = vmul.f32 %v218, %v227
    %v235 = vmul.f32 %v219, %v227
    %v236 = vmul.f32 %v220, %v227
    %v237 = vmul.f32 %v221, %v227
    %v238 = vmul.f32 %v222, %v227
    %v239 = vmul.f32 %v223, %v227
    %v240 = vlaneseq
    %v241 = vshrl.u32 %v240, 7
    %v242 = vsub.s32 0, %v241
    %v243 = vrot.slane %v61, %v242
    %v244 = vadd.f32 %v228, %v243
    %v245 = vadd.f32 %v229, %v243
    %v246 = vadd.f32 %v230, %v243
    %v247 = vadd.f32 %v231, %v243
    %v248 = vadd.f32 %v232, %v243
    %v249 = vadd.f32 %v233, %v243
    %v250 = vadd.f32 %v234, %v243
    %v251 = vadd.f32 %v235, %v243
    %v252 = vadd.f32 %v236, %v243
    %v253 = vadd.f32 %v237, %v243
    %v254 = vadd.f32 %v238, %v243
    %v255 = vadd.f32 %v239, %v243
    %v256 = vpack.c.bf16 %v245, %v244
    %v257 = vpack.c.bf16 %v247, %v246
    %v258 = vpack.c.bf16 %v249, %v248
    %v259 = vpack.c.bf16 %v251, %v250
    %v260 = vpack.c.bf16 %v253, %v252
    %v261 = vpack.c.bf16 %v255, %v254
    %v262 = vld [vmem:[%s1] sm:$0xf]
    %v263 = vld [vmem:[%s1 + $0x4] sm:$0xf]
    %v264 = vld [vmem:[%s1 + $0x8] sm:$0xf]
    %v265 = vld [vmem:[%s1 + $0xc] sm:$0xf]
    %v266 = vlaneseq
    %v267 = vshrl.u32 %v266, 7
    %v268 = vsub.s32 0, %v267
    %v269 = vrot.slane %v56, %v268
    %v274 = vunpack.c.l.b16 %v262
    %v275 = vunpack.c.l.b16 %v263
    %v276 = vunpack.c.l.b16 %v264
    %v277 = vunpack.c.l.b16 %v265
    %v278 = vpack.c.b16 %v275, %v274
    %v279 = vpack.c.b16 %v277, %v276
    %v283 = vsel %vm66, %v256, 0
    %v286 = vsel %vm66, %v257, 0
    %v289 = vsel %vm66, %v258, 0
    %v292 = vsel %vm66, %v259, 0
    %v295 = vsel %vm66, %v260, 0
    %v298 = vsel %vm66, %v261, 0
    %300 = vmatprep.subr.bf16.mxu0 0
    %301 = vmatpush1.bf16.msra.mxu0 %v278
    %302 = vmatprep.subr.bf16.mxu0 0
    %303 = vmatpush1.bf16.msra.mxu0 %v279
    %304 = vmatprep.subr.bf16.mxu0 0
    %305 = vmatpush1.bf16.msra.mxu0 0
    %306 = vmatprep.subr.bf16.mxu0 0
    %307 = vmatpush1.bf16.msra.mxu0 0
    %308 = vmatprep.subr.bf16.mxu0 0
    %309 = vmatpush1.bf16.msra.mxu0 0
    %310 = vmatprep.subr.bf16.mxu0 0
    %311 = vmatpush1.bf16.msra.mxu0 0
    %312 = vmatprep.subr.bf16.mxu0 0
    %313 = vmatpush1.bf16.msra.mxu0 0
    %314 = vmatprep.subr.bf16.mxu0 0
    %315 = vmatpush1.bf16.msra.mxu0 0
    %316 = vmatprep.subr.bf16.mxu0 0
    %317 = vmatpush1.bf16.msra.mxu0 0
    %318 = vmatprep.subr.bf16.mxu0 0
    %319 = vmatpush1.bf16.msra.mxu0 0
    %320 = vmatprep.subr.bf16.mxu0 0
    %321 = vmatpush1.bf16.msra.mxu0 0
    %322 = vmatprep.subr.bf16.mxu0 0
    %323 = vmatpush1.bf16.msra.mxu0 0
    %324 = vmatprep.subr.bf16.mxu0 0
    %325 = vmatpush1.bf16.msra.mxu0 0
    %326 = vmatprep.subr.bf16.mxu0 0
    %327 = vmatpush1.bf16.msra.mxu0 0
    %328 = vmatprep.subr.bf16.mxu0 0
    %329 = vmatpush1.bf16.msra.mxu0 0
    %330 = vmatprep.subr.bf16.mxu0 0
    %331 = vmatpush1.bf16.msra.mxu0 0
    %332 = vmatprep.mubr.bf16.mxu0 0
    %333 = vmatmul.mubr.bf16.gmra.mrb[0].mxu0 %v283
    %v334 = vpop.f32.mrb[0].mxu0
    %v335 = vadd.f32 %v269, %v334
    %v336 = vpop.f32.mrb[0].mxu0
    %v337 = vpop.f32.mrb[0].mxu0
    %v338 = vadd.f32 %v269, %v337
    %v339 = vpop.f32.mrb[0].mxu0
    %340 = vmatprep.mubr.bf16.mxu0 0
    %341 = vmatmul.mubr.bf16.gmra.mrb[0].mxu0 %v286
    %v342 = vpop.f32.mrb[0].mxu0
    %v343 = vadd.f32 %v269, %v342
    %v344 = vpop.f32.mrb[0].mxu0
    %v345 = vpop.f32.mrb[0].mxu0
    %v346 = vadd.f32 %v269, %v345
    %v347 = vpop.f32.mrb[0].mxu0
    %348 = vmatprep.mubr.bf16.mxu0 0
    %349 = vmatmul.mubr.bf16.gmra.mrb[0].mxu0 %v289
    %v350 = vpop.f32.mrb[0].mxu0
    %v351 = vadd.f32 %v269, %v350
    %v352 = vpop.f32.mrb[0].mxu0
    %v353 = vpop.f32.mrb[0].mxu0
    %v354 = vadd.f32 %v269, %v353
    %v355 = vpop.f32.mrb[0].mxu0
    %356 = vmatprep.mubr.bf16.mxu0 0
    %357 = vmatmul.mubr.bf16.gmra.mrb[0].mxu0 %v292
    %v358 = vpop.f32.mrb[0].mxu0
    %v359 = vadd.f32 %v269, %v358
    %v360 = vpop.f32.mrb[0].mxu0
    %v361 = vpop.f32.mrb[0].mxu0
    %v362 = vadd.f32 %v269, %v361
    %v363 = vpop.f32.mrb[0].mxu0
    %364 = vmatprep.mubr.bf16.mxu0 0
    %365 = vmatmul.mubr.bf16.gmra.mrb[0].mxu0 %v295
    %v366 = vpop.f32.mrb[0].mxu0
    %v367 = vadd.f32 %v269, %v366
    %v368 = vpop.f32.mrb[0].mxu0
    %v369 = vpop.f32.mrb[0].mxu0
    %v370 = vadd.f32 %v269, %v369
    %v371 = vpop.f32.mrb[0].mxu0
    %372 = vmatprep.mubr.bf16.mxu0 0
    %373 = vmatmul.mubr.bf16.gmra.mrb[0].mxu0 %v298
    %v374 = vpop.f32.mrb[0].mxu0
    %v375 = vadd.f32 %v269, %v374
    %v376 = vpop.f32.mrb[0].mxu0
    %v377 = vpop.f32.mrb[0].mxu0
    %v378 = vadd.f32 %v269, %v377
    %v379 = vpop.f32.mrb[0].mxu0
    %380 = vdwg.mxu0
    %s381 = scalar_lea.vmem %s1, 16
    %v382 = vld [vmem:[%s381] sm:$0xf]
    %v383 = vld [vmem:[%s381 + $0x4] sm:$0xf]
    %v384 = vld [vmem:[%s381 + $0x8] sm:$0xf]
    %v385 = vld [vmem:[%s381 + $0xc] sm:$0xf]
    %v386 = vlaneseq
    %v387 = vshrl.u32 %v386, 7
    %v388 = vsub.s32 0, %v387
    %v389 = vrot.slane %v57, %v388
    %v394 = vunpack.c.l.b16 %v382
    %v395 = vunpack.c.l.b16 %v383
    %v396 = vunpack.c.l.b16 %v384
    %v397 = vunpack.c.l.b16 %v385
    %v398 = vpack.c.b16 %v395, %v394
    %v399 = vpack.c.b16 %v397, %v396
    %402 = vmatprep.subr.bf16.mxu0 0
    %403 = vmatpush1.bf16.msra.mxu0 %v398
    %404 = vmatprep.subr.bf16.mxu0 0
    %405 = vmatpush1.bf16.msra.mxu0 %v399
    %406 = vmatprep.subr.bf16.mxu0 0
    %407 = vmatpush1.bf16.msra.mxu0 0
    %408 = vmatprep.subr.bf16.mxu0 0
    %409 = vmatpush1.bf16.msra.mxu0 0
    %410 = vmatprep.subr.bf16.mxu0 0
    %411 = vmatpush1.bf16.msra.mxu0 0
    %412 = vmatprep.subr.bf16.mxu0 0
    %413 = vmatpush1.bf16.msra.mxu0 0
    %414 = vmatprep.subr.bf16.mxu0 0
    %415 = vmatpush1.bf16.msra.mxu0 0
    %416 = vmatprep.subr.bf16.mxu0 0
    %417 = vmatpush1.bf16.msra.mxu0 0
    %418 = vmatprep.subr.bf16.mxu0 0
    %419 = vmatpush1.bf16.msra.mxu0 0
    %420 = vmatprep.subr.bf16.mxu0 0
    %421 = vmatpush1.bf16.msra.mxu0 0
    %422 = vmatprep.subr.bf16.mxu0 0
    %423 = vmatpush1.bf16.msra.mxu0 0
    %424 = vmatprep.subr.bf16.mxu0 0
    %425 = vmatpush1.bf16.msra.mxu0 0
    %426 = vmatprep.subr.bf16.mxu0 0
    %427 = vmatpush1.bf16.msra.mxu0 0
    %428 = vmatprep.subr.bf16.mxu0 0
    %429 = vmatpush1.bf16.msra.mxu0 0
    %430 = vmatprep.subr.bf16.mxu0 0
    %431 = vmatpush1.bf16.msra.mxu0 0
    %432 = vmatprep.subr.bf16.mxu0 0
    %433 = vmatpush1.bf16.msra.mxu0 0
    %434 = vmatprep.mubr.bf16.mxu0 0
    %435 = vmatmul.mubr.bf16.gmra.mrb[0].mxu0 %v283
    %v436 = vpop.f32.mrb[0].mxu0
    %v437 = vadd.f32 %v389, %v436
    %v438 = vpop.f32.mrb[0].mxu0
    %v439 = vpop.f32.mrb[0].mxu0
    %v440 = vadd.f32 %v389, %v439
    %v441 = vpop.f32.mrb[0].mxu0
    %442 = vmatprep.mubr.bf16.mxu0 0
    %443 = vmatmul.mubr.bf16.gmra.mrb[0].mxu0 %v286
    %v444 = vpop.f32.mrb[0].mxu0
    %v445 = vadd.f32 %v389, %v444
    %v446 = vpop.f32.mrb[0].mxu0
    %v447 = vpop.f32.mrb[0].mxu0
    %v448 = vadd.f32 %v389, %v447
    %v449 = vpop.f32.mrb[0].mxu0
    %450 = vmatprep.mubr.bf16.mxu0 0
    %451 = vmatmul.mubr.bf16.gmra.mrb[0].mxu0 %v289
    %v452 = vpop.f32.mrb[0].mxu0
    %v453 = vadd.f32 %v389, %v452
    %v454 = vpop.f32.mrb[0].mxu0
    %v455 = vpop.f32.mrb[0].mxu0
    %v456 = vadd.f32 %v389, %v455
    %v457 = vpop.f32.mrb[0].mxu0
    %458 = vmatprep.mubr.bf16.mxu0 0
    %459 = vmatmul.mubr.bf16.gmra.mrb[0].mxu0 %v292
    %v460 = vpop.f32.mrb[0].mxu0
    %v461 = vadd.f32 %v389, %v460
    %v462 = vpop.f32.mrb[0].mxu0
    %v463 = vpop.f32.mrb[0].mxu0
    %v464 = vadd.f32 %v389, %v463
    %v465 = vpop.f32.mrb[0].mxu0
    %466 = vmatprep.mubr.bf16.mxu0 0
    %467 = vmatmul.mubr.bf16.gmra.mrb[0].mxu0 %v295
    %v468 = vpop.f32.mrb[0].mxu0
    %v469 = vadd.f32 %v389, %v468
    %v470 = vpop.f32.mrb[0].mxu0
    %v471 = vpop.f32.mrb[0].mxu0
    %v472 = vadd.f32 %v389, %v471
    %v473 = vpop.f32.mrb[0].mxu0
    %474 = vmatprep.mubr.bf16.mxu0 0
    %475 = vmatmul.mubr.bf16.gmra.mrb[0].mxu0 %v298
    %v476 = vpop.f32.mrb[0].mxu0
    %v477 = vadd.f32 %v389, %v476
    %v478 = vpop.f32.mrb[0].mxu0
    %v479 = vpop.f32.mrb[0].mxu0
    %v480 = vadd.f32 %v389, %v479
    %v481 = vpop.f32.mrb[0].mxu0
    %482 = vdwg.mxu0
    %s483 = scalar_lea.vmem %s1, 32
    %v484 = vld [vmem:[%s483] sm:$0xf]
    %v485 = vld [vmem:[%s483 + $0x4] sm:$0xf]
    %v486 = vld [vmem:[%s483 + $0x8] sm:$0xf]
    %v487 = vld [vmem:[%s483 + $0xc] sm:$0xf]
    %v488 = vlaneseq
    %v489 = vshrl.u32 %v488, 7
    %v490 = vsub.s32 0, %v489
    %v491 = vrot.slane %v58, %v490
    %v496 = vunpack.c.l.b16 %v484
    %v497 = vunpack.c.l.b16 %v485
    %v498 = vunpack.c.l.b16 %v486
    %v499 = vunpack.c.l.b16 %v487
    %v500 = vpack.c.b16 %v497, %v496
    %v501 = vpack.c.b16 %v499, %v498
    %504 = vmatprep.subr.bf16.mxu0 0
    %505 = vmatpush1.bf16.msra.mxu0 %v500
    %506 = vmatprep.subr.bf16.mxu0 0
    %507 = vmatpush1.bf16.msra.mxu0 %v501
    %508 = vmatprep.subr.bf16.mxu0 0
    %509 = vmatpush1.bf16.msra.mxu0 0
    %510 = vmatprep.subr.bf16.mxu0 0
    %511 = vmatpush1.bf16.msra.mxu0 0
    %512 = vmatprep.subr.bf16.mxu0 0
    %513 = vmatpush1.bf16.msra.mxu0 0
    %514 = vmatprep.subr.bf16.mxu0 0
    %515 = vmatpush1.bf16.msra.mxu0 0
    %516 = vmatprep.subr.bf16.mxu0 0
    %517 = vmatpush1.bf16.msra.mxu0 0
    %518 = vmatprep.subr.bf16.mxu0 0
    %519 = vmatpush1.bf16.msra.mxu0 0
    %520 = vmatprep.subr.bf16.mxu0 0
    %521 = vmatpush1.bf16.msra.mxu0 0
    %522 = vmatprep.subr.bf16.mxu0 0
    %523 = vmatpush1.bf16.msra.mxu0 0
    %524 = vmatprep.subr.bf16.mxu0 0
    %525 = vmatpush1.bf16.msra.mxu0 0
    %526 = vmatprep.subr.bf16.mxu0 0
    %527 = vmatpush1.bf16.msra.mxu0 0
    %528 = vmatprep.subr.bf16.mxu0 0
    %529 = vmatpush1.bf16.msra.mxu0 0
    %530 = vmatprep.subr.bf16.mxu0 0
    %531 = vmatpush1.bf16.msra.mxu0 0
    %532 = vmatprep.subr.bf16.mxu0 0
    %533 = vmatpush1.bf16.msra.mxu0 0
    %534 = vmatprep.subr.bf16.mxu0 0
    %535 = vmatpush1.bf16.msra.mxu0 0
    %536 = vmatprep.mubr.bf16.mxu0 0
    %537 = vmatmul.mubr.bf16.gmra.mrb[0].mxu0 %v283
    %v538 = vpop.f32.mrb[0].mxu0
    %v539 = vadd.f32 %v491, %v538
    %v540 = vpop.f32.mrb[0].mxu0
    %v541 = vpop.f32.mrb[0].mxu0
    %v542 = vadd.f32 %v491, %v541
    %v543 = vpop.f32.mrb[0].mxu0
    %544 = vmatprep.mubr.bf16.mxu0 0
    %545 = vmatmul.mubr.bf16.gmra.mrb[0].mxu0 %v286
    %v546 = vpop.f32.mrb[0].mxu0
    %v547 = vadd.f32 %v491, %v546
    %v548 = vpop.f32.mrb[0].mxu0
    %v549 = vpop.f32.mrb[0].mxu0
    %v550 = vadd.f32 %v491, %v549
    %v551 = vpop.f32.mrb[0].mxu0
    %552 = vmatprep.mubr.bf16.mxu0 0
    %553 = vmatmul.mubr.bf16.gmra.mrb[0].mxu0 %v289
    %v554 = vpop.f32.mrb[0].mxu0
    %v555 = vadd.f32 %v491, %v554
    %v556 = vpop.f32.mrb[0].mxu0
    %v557 = vpop.f32.mrb[0].mxu0
    %v558 = vadd.f32 %v491, %v557
    %v559 = vpop.f32.mrb[0].mxu0
    %560 = vmatprep.mubr.bf16.mxu0 0
    %561 = vmatmul.mubr.bf16.gmra.mrb[0].mxu0 %v292
    %v562 = vpop.f32.mrb[0].mxu0
    %v563 = vadd.f32 %v491, %v562
    %v564 = vpop.f32.mrb[0].mxu0
    %v565 = vpop.f32.mrb[0].mxu0
    %v566 = vadd.f32 %v491, %v565
    %v567 = vpop.f32.mrb[0].mxu0
    %568 = vmatprep.mubr.bf16.mxu0 0
    %569 = vmatmul.mubr.bf16.gmra.mrb[0].mxu0 %v295
    %v570 = vpop.f32.mrb[0].mxu0
    %v571 = vadd.f32 %v491, %v570
    %v572 = vpop.f32.mrb[0].mxu0
    %v573 = vpop.f32.mrb[0].mxu0
    %v574 = vadd.f32 %v491, %v573
    %v575 = vpop.f32.mrb[0].mxu0
    %576 = vmatprep.mubr.bf16.mxu0 0
    %577 = vmatmul.mubr.bf16.gmra.mrb[0].mxu0 %v298
    %v578 = vpop.f32.mrb[0].mxu0
    %v579 = vadd.f32 %v491, %v578
    %v580 = vpop.f32.mrb[0].mxu0
    %v581 = vpop.f32.mrb[0].mxu0
    %v582 = vadd.f32 %v491, %v581
    %v583 = vpop.f32.mrb[0].mxu0
    %584 = vdwg.mxu0
    %v585 = vld [vmem:[%s6] sm:$0xff]
    %v586 = vld [vmem:[%s6 + $0x8] sm:$0xff]
    %v587 = vld [vmem:[%s6 + $0x10] sm:$0xff]
    %v588 = vld [vmem:[%s6 + $0x18] sm:$0xff]
    %v589 = vld [vmem:[%s6 + $0x20] sm:$0xff]
    %v590 = vld [vmem:[%s6 + $0x28] sm:$0xff]
    %v591 = vld [vmem:[%s6 + $0x30] sm:$0xff]
    %v592 = vld [vmem:[%s6 + $0x38] sm:$0xff]
    %v593 = vld [vmem:[%s6 + $0x40] sm:$0xff]
    %v594 = vld [vmem:[%s6 + $0x48] sm:$0xff]
    %v595 = vld [vmem:[%s6 + $0x50] sm:$0xff]
    %v596 = vld [vmem:[%s6 + $0x58] sm:$0xff]
    %v597 = vpack.c.bf16 %v338, %v335
    %v598 = vpack.c.bf16 %v346, %v343
    %v599 = vpack.c.bf16 %v354, %v351
    %v600 = vpack.c.bf16 %v362, %v359
    %v601 = vpack.c.bf16 %v370, %v367
    %v602 = vpack.c.bf16 %v378, %v375
    %v603 = vpack.c.bf16 %v440, %v437
    %v604 = vpack.c.bf16 %v448, %v445
    %v605 = vpack.c.bf16 %v456, %v453
    %v606 = vpack.c.bf16 %v464, %v461
    %v607 = vpack.c.bf16 %v472, %v469
    %v608 = vpack.c.bf16 %v480, %v477
    %v609 = vpack.c.bf16 %v542, %v539
    %v610 = vpack.c.bf16 %v550, %v547
    %v611 = vpack.c.bf16 %v558, %v555
    %v612 = vpack.c.bf16 %v566, %v563
    %v613 = vpack.c.bf16 %v574, %v571
    %v614 = vpack.c.bf16 %v582, %v579
    %vm615 = vcmask 64512
    %v617 = vsel %vm615, %v597, 0
    %v620 = vsel %vm615, %v598, 0
    %v623 = vsel %vm615, %v599, 0
    %v626 = vsel %vm615, %v600, 0
    %v629 = vsel %vm615, %v601, 0
    %v632 = vsel %vm615, %v602, 0
    %v635 = vsel %vm615, %v603, 0
    %v638 = vsel %vm615, %v604, 0
    %v641 = vsel %vm615, %v605, 0
    %v644 = vsel %vm615, %v606, 0
    %v647 = vsel %vm615, %v607, 0
    %v650 = vsel %vm615, %v608, 0
    %652 = vmatprep.subr.bf16.mxu0 0
    %653 = vmatpush1.bf16.xpose.msra.mxu0 %v635
    %654 = vmatprep.subr.bf16.mxu0 0
    %655 = vmatpush1.bf16.xpose.msra.mxu0 %v638
    %656 = vmatprep.subr.bf16.mxu0 0
    %657 = vmatpush1.bf16.xpose.msra.mxu0 %v641
    %658 = vmatprep.subr.bf16.mxu0 0
    %659 = vmatpush1.bf16.xpose.msra.mxu0 %v644
    %660 = vmatprep.subr.bf16.mxu0 0
    %661 = vmatpush1.bf16.xpose.msra.mxu0 %v647
    %662 = vmatprep.subr.bf16.mxu0 0
    %663 = vmatpush1.bf16.xpose.msra.mxu0 %v650
    %664 = vmatprep.subr.bf16.mxu0 0
    %665 = vmatpush1.bf16.xpose.msra.mxu0 0
    %666 = vmatprep.subr.bf16.mxu0 0
    %667 = vmatpush1.bf16.xpose.msra.mxu0 0
    %668 = vmatprep.subr.bf16.mxu0 0
    %669 = vmatpush1.bf16.xpose.msra.mxu0 0
    %670 = vmatprep.subr.bf16.mxu0 0
    %671 = vmatpush1.bf16.xpose.msra.mxu0 0
    %672 = vmatprep.subr.bf16.mxu0 0
    %673 = vmatpush1.bf16.xpose.msra.mxu0 0
    %674 = vmatprep.subr.bf16.mxu0 0
    %675 = vmatpush1.bf16.xpose.msra.mxu0 0
    %676 = vmatprep.subr.bf16.mxu0 0
    %677 = vmatpush1.bf16.xpose.msra.mxu0 0
    %678 = vmatprep.subr.bf16.mxu0 0
    %679 = vmatpush1.bf16.xpose.msra.mxu0 0
    %680 = vmatprep.subr.bf16.mxu0 0
    %681 = vmatpush1.bf16.xpose.msra.mxu0 0
    %682 = vmatprep.subr.bf16.mxu0 0
    %683 = vmatpush1.bf16.xpose.msra.mxu0 0
    %684 = vmatprep.mubr.bf16.mxu0 0
    %685 = vmatmul.mubr.bf16.gmra.mrb[0].mxu0 %v617
    %v686 = vpop.f32.mrb[0].mxu0
    %v687 = vadd.f32 %v585, %v686
    %v688 = vpop.f32.mrb[0].mxu0
    %v689 = vpop.f32.mrb[0].mxu0
    %v690 = vadd.f32 %v586, %v689
    %v691 = vpop.f32.mrb[0].mxu0
    %692 = vmatprep.mubr.bf16.mxu0 0
    %693 = vmatmul.mubr.bf16.gmra.mrb[0].mxu0 %v620
    %v694 = vpop.f32.mrb[0].mxu0
    %v695 = vadd.f32 %v587, %v694
    %v696 = vpop.f32.mrb[0].mxu0
    %v697 = vpop.f32.mrb[0].mxu0
    %v698 = vadd.f32 %v588, %v697
    %v699 = vpop.f32.mrb[0].mxu0
    %700 = vmatprep.mubr.bf16.mxu0 0
    %701 = vmatmul.mubr.bf16.gmra.mrb[0].mxu0 %v623
    %v702 = vpop.f32.mrb[0].mxu0
    %v703 = vadd.f32 %v589, %v702
    %v704 = vpop.f32.mrb[0].mxu0
    %v705 = vpop.f32.mrb[0].mxu0
    %v706 = vadd.f32 %v590, %v705
    %v707 = vpop.f32.mrb[0].mxu0
    %708 = vmatprep.mubr.bf16.mxu0 0
    %709 = vmatmul.mubr.bf16.gmra.mrb[0].mxu0 %v626
    %v710 = vpop.f32.mrb[0].mxu0
    %v711 = vadd.f32 %v591, %v710
    %v712 = vpop.f32.mrb[0].mxu0
    %v713 = vpop.f32.mrb[0].mxu0
    %v714 = vadd.f32 %v592, %v713
    %v715 = vpop.f32.mrb[0].mxu0
    %716 = vmatprep.mubr.bf16.mxu0 0
    %717 = vmatmul.mubr.bf16.gmra.mrb[0].mxu0 %v629
    %v718 = vpop.f32.mrb[0].mxu0
    %v719 = vadd.f32 %v593, %v718
    %v720 = vpop.f32.mrb[0].mxu0
    %v721 = vpop.f32.mrb[0].mxu0
    %v722 = vadd.f32 %v594, %v721
    %v723 = vpop.f32.mrb[0].mxu0
    %724 = vmatprep.mubr.bf16.mxu0 0
    %725 = vmatmul.mubr.bf16.gmra.mrb[0].mxu0 %v632
    %v726 = vpop.f32.mrb[0].mxu0
    %v727 = vadd.f32 %v595, %v726
    %v728 = vpop.f32.mrb[0].mxu0
    %v729 = vpop.f32.mrb[0].mxu0
    %v730 = vadd.f32 %v596, %v729
    %v731 = vpop.f32.mrb[0].mxu0
    %732 = vdwg.mxu0
    %vm733 = vcmask 785408
    %v734 = vsel %vm733, %v687, -inf
    %735 = vmax.xlane.f32.xlu0 %v734
    %v736 = vpop.xlane.xlu0 %735
    %v737 = vsel %vm733, %v690, -inf
    %738 = vmax.xlane.f32.xlu0 %v737
    %v739 = vpop.xlane.xlu0 %738
    %v740 = vsel %vm733, %v695, -inf
    %741 = vmax.xlane.f32.xlu0 %v740
    %v742 = vpop.xlane.xlu0 %741
    %v743 = vsel %vm733, %v698, -inf
    %744 = vmax.xlane.f32.xlu0 %v743
    %v745 = vpop.xlane.xlu0 %744
    %v746 = vsel %vm733, %v703, -inf
    %747 = vmax.xlane.f32.xlu0 %v746
    %v748 = vpop.xlane.xlu0 %747
    %v749 = vsel %vm733, %v706, -inf
    %750 = vmax.xlane.f32.xlu0 %v749
    %v751 = vpop.xlane.xlu0 %750
    %v752 = vsel %vm733, %v711, -inf
    %753 = vmax.xlane.f32.xlu0 %v752
    %v754 = vpop.xlane.xlu0 %753
    %v755 = vsel %vm733, %v714, -inf
    %756 = vmax.xlane.f32.xlu0 %v755
    %v757 = vpop.xlane.xlu0 %756
    %v758 = vsel %vm733, %v719, -inf
    %759 = vmax.xlane.f32.xlu0 %v758
    %v760 = vpop.xlane.xlu0 %759
    %v761 = vsel %vm733, %v722, -inf
    %762 = vmax.xlane.f32.xlu0 %v761
    %v763 = vpop.xlane.xlu0 %762
    %v764 = vsel %vm733, %v727, -inf
    %765 = vmax.xlane.f32.xlu0 %v764
    %v766 = vpop.xlane.xlu0 %765
    %v767 = vsel %vm733, %v730, -inf
    %768 = vmax.xlane.f32.xlu0 %v767
    %v769 = vpop.xlane.xlu0 %768
    %v770 = vsub.f32 %v687, %v736
    %v771 = vsub.f32 %v690, %v739
    %v772 = vsub.f32 %v695, %v742
    %v773 = vsub.f32 %v698, %v745
    %v774 = vsub.f32 %v703, %v748
    %v775 = vsub.f32 %v706, %v751
    %v776 = vsub.f32 %v711, %v754
    %v777 = vsub.f32 %v714, %v757
    %v778 = vsub.f32 %v719, %v760
    %v779 = vsub.f32 %v722, %v763
    %v780 = vsub.f32 %v727, %v766
    %v781 = vsub.f32 %v730, %v769
    %v782 = vmul.f32 %v770, 1.442695
    %v783 = vpow.pop %v782
    %v784 = vmul.f32 %v771, 1.442695
    %v785 = vpow.pop %v784
    %v786 = vmul.f32 %v772, 1.442695
    %v787 = vpow.pop %v786
    %v788 = vmul.f32 %v773, 1.442695
    %v789 = vpow.pop %v788
    %v790 = vmul.f32 %v774, 1.442695
    %v791 = vpow.pop %v790
    %v792 = vmul.f32 %v775, 1.442695
    %v793 = vpow.pop %v792
    %v794 = vmul.f32 %v776, 1.442695
    %v795 = vpow.pop %v794
    %v796 = vmul.f32 %v777, 1.442695
    %v797 = vpow.pop %v796
    %v798 = vmul.f32 %v778, 1.442695
    %v799 = vpow.pop %v798
    %v800 = vmul.f32 %v779, 1.442695
    %v801 = vpow.pop %v800
    %v802 = vmul.f32 %v780, 1.442695
    %v803 = vpow.pop %v802
    %v804 = vmul.f32 %v781, 1.442695
    %v805 = vpow.pop %v804
    %v806 = vsel %vm733, %v783, 0.0
    %807 = vadd.xlane.f32.xlu0 %v806
    %v808 = vpop.xlane.xlu0 %807
    %v809 = vsel %vm733, %v785, 0.0
    %810 = vadd.xlane.f32.xlu0 %v809
    %v811 = vpop.xlane.xlu0 %810
    %v812 = vsel %vm733, %v787, 0.0
    %813 = vadd.xlane.f32.xlu0 %v812
    %v814 = vpop.xlane.xlu0 %813
    %v815 = vsel %vm733, %v789, 0.0
    %816 = vadd.xlane.f32.xlu0 %v815
    %v817 = vpop.xlane.xlu0 %816
    %v818 = vsel %vm733, %v791, 0.0
    %819 = vadd.xlane.f32.xlu0 %v818
    %v820 = vpop.xlane.xlu0 %819
    %v821 = vsel %vm733, %v793, 0.0
    %822 = vadd.xlane.f32.xlu0 %v821
    %v823 = vpop.xlane.xlu0 %822
    %v824 = vsel %vm733, %v795, 0.0
    %825 = vadd.xlane.f32.xlu0 %v824
    %v826 = vpop.xlane.xlu0 %825
    %v827 = vsel %vm733, %v797, 0.0
    %828 = vadd.xlane.f32.xlu0 %v827
    %v829 = vpop.xlane.xlu0 %828
    %v830 = vsel %vm733, %v799, 0.0
    %831 = vadd.xlane.f32.xlu0 %v830
    %v832 = vpop.xlane.xlu0 %831
    %v833 = vsel %vm733, %v801, 0.0
    %834 = vadd.xlane.f32.xlu0 %v833
    %v835 = vpop.xlane.xlu0 %834
    %v836 = vsel %vm733, %v803, 0.0
    %837 = vadd.xlane.f32.xlu0 %v836
    %v838 = vpop.xlane.xlu0 %837
    %v839 = vsel %vm733, %v805, 0.0
    %840 = vadd.xlane.f32.xlu0 %v839
    %v841 = vpop.xlane.xlu0 %840
    %v842 = vrcp.pop %v808
    %v843 = vrcp.pop %v811
    %v844 = vrcp.pop %v814
    %v845 = vrcp.pop %v817
    %v846 = vrcp.pop %v820
    %v847 = vrcp.pop %v823
    %v848 = vrcp.pop %v826
    %v849 = vrcp.pop %v829
    %v850 = vrcp.pop %v832
    %v851 = vrcp.pop %v835
    %v852 = vrcp.pop %v838
    %v853 = vrcp.pop %v841
    %v854 = vmul.f32 %v783, %v842
    %v855 = vmul.f32 %v785, %v843
    %v856 = vmul.f32 %v787, %v844
    %v857 = vmul.f32 %v789, %v845
    %v858 = vmul.f32 %v791, %v846
    %v859 = vmul.f32 %v793, %v847
    %v860 = vmul.f32 %v795, %v848
    %v861 = vmul.f32 %v797, %v849
    %v862 = vmul.f32 %v799, %v850
    %v863 = vmul.f32 %v801, %v851
    %v864 = vmul.f32 %v803, %v852
    %v865 = vmul.f32 %v805, %v853
    %v866 = vpack.c.bf16 %v855, %v854
    %v867 = vpack.c.bf16 %v857, %v856
    %v868 = vpack.c.bf16 %v859, %v858
    %v869 = vpack.c.bf16 %v861, %v860
    %v870 = vpack.c.bf16 %v863, %v862
    %v871 = vpack.c.bf16 %v865, %v864
    %v873 = vsel %vm733, %v866, 0
    %v876 = vsel %vm733, %v867, 0
    %v879 = vsel %vm733, %v868, 0
    %v882 = vsel %vm733, %v869, 0
    %v885 = vsel %vm733, %v870, 0
    %v888 = vsel %vm733, %v871, 0
    %890 = vmatprep.subr.bf16.mxu0 0
    %891 = vmatpush1.bf16.msra.mxu0 %v609
    %892 = vmatprep.subr.bf16.mxu0 0
    %893 = vmatpush1.bf16.msra.mxu0 %v610
    %894 = vmatprep.subr.bf16.mxu0 0
    %895 = vmatpush1.bf16.msra.mxu0 %v611
    %896 = vmatprep.subr.bf16.mxu0 0
    %897 = vmatpush1.bf16.msra.mxu0 %v612
    %898 = vmatprep.subr.bf16.mxu0 0
    %899 = vmatpush1.bf16.msra.mxu0 %v613
    %900 = vmatprep.subr.bf16.mxu0 0
    %901 = vmatpush1.bf16.msra.mxu0 %v614
    %902 = vmatprep.subr.bf16.mxu0 0
    %903 = vmatpush1.bf16.msra.mxu0 0
    %904 = vmatprep.subr.bf16.mxu0 0
    %905 = vmatpush1.bf16.msra.mxu0 0
    %906 = vmatprep.subr.bf16.mxu0 0
    %907 = vmatpush1.bf16.msra.mxu0 0
    %908 = vmatprep.subr.bf16.mxu0 0
    %909 = vmatpush1.bf16.msra.mxu0 0
    %910 = vmatprep.subr.bf16.mxu0 0
    %911 = vmatpush1.bf16.msra.mxu0 0
    %912 = vmatprep.subr.bf16.mxu0 0
    %913 = vmatpush1.bf16.msra.mxu0 0
    %914 = vmatprep.subr.bf16.mxu0 0
    %915 = vmatpush1.bf16.msra.mxu0 0
    %916 = vmatprep.subr.bf16.mxu0 0
    %917 = vmatpush1.bf16.msra.mxu0 0
    %918 = vmatprep.subr.bf16.mxu0 0
    %919 = vmatpush1.bf16.msra.mxu0 0
    %920 = vmatprep.subr.bf16.mxu0 0
    %921 = vmatpush1.bf16.msra.mxu0 0
    %922 = vmatprep.mubr.bf16.mxu0 0
    %923 = vmatmul.mubr.bf16.gmra.mrb[0].mxu0 %v873
    %v924 = vpop.f32.mrb[0].mxu0
    %v925 = vadd.f32 0.0, %v924
    %v926 = vpop.f32.mrb[0].mxu0
    %v927 = vpop.f32.mrb[0].mxu0
    %v928 = vadd.f32 0.0, %v927
    %v929 = vpop.f32.mrb[0].mxu0
    %930 = vmatprep.mubr.bf16.mxu0 0
    %931 = vmatmul.mubr.bf16.gmra.mrb[0].mxu0 %v876
    %v932 = vpop.f32.mrb[0].mxu0
    %v933 = vadd.f32 0.0, %v932
    %v934 = vpop.f32.mrb[0].mxu0
    %v935 = vpop.f32.mrb[0].mxu0
    %v936 = vadd.f32 0.0, %v935
    %v937 = vpop.f32.mrb[0].mxu0
    %938 = vmatprep.mubr.bf16.mxu0 0
    %939 = vmatmul.mubr.bf16.gmra.mrb[0].mxu0 %v879
    %v940 = vpop.f32.mrb[0].mxu0
    %v941 = vadd.f32 0.0, %v940
    %v942 = vpop.f32.mrb[0].mxu0
    %v943 = vpop.f32.mrb[0].mxu0
    %v944 = vadd.f32 0.0, %v943
    %v945 = vpop.f32.mrb[0].mxu0
    %946 = vmatprep.mubr.bf16.mxu0 0
    %947 = vmatmul.mubr.bf16.gmra.mrb[0].mxu0 %v882
    %v948 = vpop.f32.mrb[0].mxu0
    %v949 = vadd.f32 0.0, %v948
    %v950 = vpop.f32.mrb[0].mxu0
    %v951 = vpop.f32.mrb[0].mxu0
    %v952 = vadd.f32 0.0, %v951
    %v953 = vpop.f32.mrb[0].mxu0
    %954 = vmatprep.mubr.bf16.mxu0 0
    %955 = vmatmul.mubr.bf16.gmra.mrb[0].mxu0 %v885
    %v956 = vpop.f32.mrb[0].mxu0
    %v957 = vadd.f32 0.0, %v956
    %v958 = vpop.f32.mrb[0].mxu0
    %v959 = vpop.f32.mrb[0].mxu0
    %v960 = vadd.f32 0.0, %v959
    %v961 = vpop.f32.mrb[0].mxu0
    %962 = vmatprep.mubr.bf16.mxu0 0
    %963 = vmatmul.mubr.bf16.gmra.mrb[0].mxu0 %v888
    %v964 = vpop.f32.mrb[0].mxu0
    %v965 = vadd.f32 0.0, %v964
    %v966 = vpop.f32.mrb[0].mxu0
    %v967 = vpop.f32.mrb[0].mxu0
    %v968 = vadd.f32 0.0, %v967
    %v969 = vpop.f32.mrb[0].mxu0
    %970 = vdwg.mxu0
    %v971 = vpack.c.bf16 %v928, %v925
    %v972 = vpack.c.bf16 %v936, %v933
    %v973 = vpack.c.bf16 %v944, %v941
    %v974 = vpack.c.bf16 %v952, %v949
    %v975 = vpack.c.bf16 %v960, %v957
    %v976 = vpack.c.bf16 %v968, %v965
    %v977 = vld [vmem:[%s2] sm:$0xf]
    %984 = vrot.lane.b32.xlu0 %v597, 120
    %v985 = vpop.permute.xlu0 %984
    %986 = vrot.lane.b32.xlu0 %v598, 120
    %v987 = vpop.permute.xlu0 %986
    %988 = vrot.lane.b32.xlu0 %v599, 120
    %v989 = vpop.permute.xlu0 %988
    %990 = vrot.lane.b32.xlu0 %v600, 120
    %v991 = vpop.permute.xlu0 %990
    %992 = vrot.lane.b32.xlu0 %v601, 120
    %v993 = vpop.permute.xlu0 %992
    %994 = vrot.lane.b32.xlu0 %v602, 120
    %v995 = vpop.permute.xlu0 %994
    %1002 = vrot.lane.b32.xlu0 %v603, 120
    %v1003 = vpop.permute.xlu0 %1002
    %1004 = vrot.lane.b32.xlu0 %v604, 120
    %v1005 = vpop.permute.xlu0 %1004
    %1006 = vrot.lane.b32.xlu0 %v605, 120
    %v1007 = vpop.permute.xlu0 %1006
    %1008 = vrot.lane.b32.xlu0 %v606, 120
    %v1009 = vpop.permute.xlu0 %1008
    %1010 = vrot.lane.b32.xlu0 %v607, 120
    %v1011 = vpop.permute.xlu0 %1010
    %1012 = vrot.lane.b32.xlu0 %v608, 120
    %v1013 = vpop.permute.xlu0 %1012
    %v1015 = vsel %vm615, %v985, 0
    %v1018 = vsel %vm615, %v987, 0
    %v1021 = vsel %vm615, %v989, 0
    %v1024 = vsel %vm615, %v991, 0
    %v1027 = vsel %vm615, %v993, 0
    %v1030 = vsel %vm615, %v995, 0
    %v1033 = vsel %vm615, %v1003, 0
    %v1036 = vsel %vm615, %v1005, 0
    %v1039 = vsel %vm615, %v1007, 0
    %v1042 = vsel %vm615, %v1009, 0
    %v1045 = vsel %vm615, %v1011, 0
    %v1048 = vsel %vm615, %v1013, 0
    %1050 = vmatprep.subr.bf16.mxu0 0
    %1051 = vmatpush1.bf16.xpose.msra.mxu0 %v1033
    %1052 = vmatprep.subr.bf16.mxu0 0
    %1053 = vmatpush1.bf16.xpose.msra.mxu0 %v1036
    %1054 = vmatprep.subr.bf16.mxu0 0
    %1055 = vmatpush1.bf16.xpose.msra.mxu0 %v1039
    %1056 = vmatprep.subr.bf16.mxu0 0
    %1057 = vmatpush1.bf16.xpose.msra.mxu0 %v1042
    %1058 = vmatprep.subr.bf16.mxu0 0
    %1059 = vmatpush1.bf16.xpose.msra.mxu0 %v1045
    %1060 = vmatprep.subr.bf16.mxu0 0
    %1061 = vmatpush1.bf16.xpose.msra.mxu0 %v1048
    %1062 = vmatprep.subr.bf16.mxu0 0
    %1063 = vmatpush1.bf16.xpose.msra.mxu0 0
    %1064 = vmatprep.subr.bf16.mxu0 0
    %1065 = vmatpush1.bf16.xpose.msra.mxu0 0
    %1066 = vmatprep.subr.bf16.mxu0 0
    %1067 = vmatpush1.bf16.xpose.msra.mxu0 0
    %1068 = vmatprep.subr.bf16.mxu0 0
    %1069 = vmatpush1.bf16.xpose.msra.mxu0 0
    %1070 = vmatprep.subr.bf16.mxu0 0
    %1071 = vmatpush1.bf16.xpose.msra.mxu0 0
    %1072 = vmatprep.subr.bf16.mxu0 0
    %1073 = vmatpush1.bf16.xpose.msra.mxu0 0
    %1074 = vmatprep.subr.bf16.mxu0 0
    %1075 = vmatpush1.bf16.xpose.msra.mxu0 0
    %1076 = vmatprep.subr.bf16.mxu0 0
    %1077 = vmatpush1.bf16.xpose.msra.mxu0 0
    %1078 = vmatprep.subr.bf16.mxu0 0
    %1079 = vmatpush1.bf16.xpose.msra.mxu0 0
    %1080 = vmatprep.subr.bf16.mxu0 0
    %1081 = vmatpush1.bf16.xpose.msra.mxu0 0
    %1082 = vmatprep.mubr.bf16.mxu0 0
    %1083 = vmatmul.mubr.bf16.gmra.mrb[0].mxu0 %v1015
    %v1084 = vpop.f32.mrb[0].mxu0
    %v1085 = vadd.f32 %v585, %v1084
    %v1086 = vpop.f32.mrb[0].mxu0
    %v1087 = vpop.f32.mrb[0].mxu0
    %v1088 = vadd.f32 %v586, %v1087
    %v1089 = vpop.f32.mrb[0].mxu0
    %1090 = vmatprep.mubr.bf16.mxu0 0
    %1091 = vmatmul.mubr.bf16.gmra.mrb[0].mxu0 %v1018
    %v1092 = vpop.f32.mrb[0].mxu0
    %v1093 = vadd.f32 %v587, %v1092
    %v1094 = vpop.f32.mrb[0].mxu0
    %v1095 = vpop.f32.mrb[0].mxu0
    %v1096 = vadd.f32 %v588, %v1095
    %v1097 = vpop.f32.mrb[0].mxu0
    %1098 = vmatprep.mubr.bf16.mxu0 0
    %1099 = vmatmul.mubr.bf16.gmra.mrb[0].mxu0 %v1021
    %v1100 = vpop.f32.mrb[0].mxu0
    %v1101 = vadd.f32 %v589, %v1100
    %v1102 = vpop.f32.mrb[0].mxu0
    %v1103 = vpop.f32.mrb[0].mxu0
    %v1104 = vadd.f32 %v590, %v1103
    %v1105 = vpop.f32.mrb[0].mxu0
    %1106 = vmatprep.mubr.bf16.mxu0 0
    %1107 = vmatmul.mubr.bf16.gmra.mrb[0].mxu0 %v1024
    %v1108 = vpop.f32.mrb[0].mxu0
    %v1109 = vadd.f32 %v591, %v1108
    %v1110 = vpop.f32.mrb[0].mxu0
    %v1111 = vpop.f32.mrb[0].mxu0
    %v1112 = vadd.f32 %v592, %v1111
    %v1113 = vpop.f32.mrb[0].mxu0
    %1114 = vmatprep.mubr.bf16.mxu0 0
    %1115 = vmatmul.mubr.bf16.gmra.mrb[0].mxu0 %v1027
    %v1116 = vpop.f32.mrb[0].mxu0
    %v1117 = vadd.f32 %v593, %v1116
    %v1118 = vpop.f32.mrb[0].mxu0
    %v1119 = vpop.f32.mrb[0].mxu0
    %v1120 = vadd.f32 %v594, %v1119
    %v1121 = vpop.f32.mrb[0].mxu0
    %1122 = vmatprep.mubr.bf16.mxu0 0
    %1123 = vmatmul.mubr.bf16.gmra.mrb[0].mxu0 %v1030
    %v1124 = vpop.f32.mrb[0].mxu0
    %v1125 = vadd.f32 %v595, %v1124
    %v1126 = vpop.f32.mrb[0].mxu0
    %v1127 = vpop.f32.mrb[0].mxu0
    %v1128 = vadd.f32 %v596, %v1127
    %v1129 = vpop.f32.mrb[0].mxu0
    %1130 = vdwg.mxu0
    %v1131 = vsel %vm733, %v1085, -inf
    %1132 = vmax.xlane.f32.xlu0 %v1131
    %v1133 = vpop.xlane.xlu0 %1132
    %v1134 = vsel %vm733, %v1088, -inf
    %1135 = vmax.xlane.f32.xlu0 %v1134
    %v1136 = vpop.xlane.xlu0 %1135
    %v1137 = vsel %vm733, %v1093, -inf
    %1138 = vmax.xlane.f32.xlu0 %v1137
    %v1139 = vpop.xlane.xlu0 %1138
    %v1140 = vsel %vm733, %v1096, -inf
    %1141 = vmax.xlane.f32.xlu0 %v1140
    %v1142 = vpop.xlane.xlu0 %1141
    %v1143 = vsel %vm733, %v1101, -inf
    %1144 = vmax.xlane.f32.xlu0 %v1143
    %v1145 = vpop.xlane.xlu0 %1144
    %v1146 = vsel %vm733, %v1104, -inf
    %1147 = vmax.xlane.f32.xlu0 %v1146
    %v1148 = vpop.xlane.xlu0 %1147
    %v1149 = vsel %vm733, %v1109, -inf
    %1150 = vmax.xlane.f32.xlu0 %v1149
    %v1151 = vpop.xlane.xlu0 %1150
    %v1152 = vsel %vm733, %v1112, -inf
    %1153 = vmax.xlane.f32.xlu0 %v1152
    %v1154 = vpop.xlane.xlu0 %1153
    %v1155 = vsel %vm733, %v1117, -inf
    %1156 = vmax.xlane.f32.xlu0 %v1155
    %v1157 = vpop.xlane.xlu0 %1156
    %v1158 = vsel %vm733, %v1120, -inf
    %1159 = vmax.xlane.f32.xlu0 %v1158
    %v1160 = vpop.xlane.xlu0 %1159
    %v1161 = vsel %vm733, %v1125, -inf
    %1162 = vmax.xlane.f32.xlu0 %v1161
    %v1163 = vpop.xlane.xlu0 %1162
    %v1164 = vsel %vm733, %v1128, -inf
    %1165 = vmax.xlane.f32.xlu0 %v1164
    %v1166 = vpop.xlane.xlu0 %1165
    %v1167 = vsub.f32 %v1085, %v1133
    %v1168 = vsub.f32 %v1088, %v1136
    %v1169 = vsub.f32 %v1093, %v1139
    %v1170 = vsub.f32 %v1096, %v1142
    %v1171 = vsub.f32 %v1101, %v1145
    %v1172 = vsub.f32 %v1104, %v1148
    %v1173 = vsub.f32 %v1109, %v1151
    %v1174 = vsub.f32 %v1112, %v1154
    %v1175 = vsub.f32 %v1117, %v1157
    %v1176 = vsub.f32 %v1120, %v1160
    %v1177 = vsub.f32 %v1125, %v1163
    %v1178 = vsub.f32 %v1128, %v1166
    %v1179 = vmul.f32 %v1167, 1.442695
    %v1180 = vpow.pop %v1179
    %v1181 = vmul.f32 %v1168, 1.442695
    %v1182 = vpow.pop %v1181
    %v1183 = vmul.f32 %v1169, 1.442695
    %v1184 = vpow.pop %v1183
    %v1185 = vmul.f32 %v1170, 1.442695
    %v1186 = vpow.pop %v1185
    %v1187 = vmul.f32 %v1171, 1.442695
    %v1188 = vpow.pop %v1187
    %v1189 = vmul.f32 %v1172, 1.442695
    %v1190 = vpow.pop %v1189
    %v1191 = vmul.f32 %v1173, 1.442695
    %v1192 = vpow.pop %v1191
    %v1193 = vmul.f32 %v1174, 1.442695
    %v1194 = vpow.pop %v1193
    %v1195 = vmul.f32 %v1175, 1.442695
    %v1196 = vpow.pop %v1195
    %v1197 = vmul.f32 %v1176, 1.442695
    %v1198 = vpow.pop %v1197
    %v1199 = vmul.f32 %v1177, 1.442695
    %v1200 = vpow.pop %v1199
    %v1201 = vmul.f32 %v1178, 1.442695
    %v1202 = vpow.pop %v1201
    %v1203 = vsel %vm733, %v1180, 0.0
    %1204 = vadd.xlane.f32.xlu0 %v1203
    %v1205 = vpop.xlane.xlu0 %1204
    %v1206 = vsel %vm733, %v1182, 0.0
    %1207 = vadd.xlane.f32.xlu0 %v1206
    %v1208 = vpop.xlane.xlu0 %1207
    %v1209 = vsel %vm733, %v1184, 0.0
    %1210 = vadd.xlane.f32.xlu0 %v1209
    %v1211 = vpop.xlane.xlu0 %1210
    %v1212 = vsel %vm733, %v1186, 0.0
    %1213 = vadd.xlane.f32.xlu0 %v1212
    %v1214 = vpop.xlane.xlu0 %1213
    %v1215 = vsel %vm733, %v1188, 0.0
    %1216 = vadd.xlane.f32.xlu0 %v1215
    %v1217 = vpop.xlane.xlu0 %1216
    %v1218 = vsel %vm733, %v1190, 0.0
    %1219 = vadd.xlane.f32.xlu0 %v1218
    %v1220 = vpop.xlane.xlu0 %1219
    %v1221 = vsel %vm733, %v1192, 0.0
    %1222 = vadd.xlane.f32.xlu0 %v1221
    %v1223 = vpop.xlane.xlu0 %1222
    %v1224 = vsel %vm733, %v1194, 0.0
    %1225 = vadd.xlane.f32.xlu0 %v1224
    %v1226 = vpop.xlane.xlu0 %1225
    %v1227 = vsel %vm733, %v1196, 0.0
    %1228 = vadd.xlane.f32.xlu0 %v1227
    %v1229 = vpop.xlane.xlu0 %1228
    %v1230 = vsel %vm733, %v1198, 0.0
    %1231 = vadd.xlane.f32.xlu0 %v1230
    %v1232 = vpop.xlane.xlu0 %1231
    %v1233 = vsel %vm733, %v1200, 0.0
    %1234 = vadd.xlane.f32.xlu0 %v1233
    %v1235 = vpop.xlane.xlu0 %1234
    %v1236 = vsel %vm733, %v1202, 0.0
    %1237 = vadd.xlane.f32.xlu0 %v1236
    %v1238 = vpop.xlane.xlu0 %1237
    %v1239 = vrcp.pop %v1205
    %v1240 = vrcp.pop %v1208
    %v1241 = vrcp.pop %v1211
    %v1242 = vrcp.pop %v1214
    %v1243 = vrcp.pop %v1217
    %v1244 = vrcp.pop %v1220
    %v1245 = vrcp.pop %v1223
    %v1246 = vrcp.pop %v1226
    %v1247 = vrcp.pop %v1229
    %v1248 = vrcp.pop %v1232
    %v1249 = vrcp.pop %v1235
    %v1250 = vrcp.pop %v1238
    %v1251 = vmul.f32 %v1180, %v1239
    %v1252 = vmul.f32 %v1182, %v1240
    %v1253 = vmul.f32 %v1184, %v1241
    %v1254 = vmul.f32 %v1186, %v1242
    %v1255 = vmul.f32 %v1188, %v1243
    %v1256 = vmul.f32 %v1190, %v1244
    %v1257 = vmul.f32 %v1192, %v1245
    %v1258 = vmul.f32 %v1194, %v1246
    %v1259 = vmul.f32 %v1196, %v1247
    %v1260 = vmul.f32 %v1198, %v1248
    %v1261 = vmul.f32 %v1200, %v1249
    %v1262 = vmul.f32 %v1202, %v1250
    %v1263 = vpack.c.bf16 %v1252, %v1251
    %v1264 = vpack.c.bf16 %v1254, %v1253
    %v1265 = vpack.c.bf16 %v1256, %v1255
    %v1266 = vpack.c.bf16 %v1258, %v1257
    %v1267 = vpack.c.bf16 %v1260, %v1259
    %v1268 = vpack.c.bf16 %v1262, %v1261
    %1275 = vrot.lane.b32.xlu0 %v609, 120
    %v1276 = vpop.permute.xlu0 %1275
    %1277 = vrot.lane.b32.xlu0 %v610, 120
    %v1278 = vpop.permute.xlu0 %1277
    %1279 = vrot.lane.b32.xlu0 %v611, 120
    %v1280 = vpop.permute.xlu0 %1279
    %1281 = vrot.lane.b32.xlu0 %v612, 120
    %v1282 = vpop.permute.xlu0 %1281
    %1283 = vrot.lane.b32.xlu0 %v613, 120
    %v1284 = vpop.permute.xlu0 %1283
    %1285 = vrot.lane.b32.xlu0 %v614, 120
    %v1286 = vpop.permute.xlu0 %1285
    %v1294 = vsel %vm733, %v1263, 0
    %v1297 = vsel %vm733, %v1264, 0
    %v1300 = vsel %vm733, %v1265, 0
    %v1303 = vsel %vm733, %v1266, 0
    %v1306 = vsel %vm733, %v1267, 0
    %v1309 = vsel %vm733, %v1268, 0
    %1311 = vmatprep.subr.bf16.mxu0 0
    %1312 = vmatpush1.bf16.msra.mxu0 %v1276
    %1313 = vmatprep.subr.bf16.mxu0 0
    %1314 = vmatpush1.bf16.msra.mxu0 %v1278
    %1315 = vmatprep.subr.bf16.mxu0 0
    %1316 = vmatpush1.bf16.msra.mxu0 %v1280
    %1317 = vmatprep.subr.bf16.mxu0 0
    %1318 = vmatpush1.bf16.msra.mxu0 %v1282
    %1319 = vmatprep.subr.bf16.mxu0 0
    %1320 = vmatpush1.bf16.msra.mxu0 %v1284
    %1321 = vmatprep.subr.bf16.mxu0 0
    %1322 = vmatpush1.bf16.msra.mxu0 %v1286
    %1323 = vmatprep.subr.bf16.mxu0 0
    %1324 = vmatpush1.bf16.msra.mxu0 0
    %1325 = vmatprep.subr.bf16.mxu0 0
    %1326 = vmatpush1.bf16.msra.mxu0 0
    %1327 = vmatprep.subr.bf16.mxu0 0
    %1328 = vmatpush1.bf16.msra.mxu0 0
    %1329 = vmatprep.subr.bf16.mxu0 0
    %1330 = vmatpush1.bf16.msra.mxu0 0
    %1331 = vmatprep.subr.bf16.mxu0 0
    %1332 = vmatpush1.bf16.msra.mxu0 0
    %1333 = vmatprep.subr.bf16.mxu0 0
    %1334 = vmatpush1.bf16.msra.mxu0 0
    %1335 = vmatprep.subr.bf16.mxu0 0
    %1336 = vmatpush1.bf16.msra.mxu0 0
    %1337 = vmatprep.subr.bf16.mxu0 0
    %1338 = vmatpush1.bf16.msra.mxu0 0
    %1339 = vmatprep.subr.bf16.mxu0 0
    %1340 = vmatpush1.bf16.msra.mxu0 0
    %1341 = vmatprep.subr.bf16.mxu0 0
    %1342 = vmatpush1.bf16.msra.mxu0 0
    %1343 = vmatprep.mubr.bf16.mxu0 0
    %1344 = vmatmul.mubr.bf16.gmra.mrb[0].mxu0 %v1294
    %v1345 = vpop.f32.mrb[0].mxu0
    %v1346 = vadd.f32 0.0, %v1345
    %v1347 = vpop.f32.mrb[0].mxu0
    %v1348 = vpop.f32.mrb[0].mxu0
    %v1349 = vadd.f32 0.0, %v1348
    %v1350 = vpop.f32.mrb[0].mxu0
    %1351 = vmatprep.mubr.bf16.mxu0 0
    %1352 = vmatmul.mubr.bf16.gmra.mrb[0].mxu0 %v1297
    %v1353 = vpop.f32.mrb[0].mxu0
    %v1354 = vadd.f32 0.0, %v1353
    %v1355 = vpop.f32.mrb[0].mxu0
    %v1356 = vpop.f32.mrb[0].mxu0
    %v1357 = vadd.f32 0.0, %v1356
    %v1358 = vpop.f32.mrb[0].mxu0
    %1359 = vmatprep.mubr.bf16.mxu0 0
    %1360 = vmatmul.mubr.bf16.gmra.mrb[0].mxu0 %v1300
    %v1361 = vpop.f32.mrb[0].mxu0
    %v1362 = vadd.f32 0.0, %v1361
    %v1363 = vpop.f32.mrb[0].mxu0
    %v1364 = vpop.f32.mrb[0].mxu0
    %v1365 = vadd.f32 0.0, %v1364
    %v1366 = vpop.f32.mrb[0].mxu0
    %1367 = vmatprep.mubr.bf16.mxu0 0
    %1368 = vmatmul.mubr.bf16.gmra.mrb[0].mxu0 %v1303
    %v1369 = vpop.f32.mrb[0].mxu0
    %v1370 = vadd.f32 0.0, %v1369
    %v1371 = vpop.f32.mrb[0].mxu0
    %v1372 = vpop.f32.mrb[0].mxu0
    %v1373 = vadd.f32 0.0, %v1372
    %v1374 = vpop.f32.mrb[0].mxu0
    %1375 = vmatprep.mubr.bf16.mxu0 0
    %1376 = vmatmul.mubr.bf16.gmra.mrb[0].mxu0 %v1306
    %v1377 = vpop.f32.mrb[0].mxu0
    %v1378 = vadd.f32 0.0, %v1377
    %v1379 = vpop.f32.mrb[0].mxu0
    %v1380 = vpop.f32.mrb[0].mxu0
    %v1381 = vadd.f32 0.0, %v1380
    %v1382 = vpop.f32.mrb[0].mxu0
    %1383 = vmatprep.mubr.bf16.mxu0 0
    %1384 = vmatmul.mubr.bf16.gmra.mrb[0].mxu0 %v1309
    %v1385 = vpop.f32.mrb[0].mxu0
    %v1386 = vadd.f32 0.0, %v1385
    %v1387 = vpop.f32.mrb[0].mxu0
    %v1388 = vpop.f32.mrb[0].mxu0
    %v1389 = vadd.f32 0.0, %v1388
    %v1390 = vpop.f32.mrb[0].mxu0
    %1391 = vdwg.mxu0
    %v1392 = vpack.c.bf16 %v1349, %v1346
    %v1393 = vpack.c.bf16 %v1357, %v1354
    %v1394 = vpack.c.bf16 %v1365, %v1362
    %v1395 = vpack.c.bf16 %v1373, %v1370
    %v1396 = vpack.c.bf16 %v1381, %v1378
    %v1397 = vpack.c.bf16 %v1389, %v1386
    %s1398 = scalar_lea.vmem %s2, 4
    %v1399 = vld [vmem:[%s1398] sm:$0xf]
    %v1401 = vsel %vm615, %v1392, 0
    %v1404 = vsel %vm615, %v1393, 0
    %v1407 = vsel %vm615, %v1394, 0
    %v1410 = vsel %vm615, %v1395, 0
    %v1413 = vsel %vm615, %v1396, 0
    %v1416 = vsel %vm615, %v1397, 0
    %vm1418 = vcmask 1043456
    %v1420 = vsel %vm1418, %v1399, 0
    %1422 = vmatprep.subr.bf16.mxu0 0
    %1423 = vmatpush1.bf16.msra.mxu0 %v1420
    %1424 = vmatprep.subr.bf16.mxu0 0
    %1425 = vmatpush1.bf16.msra.mxu0 0
    %1426 = vmatprep.subr.bf16.mxu0 0
    %1427 = vmatpush1.bf16.msra.mxu0 0
    %1428 = vmatprep.subr.bf16.mxu0 0
    %1429 = vmatpush1.bf16.msra.mxu0 0
    %1430 = vmatprep.subr.bf16.mxu0 0
    %1431 = vmatpush1.bf16.msra.mxu0 0
    %1432 = vmatprep.subr.bf16.mxu0 0
    %1433 = vmatpush1.bf16.msra.mxu0 0
    %1434 = vmatprep.subr.bf16.mxu0 0
    %1435 = vmatpush1.bf16.msra.mxu0 0
    %1436 = vmatprep.subr.bf16.mxu0 0
    %1437 = vmatpush1.bf16.msra.mxu0 0
    %1438 = vmatprep.subr.bf16.mxu0 0
    %1439 = vmatpush1.bf16.msra.mxu0 0
    %1440 = vmatprep.subr.bf16.mxu0 0
    %1441 = vmatpush1.bf16.msra.mxu0 0
    %1442 = vmatprep.subr.bf16.mxu0 0
    %1443 = vmatpush1.bf16.msra.mxu0 0
    %1444 = vmatprep.subr.bf16.mxu0 0
    %1445 = vmatpush1.bf16.msra.mxu0 0
    %1446 = vmatprep.subr.bf16.mxu0 0
    %1447 = vmatpush1.bf16.msra.mxu0 0
    %1448 = vmatprep.subr.bf16.mxu0 0
    %1449 = vmatpush1.bf16.msra.mxu0 0
    %1450 = vmatprep.subr.bf16.mxu0 0
    %1451 = vmatpush1.bf16.msra.mxu0 0
    %1452 = vmatprep.subr.bf16.mxu0 0
    %1453 = vmatpush1.bf16.msra.mxu0 0
    %1454 = vmatprep.mubr.bf16.mxu0 0
    %1455 = vmatmul.mubr.bf16.gmra.mrb[0].mxu0 %v1401
    %v1456 = vpop.f32.mrb[0].mxu0
    %v1457 = vadd.f32 0.0, %v1456
    %v1458 = vpop.f32.mrb[0].mxu0
    %v1459 = vpop.f32.mrb[0].mxu0
    %v1460 = vadd.f32 0.0, %v1459
    %v1461 = vpop.f32.mrb[0].mxu0
    %1462 = vmatprep.mubr.bf16.mxu0 0
    %1463 = vmatmul.mubr.bf16.gmra.mrb[0].mxu0 %v1404
    %v1464 = vpop.f32.mrb[0].mxu0
    %v1465 = vadd.f32 0.0, %v1464
    %v1466 = vpop.f32.mrb[0].mxu0
    %v1467 = vpop.f32.mrb[0].mxu0
    %v1468 = vadd.f32 0.0, %v1467
    %v1469 = vpop.f32.mrb[0].mxu0
    %1470 = vmatprep.mubr.bf16.mxu0 0
    %1471 = vmatmul.mubr.bf16.gmra.mrb[0].mxu0 %v1407
    %v1472 = vpop.f32.mrb[0].mxu0
    %v1473 = vadd.f32 0.0, %v1472
    %v1474 = vpop.f32.mrb[0].mxu0
    %v1475 = vpop.f32.mrb[0].mxu0
    %v1476 = vadd.f32 0.0, %v1475
    %v1477 = vpop.f32.mrb[0].mxu0
    %1478 = vmatprep.mubr.bf16.mxu0 0
    %1479 = vmatmul.mubr.bf16.gmra.mrb[0].mxu0 %v1410
    %v1480 = vpop.f32.mrb[0].mxu0
    %v1481 = vadd.f32 0.0, %v1480
    %v1482 = vpop.f32.mrb[0].mxu0
    %v1483 = vpop.f32.mrb[0].mxu0
    %v1484 = vadd.f32 0.0, %v1483
    %v1485 = vpop.f32.mrb[0].mxu0
    %1486 = vmatprep.mubr.bf16.mxu0 0
    %1487 = vmatmul.mubr.bf16.gmra.mrb[0].mxu0 %v1413
    %v1488 = vpop.f32.mrb[0].mxu0
    %v1489 = vadd.f32 0.0, %v1488
    %v1490 = vpop.f32.mrb[0].mxu0
    %v1491 = vpop.f32.mrb[0].mxu0
    %v1492 = vadd.f32 0.0, %v1491
    %v1493 = vpop.f32.mrb[0].mxu0
    %1494 = vmatprep.mubr.bf16.mxu0 0
    %1495 = vmatmul.mubr.bf16.gmra.mrb[0].mxu0 %v1416
    %v1496 = vpop.f32.mrb[0].mxu0
    %v1497 = vadd.f32 0.0, %v1496
    %v1498 = vpop.f32.mrb[0].mxu0
    %v1499 = vpop.f32.mrb[0].mxu0
    %v1500 = vadd.f32 0.0, %v1499
    %v1501 = vpop.f32.mrb[0].mxu0
    %1502 = vdwg.mxu0
    %v1504 = vsel %vm615, %v971, 0
    %v1507 = vsel %vm615, %v972, 0
    %v1510 = vsel %vm615, %v973, 0
    %v1513 = vsel %vm615, %v974, 0
    %v1516 = vsel %vm615, %v975, 0
    %v1519 = vsel %vm615, %v976, 0
    %v1522 = vsel %vm1418, %v977, 0
    %1524 = vmatprep.subr.bf16.mxu0 0
    %1525 = vmatpush1.bf16.msra.mxu0 %v1522
    %1526 = vmatprep.subr.bf16.mxu0 0
    %1527 = vmatpush1.bf16.msra.mxu0 0
    %1528 = vmatprep.subr.bf16.mxu0 0
    %1529 = vmatpush1.bf16.msra.mxu0 0
    %1530 = vmatprep.subr.bf16.mxu0 0
    %1531 = vmatpush1.bf16.msra.mxu0 0
    %1532 = vmatprep.subr.bf16.mxu0 0
    %1533 = vmatpush1.bf16.msra.mxu0 0
    %1534 = vmatprep.subr.bf16.mxu0 0
    %1535 = vmatpush1.bf16.msra.mxu0 0
    %1536 = vmatprep.subr.bf16.mxu0 0
    %1537 = vmatpush1.bf16.msra.mxu0 0
    %1538 = vmatprep.subr.bf16.mxu0 0
    %1539 = vmatpush1.bf16.msra.mxu0 0
    %1540 = vmatprep.subr.bf16.mxu0 0
    %1541 = vmatpush1.bf16.msra.mxu0 0
    %1542 = vmatprep.subr.bf16.mxu0 0
    %1543 = vmatpush1.bf16.msra.mxu0 0
    %1544 = vmatprep.subr.bf16.mxu0 0
    %1545 = vmatpush1.bf16.msra.mxu0 0
    %1546 = vmatprep.subr.bf16.mxu0 0
    %1547 = vmatpush1.bf16.msra.mxu0 0
    %1548 = vmatprep.subr.bf16.mxu0 0
    %1549 = vmatpush1.bf16.msra.mxu0 0
    %1550 = vmatprep.subr.bf16.mxu0 0
    %1551 = vmatpush1.bf16.msra.mxu0 0
    %1552 = vmatprep.subr.bf16.mxu0 0
    %1553 = vmatpush1.bf16.msra.mxu0 0
    %1554 = vmatprep.subr.bf16.mxu0 0
    %1555 = vmatpush1.bf16.msra.mxu0 0
    %1556 = vmatprep.mubr.bf16.mxu0 0
    %1557 = vmatmul.mubr.bf16.gmra.mrb[0].mxu0 %v1504
    %v1558 = vpop.f32.mrb[0].mxu0
    %v1559 = vadd.f32 %v1457, %v1558
    %v1560 = vpop.f32.mrb[0].mxu0
    %v1561 = vpop.f32.mrb[0].mxu0
    %v1562 = vadd.f32 %v1460, %v1561
    %v1563 = vpop.f32.mrb[0].mxu0
    %1564 = vmatprep.mubr.bf16.mxu0 0
    %1565 = vmatmul.mubr.bf16.gmra.mrb[0].mxu0 %v1507
    %v1566 = vpop.f32.mrb[0].mxu0
    %v1567 = vadd.f32 %v1465, %v1566
    %v1568 = vpop.f32.mrb[0].mxu0
    %v1569 = vpop.f32.mrb[0].mxu0
    %v1570 = vadd.f32 %v1468, %v1569
    %v1571 = vpop.f32.mrb[0].mxu0
    %1572 = vmatprep.mubr.bf16.mxu0 0
    %1573 = vmatmul.mubr.bf16.gmra.mrb[0].mxu0 %v1510
    %v1574 = vpop.f32.mrb[0].mxu0
    %v1575 = vadd.f32 %v1473, %v1574
    %v1576 = vpop.f32.mrb[0].mxu0
    %v1577 = vpop.f32.mrb[0].mxu0
    %v1578 = vadd.f32 %v1476, %v1577
    %v1579 = vpop.f32.mrb[0].mxu0
    %1580 = vmatprep.mubr.bf16.mxu0 0
    %1581 = vmatmul.mubr.bf16.gmra.mrb[0].mxu0 %v1513
    %v1582 = vpop.f32.mrb[0].mxu0
    %v1583 = vadd.f32 %v1481, %v1582
    %v1584 = vpop.f32.mrb[0].mxu0
    %v1585 = vpop.f32.mrb[0].mxu0
    %v1586 = vadd.f32 %v1484, %v1585
    %v1587 = vpop.f32.mrb[0].mxu0
    %1588 = vmatprep.mubr.bf16.mxu0 0
    %1589 = vmatmul.mubr.bf16.gmra.mrb[0].mxu0 %v1516
    %v1590 = vpop.f32.mrb[0].mxu0
    %v1591 = vadd.f32 %v1489, %v1590
    %v1592 = vpop.f32.mrb[0].mxu0
    %v1593 = vpop.f32.mrb[0].mxu0
    %v1594 = vadd.f32 %v1492, %v1593
    %v1595 = vpop.f32.mrb[0].mxu0
    %1596 = vmatprep.mubr.bf16.mxu0 0
    %1597 = vmatmul.mubr.bf16.gmra.mrb[0].mxu0 %v1519
    %v1598 = vpop.f32.mrb[0].mxu0
    %v1599 = vadd.f32 %v1497, %v1598
    %v1600 = vpop.f32.mrb[0].mxu0
    %v1601 = vpop.f32.mrb[0].mxu0
    %v1602 = vadd.f32 %v1500, %v1601
    %v1603 = vpop.f32.mrb[0].mxu0
    %1604 = vdwg.mxu0
    %1605 = vrot.lane.b32.xlu0 %v597, 112
    %v1606 = vpop.permute.xlu0 %1605
    %1607 = vrot.lane.b32.xlu0 %v598, 112
    %v1608 = vpop.permute.xlu0 %1607
    %1609 = vrot.lane.b32.xlu0 %v599, 112
    %v1610 = vpop.permute.xlu0 %1609
    %1611 = vrot.lane.b32.xlu0 %v600, 112
    %v1612 = vpop.permute.xlu0 %1611
    %1613 = vrot.lane.b32.xlu0 %v601, 112
    %v1614 = vpop.permute.xlu0 %1613
    %1615 = vrot.lane.b32.xlu0 %v602, 112
    %v1616 = vpop.permute.xlu0 %1615
    %1617 = vrot.lane.b32.xlu0 %v603, 112
    %v1618 = vpop.permute.xlu0 %1617
    %1619 = vrot.lane.b32.xlu0 %v604, 112
    %v1620 = vpop.permute.xlu0 %1619
    %1621 = vrot.lane.b32.xlu0 %v605, 112
    %v1622 = vpop.permute.xlu0 %1621
    %1623 = vrot.lane.b32.xlu0 %v606, 112
    %v1624 = vpop.permute.xlu0 %1623
    %1625 = vrot.lane.b32.xlu0 %v607, 112
    %v1626 = vpop.permute.xlu0 %1625
    %1627 = vrot.lane.b32.xlu0 %v608, 112
    %v1628 = vpop.permute.xlu0 %1627
    %v1630 = vsel %vm615, %v1606, 0
    %v1633 = vsel %vm615, %v1608, 0
    %v1636 = vsel %vm615, %v1610, 0
    %v1639 = vsel %vm615, %v1612, 0
    %v1642 = vsel %vm615, %v1614, 0
    %v1645 = vsel %vm615, %v1616, 0
    %v1648 = vsel %vm615, %v1618, 0
    %v1651 = vsel %vm615, %v1620, 0
    %v1654 = vsel %vm615, %v1622, 0
    %v1657 = vsel %vm615, %v1624, 0
    %v1660 = vsel %vm615, %v1626, 0
    %v1663 = vsel %vm615, %v1628, 0
    %1665 = vmatprep.subr.bf16.mxu0 0
    %1666 = vmatpush1.bf16.xpose.msra.mxu0 %v1648
    %1667 = vmatprep.subr.bf16.mxu0 0
    %1668 = vmatpush1.bf16.xpose.msra.mxu0 %v1651
    %1669 = vmatprep.subr.bf16.mxu0 0
    %1670 = vmatpush1.bf16.xpose.msra.mxu0 %v1654
    %1671 = vmatprep.subr.bf16.mxu0 0
    %1672 = vmatpush1.bf16.xpose.msra.mxu0 %v1657
    %1673 = vmatprep.subr.bf16.mxu0 0
    %1674 = vmatpush1.bf16.xpose.msra.mxu0 %v1660
    %1675 = vmatprep.subr.bf16.mxu0 0
    %1676 = vmatpush1.bf16.xpose.msra.mxu0 %v1663
    %1677 = vmatprep.subr.bf16.mxu0 0
    %1678 = vmatpush1.bf16.xpose.msra.mxu0 0
    %1679 = vmatprep.subr.bf16.mxu0 0
    %1680 = vmatpush1.bf16.xpose.msra.mxu0 0
    %1681 = vmatprep.subr.bf16.mxu0 0
    %1682 = vmatpush1.bf16.xpose.msra.mxu0 0
    %1683 = vmatprep.subr.bf16.mxu0 0
    %1684 = vmatpush1.bf16.xpose.msra.mxu0 0
    %1685 = vmatprep.subr.bf16.mxu0 0
    %1686 = vmatpush1.bf16.xpose.msra.mxu0 0
    %1687 = vmatprep.subr.bf16.mxu0 0
    %1688 = vmatpush1.bf16.xpose.msra.mxu0 0
    %1689 = vmatprep.subr.bf16.mxu0 0
    %1690 = vmatpush1.bf16.xpose.msra.mxu0 0
    %1691 = vmatprep.subr.bf16.mxu0 0
    %1692 = vmatpush1.bf16.xpose.msra.mxu0 0
    %1693 = vmatprep.subr.bf16.mxu0 0
    %1694 = vmatpush1.bf16.xpose.msra.mxu0 0
    %1695 = vmatprep.subr.bf16.mxu0 0
    %1696 = vmatpush1.bf16.xpose.msra.mxu0 0
    %1697 = vmatprep.mubr.bf16.mxu0 0
    %1698 = vmatmul.mubr.bf16.gmra.mrb[0].mxu0 %v1630
    %v1699 = vpop.f32.mrb[0].mxu0
    %v1700 = vadd.f32 %v585, %v1699
    %v1701 = vpop.f32.mrb[0].mxu0
    %v1702 = vpop.f32.mrb[0].mxu0
    %v1703 = vadd.f32 %v586, %v1702
    %v1704 = vpop.f32.mrb[0].mxu0
    %1705 = vmatprep.mubr.bf16.mxu0 0
    %1706 = vmatmul.mubr.bf16.gmra.mrb[0].mxu0 %v1633
    %v1707 = vpop.f32.mrb[0].mxu0
    %v1708 = vadd.f32 %v587, %v1707
    %v1709 = vpop.f32.mrb[0].mxu0
    %v1710 = vpop.f32.mrb[0].mxu0
    %v1711 = vadd.f32 %v588, %v1710
    %v1712 = vpop.f32.mrb[0].mxu0
    %1713 = vmatprep.mubr.bf16.mxu0 0
    %1714 = vmatmul.mubr.bf16.gmra.mrb[0].mxu0 %v1636
    %v1715 = vpop.f32.mrb[0].mxu0
    %v1716 = vadd.f32 %v589, %v1715
    %v1717 = vpop.f32.mrb[0].mxu0
    %v1718 = vpop.f32.mrb[0].mxu0
    %v1719 = vadd.f32 %v590, %v1718
    %v1720 = vpop.f32.mrb[0].mxu0
    %1721 = vmatprep.mubr.bf16.mxu0 0
    %1722 = vmatmul.mubr.bf16.gmra.mrb[0].mxu0 %v1639
    %v1723 = vpop.f32.mrb[0].mxu0
    %v1724 = vadd.f32 %v591, %v1723
    %v1725 = vpop.f32.mrb[0].mxu0
    %v1726 = vpop.f32.mrb[0].mxu0
    %v1727 = vadd.f32 %v592, %v1726
    %v1728 = vpop.f32.mrb[0].mxu0
    %1729 = vmatprep.mubr.bf16.mxu0 0
    %1730 = vmatmul.mubr.bf16.gmra.mrb[0].mxu0 %v1642
    %v1731 = vpop.f32.mrb[0].mxu0
    %v1732 = vadd.f32 %v593, %v1731
    %v1733 = vpop.f32.mrb[0].mxu0
    %v1734 = vpop.f32.mrb[0].mxu0
    %v1735 = vadd.f32 %v594, %v1734
    %v1736 = vpop.f32.mrb[0].mxu0
    %1737 = vmatprep.mubr.bf16.mxu0 0
    %1738 = vmatmul.mubr.bf16.gmra.mrb[0].mxu0 %v1645
    %v1739 = vpop.f32.mrb[0].mxu0
    %v1740 = vadd.f32 %v595, %v1739
    %v1741 = vpop.f32.mrb[0].mxu0
    %v1742 = vpop.f32.mrb[0].mxu0
    %v1743 = vadd.f32 %v596, %v1742
    %v1744 = vpop.f32.mrb[0].mxu0
    %1745 = vdwg.mxu0
    %v1746 = vsel %vm733, %v1700, -inf
    %1747 = vmax.xlane.f32.xlu0 %v1746
    %v1748 = vpop.xlane.xlu0 %1747
    %v1749 = vsel %vm733, %v1703, -inf
    %1750 = vmax.xlane.f32.xlu0 %v1749
    %v1751 = vpop.xlane.xlu0 %1750
    %v1752 = vsel %vm733, %v1708, -inf
    %1753 = vmax.xlane.f32.xlu0 %v1752
    %v1754 = vpop.xlane.xlu0 %1753
    %v1755 = vsel %vm733, %v1711, -inf
    %1756 = vmax.xlane.f32.xlu0 %v1755
    %v1757 = vpop.xlane.xlu0 %1756
    %v1758 = vsel %vm733, %v1716, -inf
    %1759 = vmax.xlane.f32.xlu0 %v1758
    %v1760 = vpop.xlane.xlu0 %1759
    %v1761 = vsel %vm733, %v1719, -inf
    %1762 = vmax.xlane.f32.xlu0 %v1761
    %v1763 = vpop.xlane.xlu0 %1762
    %v1764 = vsel %vm733, %v1724, -inf
    %1765 = vmax.xlane.f32.xlu0 %v1764
    %v1766 = vpop.xlane.xlu0 %1765
    %v1767 = vsel %vm733, %v1727, -inf
    %1768 = vmax.xlane.f32.xlu0 %v1767
    %v1769 = vpop.xlane.xlu0 %1768
    %v1770 = vsel %vm733, %v1732, -inf
    %1771 = vmax.xlane.f32.xlu0 %v1770
    %v1772 = vpop.xlane.xlu0 %1771
    %v1773 = vsel %vm733, %v1735, -inf
    %1774 = vmax.xlane.f32.xlu0 %v1773
    %v1775 = vpop.xlane.xlu0 %1774
    %v1776 = vsel %vm733, %v1740, -inf
    %1777 = vmax.xlane.f32.xlu0 %v1776
    %v1778 = vpop.xlane.xlu0 %1777
    %v1779 = vsel %vm733, %v1743, -inf
    %1780 = vmax.xlane.f32.xlu0 %v1779
    %v1781 = vpop.xlane.xlu0 %1780
    %v1782 = vsub.f32 %v1700, %v1748
    %v1783 = vsub.f32 %v1703, %v1751
    %v1784 = vsub.f32 %v1708, %v1754
    %v1785 = vsub.f32 %v1711, %v1757
    %v1786 = vsub.f32 %v1716, %v1760
    %v1787 = vsub.f32 %v1719, %v1763
    %v1788 = vsub.f32 %v1724, %v1766
    %v1789 = vsub.f32 %v1727, %v1769
    %v1790 = vsub.f32 %v1732, %v1772
    %v1791 = vsub.f32 %v1735, %v1775
    %v1792 = vsub.f32 %v1740, %v1778
    %v1793 = vsub.f32 %v1743, %v1781
    %v1794 = vmul.f32 %v1782, 1.442695
    %v1795 = vpow.pop %v1794
    %v1796 = vmul.f32 %v1783, 1.442695
    %v1797 = vpow.pop %v1796
    %v1798 = vmul.f32 %v1784, 1.442695
    %v1799 = vpow.pop %v1798
    %v1800 = vmul.f32 %v1785, 1.442695
    %v1801 = vpow.pop %v1800
    %v1802 = vmul.f32 %v1786, 1.442695
    %v1803 = vpow.pop %v1802
    %v1804 = vmul.f32 %v1787, 1.442695
    %v1805 = vpow.pop %v1804
    %v1806 = vmul.f32 %v1788, 1.442695
    %v1807 = vpow.pop %v1806
    %v1808 = vmul.f32 %v1789, 1.442695
    %v1809 = vpow.pop %v1808
    %v1810 = vmul.f32 %v1790, 1.442695
    %v1811 = vpow.pop %v1810
    %v1812 = vmul.f32 %v1791, 1.442695
    %v1813 = vpow.pop %v1812
    %v1814 = vmul.f32 %v1792, 1.442695
    %v1815 = vpow.pop %v1814
    %v1816 = vmul.f32 %v1793, 1.442695
    %v1817 = vpow.pop %v1816
    %v1818 = vsel %vm733, %v1795, 0.0
    %1819 = vadd.xlane.f32.xlu0 %v1818
    %v1820 = vpop.xlane.xlu0 %1819
    %v1821 = vsel %vm733, %v1797, 0.0
    %1822 = vadd.xlane.f32.xlu0 %v1821
    %v1823 = vpop.xlane.xlu0 %1822
    %v1824 = vsel %vm733, %v1799, 0.0
    %1825 = vadd.xlane.f32.xlu0 %v1824
    %v1826 = vpop.xlane.xlu0 %1825
    %v1827 = vsel %vm733, %v1801, 0.0
    %1828 = vadd.xlane.f32.xlu0 %v1827
    %v1829 = vpop.xlane.xlu0 %1828
    %v1830 = vsel %vm733, %v1803, 0.0
    %1831 = vadd.xlane.f32.xlu0 %v1830
    %v1832 = vpop.xlane.xlu0 %1831
    %v1833 = vsel %vm733, %v1805, 0.0
    %1834 = vadd.xlane.f32.xlu0 %v1833
    %v1835 = vpop.xlane.xlu0 %1834
    %v1836 = vsel %vm733, %v1807, 0.0
    %1837 = vadd.xlane.f32.xlu0 %v1836
    %v1838 = vpop.xlane.xlu0 %1837
    %v1839 = vsel %vm733, %v1809, 0.0
    %1840 = vadd.xlane.f32.xlu0 %v1839
    %v1841 = vpop.xlane.xlu0 %1840
    %v1842 = vsel %vm733, %v1811, 0.0
    %1843 = vadd.xlane.f32.xlu0 %v1842
    %v1844 = vpop.xlane.xlu0 %1843
    %v1845 = vsel %vm733, %v1813, 0.0
    %1846 = vadd.xlane.f32.xlu0 %v1845
    %v1847 = vpop.xlane.xlu0 %1846
    %v1848 = vsel %vm733, %v1815, 0.0
    %1849 = vadd.xlane.f32.xlu0 %v1848
    %v1850 = vpop.xlane.xlu0 %1849
    %v1851 = vsel %vm733, %v1817, 0.0
    %1852 = vadd.xlane.f32.xlu0 %v1851
    %v1853 = vpop.xlane.xlu0 %1852
    %v1854 = vrcp.pop %v1820
    %v1855 = vrcp.pop %v1823
    %v1856 = vrcp.pop %v1826
    %v1857 = vrcp.pop %v1829
    %v1858 = vrcp.pop %v1832
    %v1859 = vrcp.pop %v1835
    %v1860 = vrcp.pop %v1838
    %v1861 = vrcp.pop %v1841
    %v1862 = vrcp.pop %v1844
    %v1863 = vrcp.pop %v1847
    %v1864 = vrcp.pop %v1850
    %v1865 = vrcp.pop %v1853
    %v1866 = vmul.f32 %v1795, %v1854
    %v1867 = vmul.f32 %v1797, %v1855
    %v1868 = vmul.f32 %v1799, %v1856
    %v1869 = vmul.f32 %v1801, %v1857
    %v1870 = vmul.f32 %v1803, %v1858
    %v1871 = vmul.f32 %v1805, %v1859
    %v1872 = vmul.f32 %v1807, %v1860
    %v1873 = vmul.f32 %v1809, %v1861
    %v1874 = vmul.f32 %v1811, %v1862
    %v1875 = vmul.f32 %v1813, %v1863
    %v1876 = vmul.f32 %v1815, %v1864
    %v1877 = vmul.f32 %v1817, %v1865
    %v1878 = vpack.c.bf16 %v1867, %v1866
    %v1879 = vpack.c.bf16 %v1869, %v1868
    %v1880 = vpack.c.bf16 %v1871, %v1870
    %v1881 = vpack.c.bf16 %v1873, %v1872
    %v1882 = vpack.c.bf16 %v1875, %v1874
    %v1883 = vpack.c.bf16 %v1877, %v1876
    %1884 = vrot.lane.b32.xlu0 %v609, 112
    %v1885 = vpop.permute.xlu0 %1884
    %1886 = vrot.lane.b32.xlu0 %v610, 112
    %v1887 = vpop.permute.xlu0 %1886
    %1888 = vrot.lane.b32.xlu0 %v611, 112
    %v1889 = vpop.permute.xlu0 %1888
    %1890 = vrot.lane.b32.xlu0 %v612, 112
    %v1891 = vpop.permute.xlu0 %1890
    %1892 = vrot.lane.b32.xlu0 %v613, 112
    %v1893 = vpop.permute.xlu0 %1892
    %1894 = vrot.lane.b32.xlu0 %v614, 112
    %v1895 = vpop.permute.xlu0 %1894
    %v1903 = vsel %vm733, %v1878, 0
    %v1906 = vsel %vm733, %v1879, 0
    %v1909 = vsel %vm733, %v1880, 0
    %v1912 = vsel %vm733, %v1881, 0
    %v1915 = vsel %vm733, %v1882, 0
    %v1918 = vsel %vm733, %v1883, 0
    %1920 = vmatprep.subr.bf16.mxu0 0
    %1921 = vmatpush1.bf16.msra.mxu0 %v1885
    %1922 = vmatprep.subr.bf16.mxu0 0
    %1923 = vmatpush1.bf16.msra.mxu0 %v1887
    %1924 = vmatprep.subr.bf16.mxu0 0
    %1925 = vmatpush1.bf16.msra.mxu0 %v1889
    %1926 = vmatprep.subr.bf16.mxu0 0
    %1927 = vmatpush1.bf16.msra.mxu0 %v1891
    %1928 = vmatprep.subr.bf16.mxu0 0
    %1929 = vmatpush1.bf16.msra.mxu0 %v1893
    %1930 = vmatprep.subr.bf16.mxu0 0
    %1931 = vmatpush1.bf16.msra.mxu0 %v1895
    %1932 = vmatprep.subr.bf16.mxu0 0
    %1933 = vmatpush1.bf16.msra.mxu0 0
    %1934 = vmatprep.subr.bf16.mxu0 0
    %1935 = vmatpush1.bf16.msra.mxu0 0
    %1936 = vmatprep.subr.bf16.mxu0 0
    %1937 = vmatpush1.bf16.msra.mxu0 0
    %1938 = vmatprep.subr.bf16.mxu0 0
    %1939 = vmatpush1.bf16.msra.mxu0 0
    %1940 = vmatprep.subr.bf16.mxu0 0
    %1941 = vmatpush1.bf16.msra.mxu0 0
    %1942 = vmatprep.subr.bf16.mxu0 0
    %1943 = vmatpush1.bf16.msra.mxu0 0
    %1944 = vmatprep.subr.bf16.mxu0 0
    %1945 = vmatpush1.bf16.msra.mxu0 0
    %1946 = vmatprep.subr.bf16.mxu0 0
    %1947 = vmatpush1.bf16.msra.mxu0 0
    %1948 = vmatprep.subr.bf16.mxu0 0
    %1949 = vmatpush1.bf16.msra.mxu0 0
    %1950 = vmatprep.subr.bf16.mxu0 0
    %1951 = vmatpush1.bf16.msra.mxu0 0
    %1952 = vmatprep.mubr.bf16.mxu0 0
    %1953 = vmatmul.mubr.bf16.gmra.mrb[0].mxu0 %v1903
    %v1954 = vpop.f32.mrb[0].mxu0
    %v1955 = vadd.f32 0.0, %v1954
    %v1956 = vpop.f32.mrb[0].mxu0
    %v1957 = vpop.f32.mrb[0].mxu0
    %v1958 = vadd.f32 0.0, %v1957
    %v1959 = vpop.f32.mrb[0].mxu0
    %1960 = vmatprep.mubr.bf16.mxu0 0
    %1961 = vmatmul.mubr.bf16.gmra.mrb[0].mxu0 %v1906
    %v1962 = vpop.f32.mrb[0].mxu0
    %v1963 = vadd.f32 0.0, %v1962
    %v1964 = vpop.f32.mrb[0].mxu0
    %v1965 = vpop.f32.mrb[0].mxu0
    %v1966 = vadd.f32 0.0, %v1965
    %v1967 = vpop.f32.mrb[0].mxu0
    %1968 = vmatprep.mubr.bf16.mxu0 0
    %1969 = vmatmul.mubr.bf16.gmra.mrb[0].mxu0 %v1909
    %v1970 = vpop.f32.mrb[0].mxu0
    %v1971 = vadd.f32 0.0, %v1970
    %v1972 = vpop.f32.mrb[0].mxu0
    %v1973 = vpop.f32.mrb[0].mxu0
    %v1974 = vadd.f32 0.0, %v1973
    %v1975 = vpop.f32.mrb[0].mxu0
    %1976 = vmatprep.mubr.bf16.mxu0 0
    %1977 = vmatmul.mubr.bf16.gmra.mrb[0].mxu0 %v1912
    %v1978 = vpop.f32.mrb[0].mxu0
    %v1979 = vadd.f32 0.0, %v1978
    %v1980 = vpop.f32.mrb[0].mxu0
    %v1981 = vpop.f32.mrb[0].mxu0
    %v1982 = vadd.f32 0.0, %v1981
    %v1983 = vpop.f32.mrb[0].mxu0
    %1984 = vmatprep.mubr.bf16.mxu0 0
    %1985 = vmatmul.mubr.bf16.gmra.mrb[0].mxu0 %v1915
    %v1986 = vpop.f32.mrb[0].mxu0
    %v1987 = vadd.f32 0.0, %v1986
    %v1988 = vpop.f32.mrb[0].mxu0
    %v1989 = vpop.f32.mrb[0].mxu0
    %v1990 = vadd.f32 0.0, %v1989
    %v1991 = vpop.f32.mrb[0].mxu0
    %1992 = vmatprep.mubr.bf16.mxu0 0
    %1993 = vmatmul.mubr.bf16.gmra.mrb[0].mxu0 %v1918
    %v1994 = vpop.f32.mrb[0].mxu0
    %v1995 = vadd.f32 0.0, %v1994
    %v1996 = vpop.f32.mrb[0].mxu0
    %v1997 = vpop.f32.mrb[0].mxu0
    %v1998 = vadd.f32 0.0, %v1997
    %v1999 = vpop.f32.mrb[0].mxu0
    %2000 = vdwg.mxu0
    %v2001 = vpack.c.bf16 %v1958, %v1955
    %v2002 = vpack.c.bf16 %v1966, %v1963
    %v2003 = vpack.c.bf16 %v1974, %v1971
    %v2004 = vpack.c.bf16 %v1982, %v1979
    %v2005 = vpack.c.bf16 %v1990, %v1987
    %v2006 = vpack.c.bf16 %v1998, %v1995
    %s2007 = scalar_lea.vmem %s2, 8
    %v2008 = vld [vmem:[%s2007] sm:$0xf]
    %v2010 = vsel %vm615, %v2001, 0
    %v2013 = vsel %vm615, %v2002, 0
    %v2016 = vsel %vm615, %v2003, 0
    %v2019 = vsel %vm615, %v2004, 0
    %v2022 = vsel %vm615, %v2005, 0
    %v2025 = vsel %vm615, %v2006, 0
    %v2028 = vsel %vm1418, %v2008, 0
    %2030 = vmatprep.subr.bf16.mxu0 0
    %2031 = vmatpush1.bf16.msra.mxu0 %v2028
    %2032 = vmatprep.subr.bf16.mxu0 0
    %2033 = vmatpush1.bf16.msra.mxu0 0
    %2034 = vmatprep.subr.bf16.mxu0 0
    %2035 = vmatpush1.bf16.msra.mxu0 0
    %2036 = vmatprep.subr.bf16.mxu0 0
    %2037 = vmatpush1.bf16.msra.mxu0 0
    %2038 = vmatprep.subr.bf16.mxu0 0
    %2039 = vmatpush1.bf16.msra.mxu0 0
    %2040 = vmatprep.subr.bf16.mxu0 0
    %2041 = vmatpush1.bf16.msra.mxu0 0
    %2042 = vmatprep.subr.bf16.mxu0 0
    %2043 = vmatpush1.bf16.msra.mxu0 0
    %2044 = vmatprep.subr.bf16.mxu0 0
    %2045 = vmatpush1.bf16.msra.mxu0 0
    %2046 = vmatprep.subr.bf16.mxu0 0
    %2047 = vmatpush1.bf16.msra.mxu0 0
    %2048 = vmatprep.subr.bf16.mxu0 0
    %2049 = vmatpush1.bf16.msra.mxu0 0
    %2050 = vmatprep.subr.bf16.mxu0 0
    %2051 = vmatpush1.bf16.msra.mxu0 0
    %2052 = vmatprep.subr.bf16.mxu0 0
    %2053 = vmatpush1.bf16.msra.mxu0 0
    %2054 = vmatprep.subr.bf16.mxu0 0
    %2055 = vmatpush1.bf16.msra.mxu0 0
    %2056 = vmatprep.subr.bf16.mxu0 0
    %2057 = vmatpush1.bf16.msra.mxu0 0
    %2058 = vmatprep.subr.bf16.mxu0 0
    %2059 = vmatpush1.bf16.msra.mxu0 0
    %2060 = vmatprep.subr.bf16.mxu0 0
    %2061 = vmatpush1.bf16.msra.mxu0 0
    %2062 = vmatprep.mubr.bf16.mxu0 0
    %2063 = vmatmul.mubr.bf16.gmra.mrb[0].mxu0 %v2010
    %v2064 = vpop.f32.mrb[0].mxu0
    %v2065 = vadd.f32 0.0, %v2064
    %v2066 = vpop.f32.mrb[0].mxu0
    %v2067 = vpop.f32.mrb[0].mxu0
    %v2068 = vadd.f32 0.0, %v2067
    %v2069 = vpop.f32.mrb[0].mxu0
    %2070 = vmatprep.mubr.bf16.mxu0 0
    %2071 = vmatmul.mubr.bf16.gmra.mrb[0].mxu0 %v2013
    %v2072 = vpop.f32.mrb[0].mxu0
    %v2073 = vadd.f32 0.0, %v2072
    %v2074 = vpop.f32.mrb[0].mxu0
    %v2075 = vpop.f32.mrb[0].mxu0
    %v2076 = vadd.f32 0.0, %v2075
    %v2077 = vpop.f32.mrb[0].mxu0
    %2078 = vmatprep.mubr.bf16.mxu0 0
    %2079 = vmatmul.mubr.bf16.gmra.mrb[0].mxu0 %v2016
    %v2080 = vpop.f32.mrb[0].mxu0
    %v2081 = vadd.f32 0.0, %v2080
    %v2082 = vpop.f32.mrb[0].mxu0
    %v2083 = vpop.f32.mrb[0].mxu0
    %v2084 = vadd.f32 0.0, %v2083
    %v2085 = vpop.f32.mrb[0].mxu0
    %2086 = vmatprep.mubr.bf16.mxu0 0
    %2087 = vmatmul.mubr.bf16.gmra.mrb[0].mxu0 %v2019
    %v2088 = vpop.f32.mrb[0].mxu0
    %v2089 = vadd.f32 0.0, %v2088
    %v2090 = vpop.f32.mrb[0].mxu0
    %v2091 = vpop.f32.mrb[0].mxu0
    %v2092 = vadd.f32 0.0, %v2091
    %v2093 = vpop.f32.mrb[0].mxu0
    %2094 = vmatprep.mubr.bf16.mxu0 0
    %2095 = vmatmul.mubr.bf16.gmra.mrb[0].mxu0 %v2022
    %v2096 = vpop.f32.mrb[0].mxu0
    %v2097 = vadd.f32 0.0, %v2096
    %v2098 = vpop.f32.mrb[0].mxu0
    %v2099 = vpop.f32.mrb[0].mxu0
    %v2100 = vadd.f32 0.0, %v2099
    %v2101 = vpop.f32.mrb[0].mxu0
    %2102 = vmatprep.mubr.bf16.mxu0 0
    %2103 = vmatmul.mubr.bf16.gmra.mrb[0].mxu0 %v2025
    %v2104 = vpop.f32.mrb[0].mxu0
    %v2105 = vadd.f32 0.0, %v2104
    %v2106 = vpop.f32.mrb[0].mxu0
    %v2107 = vpop.f32.mrb[0].mxu0
    %v2108 = vadd.f32 0.0, %v2107
    %v2109 = vpop.f32.mrb[0].mxu0
    %2110 = vdwg.mxu0
    %v2111 = vadd.f32 %v1559, %v2065
    %v2112 = vadd.f32 %v1562, %v2068
    %v2113 = vadd.f32 %v1567, %v2073
    %v2114 = vadd.f32 %v1570, %v2076
    %v2115 = vadd.f32 %v1575, %v2081
    %v2116 = vadd.f32 %v1578, %v2084
    %v2117 = vadd.f32 %v1583, %v2089
    %v2118 = vadd.f32 %v1586, %v2092
    %v2119 = vadd.f32 %v1591, %v2097
    %v2120 = vadd.f32 %v1594, %v2100
    %v2121 = vadd.f32 %v1599, %v2105
    %v2122 = vadd.f32 %v1602, %v2108
    %2123 = vrot.lane.b32.xlu0 %v597, 104
    %v2124 = vpop.permute.xlu0 %2123
    %2125 = vrot.lane.b32.xlu0 %v598, 104
    %v2126 = vpop.permute.xlu0 %2125
    %2127 = vrot.lane.b32.xlu0 %v599, 104
    %v2128 = vpop.permute.xlu0 %2127
    %2129 = vrot.lane.b32.xlu0 %v600, 104
    %v2130 = vpop.permute.xlu0 %2129
    %2131 = vrot.lane.b32.xlu0 %v601, 104
    %v2132 = vpop.permute.xlu0 %2131
    %2133 = vrot.lane.b32.xlu0 %v602, 104
    %v2134 = vpop.permute.xlu0 %2133
    %2135 = vrot.lane.b32.xlu0 %v603, 104
    %v2136 = vpop.permute.xlu0 %2135
    %2137 = vrot.lane.b32.xlu0 %v604, 104
    %v2138 = vpop.permute.xlu0 %2137
    %2139 = vrot.lane.b32.xlu0 %v605, 104
    %v2140 = vpop.permute.xlu0 %2139
    %2141 = vrot.lane.b32.xlu0 %v606, 104
    %v2142 = vpop.permute.xlu0 %2141
    %2143 = vrot.lane.b32.xlu0 %v607, 104
    %v2144 = vpop.permute.xlu0 %2143
    %2145 = vrot.lane.b32.xlu0 %v608, 104
    %v2146 = vpop.permute.xlu0 %2145
    %v2148 = vsel %vm615, %v2124, 0
    %v2151 = vsel %vm615, %v2126, 0
    %v2154 = vsel %vm615, %v2128, 0
    %v2157 = vsel %vm615, %v2130, 0
    %v2160 = vsel %vm615, %v2132, 0
    %v2163 = vsel %vm615, %v2134, 0
    %v2166 = vsel %vm615, %v2136, 0
    %v2169 = vsel %vm615, %v2138, 0
    %v2172 = vsel %vm615, %v2140, 0
    %v2175 = vsel %vm615, %v2142, 0
    %v2178 = vsel %vm615, %v2144, 0
    %v2181 = vsel %vm615, %v2146, 0
    %2183 = vmatprep.subr.bf16.mxu0 0
    %2184 = vmatpush1.bf16.xpose.msra.mxu0 %v2166
    %2185 = vmatprep.subr.bf16.mxu0 0
    %2186 = vmatpush1.bf16.xpose.msra.mxu0 %v2169
    %2187 = vmatprep.subr.bf16.mxu0 0
    %2188 = vmatpush1.bf16.xpose.msra.mxu0 %v2172
    %2189 = vmatprep.subr.bf16.mxu0 0
    %2190 = vmatpush1.bf16.xpose.msra.mxu0 %v2175
    %2191 = vmatprep.subr.bf16.mxu0 0
    %2192 = vmatpush1.bf16.xpose.msra.mxu0 %v2178
    %2193 = vmatprep.subr.bf16.mxu0 0
    %2194 = vmatpush1.bf16.xpose.msra.mxu0 %v2181
    %2195 = vmatprep.subr.bf16.mxu0 0
    %2196 = vmatpush1.bf16.xpose.msra.mxu0 0
    %2197 = vmatprep.subr.bf16.mxu0 0
    %2198 = vmatpush1.bf16.xpose.msra.mxu0 0
    %2199 = vmatprep.subr.bf16.mxu0 0
    %2200 = vmatpush1.bf16.xpose.msra.mxu0 0
    %2201 = vmatprep.subr.bf16.mxu0 0
    %2202 = vmatpush1.bf16.xpose.msra.mxu0 0
    %2203 = vmatprep.subr.bf16.mxu0 0
    %2204 = vmatpush1.bf16.xpose.msra.mxu0 0
    %2205 = vmatprep.subr.bf16.mxu0 0
    %2206 = vmatpush1.bf16.xpose.msra.mxu0 0
    %2207 = vmatprep.subr.bf16.mxu0 0
    %2208 = vmatpush1.bf16.xpose.msra.mxu0 0
    %2209 = vmatprep.subr.bf16.mxu0 0
    %2210 = vmatpush1.bf16.xpose.msra.mxu0 0
    %2211 = vmatprep.subr.bf16.mxu0 0
    %2212 = vmatpush1.bf16.xpose.msra.mxu0 0
    %2213 = vmatprep.subr.bf16.mxu0 0
    %2214 = vmatpush1.bf16.xpose.msra.mxu0 0
    %2215 = vmatprep.mubr.bf16.mxu0 0
    %2216 = vmatmul.mubr.bf16.gmra.mrb[0].mxu0 %v2148
    %v2217 = vpop.f32.mrb[0].mxu0
    %v2218 = vadd.f32 %v585, %v2217
    %v2219 = vpop.f32.mrb[0].mxu0
    %v2220 = vpop.f32.mrb[0].mxu0
    %v2221 = vadd.f32 %v586, %v2220
    %v2222 = vpop.f32.mrb[0].mxu0
    %2223 = vmatprep.mubr.bf16.mxu0 0
    %2224 = vmatmul.mubr.bf16.gmra.mrb[0].mxu0 %v2151
    %v2225 = vpop.f32.mrb[0].mxu0
    %v2226 = vadd.f32 %v587, %v2225
    %v2227 = vpop.f32.mrb[0].mxu0
    %v2228 = vpop.f32.mrb[0].mxu0
    %v2229 = vadd.f32 %v588, %v2228
    %v2230 = vpop.f32.mrb[0].mxu0
    %2231 = vmatprep.mubr.bf16.mxu0 0
    %2232 = vmatmul.mubr.bf16.gmra.mrb[0].mxu0 %v2154
    %v2233 = vpop.f32.mrb[0].mxu0
    %v2234 = vadd.f32 %v589, %v2233
    %v2235 = vpop.f32.mrb[0].mxu0
    %v2236 = vpop.f32.mrb[0].mxu0
    %v2237 = vadd.f32 %v590, %v2236
    %v2238 = vpop.f32.mrb[0].mxu0
    %2239 = vmatprep.mubr.bf16.mxu0 0
    %2240 = vmatmul.mubr.bf16.gmra.mrb[0].mxu0 %v2157
    %v2241 = vpop.f32.mrb[0].mxu0
    %v2242 = vadd.f32 %v591, %v2241
    %v2243 = vpop.f32.mrb[0].mxu0
    %v2244 = vpop.f32.mrb[0].mxu0
    %v2245 = vadd.f32 %v592, %v2244
    %v2246 = vpop.f32.mrb[0].mxu0
    %2247 = vmatprep.mubr.bf16.mxu0 0
    %2248 = vmatmul.mubr.bf16.gmra.mrb[0].mxu0 %v2160
    %v2249 = vpop.f32.mrb[0].mxu0
    %v2250 = vadd.f32 %v593, %v2249
    %v2251 = vpop.f32.mrb[0].mxu0
    %v2252 = vpop.f32.mrb[0].mxu0
    %v2253 = vadd.f32 %v594, %v2252
    %v2254 = vpop.f32.mrb[0].mxu0
    %2255 = vmatprep.mubr.bf16.mxu0 0
    %2256 = vmatmul.mubr.bf16.gmra.mrb[0].mxu0 %v2163
    %v2257 = vpop.f32.mrb[0].mxu0
    %v2258 = vadd.f32 %v595, %v2257
    %v2259 = vpop.f32.mrb[0].mxu0
    %v2260 = vpop.f32.mrb[0].mxu0
    %v2261 = vadd.f32 %v596, %v2260
    %v2262 = vpop.f32.mrb[0].mxu0
    %2263 = vdwg.mxu0
    %v2264 = vsel %vm733, %v2218, -inf
    %2265 = vmax.xlane.f32.xlu0 %v2264
    %v2266 = vpop.xlane.xlu0 %2265
    %v2267 = vsel %vm733, %v2221, -inf
    %2268 = vmax.xlane.f32.xlu0 %v2267
    %v2269 = vpop.xlane.xlu0 %2268
    %v2270 = vsel %vm733, %v2226, -inf
    %2271 = vmax.xlane.f32.xlu0 %v2270
    %v2272 = vpop.xlane.xlu0 %2271
    %v2273 = vsel %vm733, %v2229, -inf
    %2274 = vmax.xlane.f32.xlu0 %v2273
    %v2275 = vpop.xlane.xlu0 %2274
    %v2276 = vsel %vm733, %v2234, -inf
    %2277 = vmax.xlane.f32.xlu0 %v2276
    %v2278 = vpop.xlane.xlu0 %2277
    %v2279 = vsel %vm733, %v2237, -inf
    %2280 = vmax.xlane.f32.xlu0 %v2279
    %v2281 = vpop.xlane.xlu0 %2280
    %v2282 = vsel %vm733, %v2242, -inf
    %2283 = vmax.xlane.f32.xlu0 %v2282
    %v2284 = vpop.xlane.xlu0 %2283
    %v2285 = vsel %vm733, %v2245, -inf
    %2286 = vmax.xlane.f32.xlu0 %v2285
    %v2287 = vpop.xlane.xlu0 %2286
    %v2288 = vsel %vm733, %v2250, -inf
    %2289 = vmax.xlane.f32.xlu0 %v2288
    %v2290 = vpop.xlane.xlu0 %2289
    %v2291 = vsel %vm733, %v2253, -inf
    %2292 = vmax.xlane.f32.xlu0 %v2291
    %v2293 = vpop.xlane.xlu0 %2292
    %v2294 = vsel %vm733, %v2258, -inf
    %2295 = vmax.xlane.f32.xlu0 %v2294
    %v2296 = vpop.xlane.xlu0 %2295
    %v2297 = vsel %vm733, %v2261, -inf
    %2298 = vmax.xlane.f32.xlu0 %v2297
    %v2299 = vpop.xlane.xlu0 %2298
    %v2300 = vsub.f32 %v2218, %v2266
    %v2301 = vsub.f32 %v2221, %v2269
    %v2302 = vsub.f32 %v2226, %v2272
    %v2303 = vsub.f32 %v2229, %v2275
    %v2304 = vsub.f32 %v2234, %v2278
    %v2305 = vsub.f32 %v2237, %v2281
    %v2306 = vsub.f32 %v2242, %v2284
    %v2307 = vsub.f32 %v2245, %v2287
    %v2308 = vsub.f32 %v2250, %v2290
    %v2309 = vsub.f32 %v2253, %v2293
    %v2310 = vsub.f32 %v2258, %v2296
    %v2311 = vsub.f32 %v2261, %v2299
    %v2312 = vmul.f32 %v2300, 1.442695
    %v2313 = vpow.pop %v2312
    %v2314 = vmul.f32 %v2301, 1.442695
    %v2315 = vpow.pop %v2314
    %v2316 = vmul.f32 %v2302, 1.442695
    %v2317 = vpow.pop %v2316
    %v2318 = vmul.f32 %v2303, 1.442695
    %v2319 = vpow.pop %v2318
    %v2320 = vmul.f32 %v2304, 1.442695
    %v2321 = vpow.pop %v2320
    %v2322 = vmul.f32 %v2305, 1.442695
    %v2323 = vpow.pop %v2322
    %v2324 = vmul.f32 %v2306, 1.442695
    %v2325 = vpow.pop %v2324
    %v2326 = vmul.f32 %v2307, 1.442695
    %v2327 = vpow.pop %v2326
    %v2328 = vmul.f32 %v2308, 1.442695
    %v2329 = vpow.pop %v2328
    %v2330 = vmul.f32 %v2309, 1.442695
    %v2331 = vpow.pop %v2330
    %v2332 = vmul.f32 %v2310, 1.442695
    %v2333 = vpow.pop %v2332
    %v2334 = vmul.f32 %v2311, 1.442695
    %v2335 = vpow.pop %v2334
    %v2336 = vsel %vm733, %v2313, 0.0
    %2337 = vadd.xlane.f32.xlu0 %v2336
    %v2338 = vpop.xlane.xlu0 %2337
    %v2339 = vsel %vm733, %v2315, 0.0
    %2340 = vadd.xlane.f32.xlu0 %v2339
    %v2341 = vpop.xlane.xlu0 %2340
    %v2342 = vsel %vm733, %v2317, 0.0
    %2343 = vadd.xlane.f32.xlu0 %v2342
    %v2344 = vpop.xlane.xlu0 %2343
    %v2345 = vsel %vm733, %v2319, 0.0
    %2346 = vadd.xlane.f32.xlu0 %v2345
    %v2347 = vpop.xlane.xlu0 %2346
    %v2348 = vsel %vm733, %v2321, 0.0
    %2349 = vadd.xlane.f32.xlu0 %v2348
    %v2350 = vpop.xlane.xlu0 %2349
    %v2351 = vsel %vm733, %v2323, 0.0
    %2352 = vadd.xlane.f32.xlu0 %v2351
    %v2353 = vpop.xlane.xlu0 %2352
    %v2354 = vsel %vm733, %v2325, 0.0
    %2355 = vadd.xlane.f32.xlu0 %v2354
    %v2356 = vpop.xlane.xlu0 %2355
    %v2357 = vsel %vm733, %v2327, 0.0
    %2358 = vadd.xlane.f32.xlu0 %v2357
    %v2359 = vpop.xlane.xlu0 %2358
    %v2360 = vsel %vm733, %v2329, 0.0
    %2361 = vadd.xlane.f32.xlu0 %v2360
    %v2362 = vpop.xlane.xlu0 %2361
    %v2363 = vsel %vm733, %v2331, 0.0
    %2364 = vadd.xlane.f32.xlu0 %v2363
    %v2365 = vpop.xlane.xlu0 %2364
    %v2366 = vsel %vm733, %v2333, 0.0
    %2367 = vadd.xlane.f32.xlu0 %v2366
    %v2368 = vpop.xlane.xlu0 %2367
    %v2369 = vsel %vm733, %v2335, 0.0
    %2370 = vadd.xlane.f32.xlu0 %v2369
    %v2371 = vpop.xlane.xlu0 %2370
    %v2372 = vrcp.pop %v2338
    %v2373 = vrcp.pop %v2341
    %v2374 = vrcp.pop %v2344
    %v2375 = vrcp.pop %v2347
    %v2376 = vrcp.pop %v2350
    %v2377 = vrcp.pop %v2353
    %v2378 = vrcp.pop %v2356
    %v2379 = vrcp.pop %v2359
    %v2380 = vrcp.pop %v2362
    %v2381 = vrcp.pop %v2365
    %v2382 = vrcp.pop %v2368
    %v2383 = vrcp.pop %v2371
    %v2384 = vmul.f32 %v2313, %v2372
    %v2385 = vmul.f32 %v2315, %v2373
    %v2386 = vmul.f32 %v2317, %v2374
    %v2387 = vmul.f32 %v2319, %v2375
    %v2388 = vmul.f32 %v2321, %v2376
    %v2389 = vmul.f32 %v2323, %v2377
    %v2390 = vmul.f32 %v2325, %v2378
    %v2391 = vmul.f32 %v2327, %v2379
    %v2392 = vmul.f32 %v2329, %v2380
    %v2393 = vmul.f32 %v2331, %v2381
    %v2394 = vmul.f32 %v2333, %v2382
    %v2395 = vmul.f32 %v2335, %v2383
    %v2396 = vpack.c.bf16 %v2385, %v2384
    %v2397 = vpack.c.bf16 %v2387, %v2386
    %v2398 = vpack.c.bf16 %v2389, %v2388
    %v2399 = vpack.c.bf16 %v2391, %v2390
    %v2400 = vpack.c.bf16 %v2393, %v2392
    %v2401 = vpack.c.bf16 %v2395, %v2394
    %2402 = vrot.lane.b32.xlu0 %v609, 104
    %v2403 = vpop.permute.xlu0 %2402
    %2404 = vrot.lane.b32.xlu0 %v610, 104
    %v2405 = vpop.permute.xlu0 %2404
    %2406 = vrot.lane.b32.xlu0 %v611, 104
    %v2407 = vpop.permute.xlu0 %2406
    %2408 = vrot.lane.b32.xlu0 %v612, 104
    %v2409 = vpop.permute.xlu0 %2408
    %2410 = vrot.lane.b32.xlu0 %v613, 104
    %v2411 = vpop.permute.xlu0 %2410
    %2412 = vrot.lane.b32.xlu0 %v614, 104
    %v2413 = vpop.permute.xlu0 %2412
    %v2421 = vsel %vm733, %v2396, 0
    %v2424 = vsel %vm733, %v2397, 0
    %v2427 = vsel %vm733, %v2398, 0
    %v2430 = vsel %vm733, %v2399, 0
    %v2433 = vsel %vm733, %v2400, 0
    %v2436 = vsel %vm733, %v2401, 0
    %2438 = vmatprep.subr.bf16.mxu0 0
    %2439 = vmatpush1.bf16.msra.mxu0 %v2403
    %2440 = vmatprep.subr.bf16.mxu0 0
    %2441 = vmatpush1.bf16.msra.mxu0 %v2405
    %2442 = vmatprep.subr.bf16.mxu0 0
    %2443 = vmatpush1.bf16.msra.mxu0 %v2407
    %2444 = vmatprep.subr.bf16.mxu0 0
    %2445 = vmatpush1.bf16.msra.mxu0 %v2409
    %2446 = vmatprep.subr.bf16.mxu0 0
    %2447 = vmatpush1.bf16.msra.mxu0 %v2411
    %2448 = vmatprep.subr.bf16.mxu0 0
    %2449 = vmatpush1.bf16.msra.mxu0 %v2413
    %2450 = vmatprep.subr.bf16.mxu0 0
    %2451 = vmatpush1.bf16.msra.mxu0 0
    %2452 = vmatprep.subr.bf16.mxu0 0
    %2453 = vmatpush1.bf16.msra.mxu0 0
    %2454 = vmatprep.subr.bf16.mxu0 0
    %2455 = vmatpush1.bf16.msra.mxu0 0
    %2456 = vmatprep.subr.bf16.mxu0 0
    %2457 = vmatpush1.bf16.msra.mxu0 0
    %2458 = vmatprep.subr.bf16.mxu0 0
    %2459 = vmatpush1.bf16.msra.mxu0 0
    %2460 = vmatprep.subr.bf16.mxu0 0
    %2461 = vmatpush1.bf16.msra.mxu0 0
    %2462 = vmatprep.subr.bf16.mxu0 0
    %2463 = vmatpush1.bf16.msra.mxu0 0
    %2464 = vmatprep.subr.bf16.mxu0 0
    %2465 = vmatpush1.bf16.msra.mxu0 0
    %2466 = vmatprep.subr.bf16.mxu0 0
    %2467 = vmatpush1.bf16.msra.mxu0 0
    %2468 = vmatprep.subr.bf16.mxu0 0
    %2469 = vmatpush1.bf16.msra.mxu0 0
    %2470 = vmatprep.mubr.bf16.mxu0 0
    %2471 = vmatmul.mubr.bf16.gmra.mrb[0].mxu0 %v2421
    %v2472 = vpop.f32.mrb[0].mxu0
    %v2473 = vadd.f32 0.0, %v2472
    %v2474 = vpop.f32.mrb[0].mxu0
    %v2475 = vpop.f32.mrb[0].mxu0
    %v2476 = vadd.f32 0.0, %v2475
    %v2477 = vpop.f32.mrb[0].mxu0
    %2478 = vmatprep.mubr.bf16.mxu0 0
    %2479 = vmatmul.mubr.bf16.gmra.mrb[0].mxu0 %v2424
    %v2480 = vpop.f32.mrb[0].mxu0
    %v2481 = vadd.f32 0.0, %v2480
    %v2482 = vpop.f32.mrb[0].mxu0
    %v2483 = vpop.f32.mrb[0].mxu0
    %v2484 = vadd.f32 0.0, %v2483
    %v2485 = vpop.f32.mrb[0].mxu0
    %2486 = vmatprep.mubr.bf16.mxu0 0
    %2487 = vmatmul.mubr.bf16.gmra.mrb[0].mxu0 %v2427
    %v2488 = vpop.f32.mrb[0].mxu0
    %v2489 = vadd.f32 0.0, %v2488
    %v2490 = vpop.f32.mrb[0].mxu0
    %v2491 = vpop.f32.mrb[0].mxu0
    %v2492 = vadd.f32 0.0, %v2491
    %v2493 = vpop.f32.mrb[0].mxu0
    %2494 = vmatprep.mubr.bf16.mxu0 0
    %2495 = vmatmul.mubr.bf16.gmra.mrb[0].mxu0 %v2430
    %v2496 = vpop.f32.mrb[0].mxu0
    %v2497 = vadd.f32 0.0, %v2496
    %v2498 = vpop.f32.mrb[0].mxu0
    %v2499 = vpop.f32.mrb[0].mxu0
    %v2500 = vadd.f32 0.0, %v2499
    %v2501 = vpop.f32.mrb[0].mxu0
    %2502 = vmatprep.mubr.bf16.mxu0 0
    %2503 = vmatmul.mubr.bf16.gmra.mrb[0].mxu0 %v2433
    %v2504 = vpop.f32.mrb[0].mxu0
    %v2505 = vadd.f32 0.0, %v2504
    %v2506 = vpop.f32.mrb[0].mxu0
    %v2507 = vpop.f32.mrb[0].mxu0
    %v2508 = vadd.f32 0.0, %v2507
    %v2509 = vpop.f32.mrb[0].mxu0
    %2510 = vmatprep.mubr.bf16.mxu0 0
    %2511 = vmatmul.mubr.bf16.gmra.mrb[0].mxu0 %v2436
    %v2512 = vpop.f32.mrb[0].mxu0
    %v2513 = vadd.f32 0.0, %v2512
    %v2514 = vpop.f32.mrb[0].mxu0
    %v2515 = vpop.f32.mrb[0].mxu0
    %v2516 = vadd.f32 0.0, %v2515
    %v2517 = vpop.f32.mrb[0].mxu0
    %2518 = vdwg.mxu0
    %v2519 = vpack.c.bf16 %v2476, %v2473
    %v2520 = vpack.c.bf16 %v2484, %v2481
    %v2521 = vpack.c.bf16 %v2492, %v2489
    %v2522 = vpack.c.bf16 %v2500, %v2497
    %v2523 = vpack.c.bf16 %v2508, %v2505
    %v2524 = vpack.c.bf16 %v2516, %v2513
    %s2525 = scalar_lea.vmem %s2, 12
    %v2526 = vld [vmem:[%s2525] sm:$0xf]
    %v2528 = vsel %vm615, %v2519, 0
    %v2531 = vsel %vm615, %v2520, 0
    %v2534 = vsel %vm615, %v2521, 0
    %v2537 = vsel %vm615, %v2522, 0
    %v2540 = vsel %vm615, %v2523, 0
    %v2543 = vsel %vm615, %v2524, 0
    %v2546 = vsel %vm1418, %v2526, 0
    %2548 = vmatprep.subr.bf16.mxu0 0
    %2549 = vmatpush1.bf16.msra.mxu0 %v2546
    %2550 = vmatprep.subr.bf16.mxu0 0
    %2551 = vmatpush1.bf16.msra.mxu0 0
    %2552 = vmatprep.subr.bf16.mxu0 0
    %2553 = vmatpush1.bf16.msra.mxu0 0
    %2554 = vmatprep.subr.bf16.mxu0 0
    %2555 = vmatpush1.bf16.msra.mxu0 0
    %2556 = vmatprep.subr.bf16.mxu0 0
    %2557 = vmatpush1.bf16.msra.mxu0 0
    %2558 = vmatprep.subr.bf16.mxu0 0
    %2559 = vmatpush1.bf16.msra.mxu0 0
    %2560 = vmatprep.subr.bf16.mxu0 0
    %2561 = vmatpush1.bf16.msra.mxu0 0
    %2562 = vmatprep.subr.bf16.mxu0 0
    %2563 = vmatpush1.bf16.msra.mxu0 0
    %2564 = vmatprep.subr.bf16.mxu0 0
    %2565 = vmatpush1.bf16.msra.mxu0 0
    %2566 = vmatprep.subr.bf16.mxu0 0
    %2567 = vmatpush1.bf16.msra.mxu0 0
    %2568 = vmatprep.subr.bf16.mxu0 0
    %2569 = vmatpush1.bf16.msra.mxu0 0
    %2570 = vmatprep.subr.bf16.mxu0 0
    %2571 = vmatpush1.bf16.msra.mxu0 0
    %2572 = vmatprep.subr.bf16.mxu0 0
    %2573 = vmatpush1.bf16.msra.mxu0 0
    %2574 = vmatprep.subr.bf16.mxu0 0
    %2575 = vmatpush1.bf16.msra.mxu0 0
    %2576 = vmatprep.subr.bf16.mxu0 0
    %2577 = vmatpush1.bf16.msra.mxu0 0
    %2578 = vmatprep.subr.bf16.mxu0 0
    %2579 = vmatpush1.bf16.msra.mxu0 0
    %2580 = vmatprep.mubr.bf16.mxu0 0
    %2581 = vmatmul.mubr.bf16.gmra.mrb[0].mxu0 %v2528
    %v2582 = vpop.f32.mrb[0].mxu0
    %v2583 = vadd.f32 0.0, %v2582
    %v2584 = vpop.f32.mrb[0].mxu0
    %v2585 = vpop.f32.mrb[0].mxu0
    %v2586 = vadd.f32 0.0, %v2585
    %v2587 = vpop.f32.mrb[0].mxu0
    %2588 = vmatprep.mubr.bf16.mxu0 0
    %2589 = vmatmul.mubr.bf16.gmra.mrb[0].mxu0 %v2531
    %v2590 = vpop.f32.mrb[0].mxu0
    %v2591 = vadd.f32 0.0, %v2590
    %v2592 = vpop.f32.mrb[0].mxu0
    %v2593 = vpop.f32.mrb[0].mxu0
    %v2594 = vadd.f32 0.0, %v2593
    %v2595 = vpop.f32.mrb[0].mxu0
    %2596 = vmatprep.mubr.bf16.mxu0 0
    %2597 = vmatmul.mubr.bf16.gmra.mrb[0].mxu0 %v2534
    %v2598 = vpop.f32.mrb[0].mxu0
    %v2599 = vadd.f32 0.0, %v2598
    %v2600 = vpop.f32.mrb[0].mxu0
    %v2601 = vpop.f32.mrb[0].mxu0
    %v2602 = vadd.f32 0.0, %v2601
    %v2603 = vpop.f32.mrb[0].mxu0
    %2604 = vmatprep.mubr.bf16.mxu0 0
    %2605 = vmatmul.mubr.bf16.gmra.mrb[0].mxu0 %v2537
    %v2606 = vpop.f32.mrb[0].mxu0
    %v2607 = vadd.f32 0.0, %v2606
    %v2608 = vpop.f32.mrb[0].mxu0
    %v2609 = vpop.f32.mrb[0].mxu0
    %v2610 = vadd.f32 0.0, %v2609
    %v2611 = vpop.f32.mrb[0].mxu0
    %2612 = vmatprep.mubr.bf16.mxu0 0
    %2613 = vmatmul.mubr.bf16.gmra.mrb[0].mxu0 %v2540
    %v2614 = vpop.f32.mrb[0].mxu0
    %v2615 = vadd.f32 0.0, %v2614
    %v2616 = vpop.f32.mrb[0].mxu0
    %v2617 = vpop.f32.mrb[0].mxu0
    %v2618 = vadd.f32 0.0, %v2617
    %v2619 = vpop.f32.mrb[0].mxu0
    %2620 = vmatprep.mubr.bf16.mxu0 0
    %2621 = vmatmul.mubr.bf16.gmra.mrb[0].mxu0 %v2543
    %v2622 = vpop.f32.mrb[0].mxu0
    %v2623 = vadd.f32 0.0, %v2622
    %v2624 = vpop.f32.mrb[0].mxu0
    %v2625 = vpop.f32.mrb[0].mxu0
    %v2626 = vadd.f32 0.0, %v2625
    %v2627 = vpop.f32.mrb[0].mxu0
    %2628 = vdwg.mxu0
    %v2629 = vadd.f32 %v2111, %v2583
    %v2630 = vadd.f32 %v2112, %v2586
    %v2631 = vadd.f32 %v2113, %v2591
    %v2632 = vadd.f32 %v2114, %v2594
    %v2633 = vadd.f32 %v2115, %v2599
    %v2634 = vadd.f32 %v2116, %v2602
    %v2635 = vadd.f32 %v2117, %v2607
    %v2636 = vadd.f32 %v2118, %v2610
    %v2637 = vadd.f32 %v2119, %v2615
    %v2638 = vadd.f32 %v2120, %v2618
    %v2639 = vadd.f32 %v2121, %v2623
    %v2640 = vadd.f32 %v2122, %v2626
    %v2641 = vadd.f32 %v44, %v2629
    %v2642 = vadd.f32 %v45, %v2630
    %v2643 = vadd.f32 %v46, %v2631
    %v2644 = vadd.f32 %v47, %v2632
    %v2645 = vadd.f32 %v48, %v2633
    %v2646 = vadd.f32 %v49, %v2634
    %v2647 = vadd.f32 %v50, %v2635
    %v2648 = vadd.f32 %v51, %v2636
    %v2649 = vadd.f32 %v52, %v2637
    %v2650 = vadd.f32 %v53, %v2638
    %v2651 = vadd.f32 %v54, %v2639
    %v2652 = vadd.f32 %v55, %v2640
    %v2653 = vlaneseq
    %v2654 = vshrl.u32 %v2653, 7
    %v2655 = vsub.s32 0, %v2654
    %v2656 = vrot.slane %v59, %v2655
    %v2657 = vadd.f32 %v2641, %v2656
    %v2658 = vadd.f32 %v2642, %v2656
    %v2659 = vadd.f32 %v2643, %v2656
    %v2660 = vadd.f32 %v2644, %v2656
    %v2661 = vadd.f32 %v2645, %v2656
    %v2662 = vadd.f32 %v2646, %v2656
    %v2663 = vadd.f32 %v2647, %v2656
    %v2664 = vadd.f32 %v2648, %v2656
    %v2665 = vadd.f32 %v2649, %v2656
    %v2666 = vadd.f32 %v2650, %v2656
    %v2667 = vadd.f32 %v2651, %v2656
    %v2668 = vadd.f32 %v2652, %v2656
    %v2669 = vsel %vm66, %v2657, 0.0
    %2670 = vadd.xlane.f32.xlu0 %v2669
    %v2671 = vpop.xlane.xlu0 %2670
    %v2672 = vsel %vm66, %v2658, 0.0
    %2673 = vadd.xlane.f32.xlu0 %v2672
    %v2674 = vpop.xlane.xlu0 %2673
    %v2675 = vsel %vm66, %v2659, 0.0
    %2676 = vadd.xlane.f32.xlu0 %v2675
    %v2677 = vpop.xlane.xlu0 %2676
    %v2678 = vsel %vm66, %v2660, 0.0
    %2679 = vadd.xlane.f32.xlu0 %v2678
    %v2680 = vpop.xlane.xlu0 %2679
    %v2681 = vsel %vm66, %v2661, 0.0
    %2682 = vadd.xlane.f32.xlu0 %v2681
    %v2683 = vpop.xlane.xlu0 %2682
    %v2684 = vsel %vm66, %v2662, 0.0
    %2685 = vadd.xlane.f32.xlu0 %v2684
    %v2686 = vpop.xlane.xlu0 %2685
    %v2687 = vsel %vm66, %v2663, 0.0
    %2688 = vadd.xlane.f32.xlu0 %v2687
    %v2689 = vpop.xlane.xlu0 %2688
    %v2690 = vsel %vm66, %v2664, 0.0
    %2691 = vadd.xlane.f32.xlu0 %v2690
    %v2692 = vpop.xlane.xlu0 %2691
    %v2693 = vsel %vm66, %v2665, 0.0
    %2694 = vadd.xlane.f32.xlu0 %v2693
    %v2695 = vpop.xlane.xlu0 %2694
    %v2696 = vsel %vm66, %v2666, 0.0
    %2697 = vadd.xlane.f32.xlu0 %v2696
    %v2698 = vpop.xlane.xlu0 %2697
    %v2699 = vsel %vm66, %v2667, 0.0
    %2700 = vadd.xlane.f32.xlu0 %v2699
    %v2701 = vpop.xlane.xlu0 %2700
    %v2702 = vsel %vm66, %v2668, 0.0
    %2703 = vadd.xlane.f32.xlu0 %v2702
    %v2704 = vpop.xlane.xlu0 %2703
    %v2705 = vmul.f32 %v2671, %v103
    %v2706 = vmul.f32 %v2674, %v103
    %v2707 = vmul.f32 %v2677, %v103
    %v2708 = vmul.f32 %v2680, %v103
    %v2709 = vmul.f32 %v2683, %v103
    %v2710 = vmul.f32 %v2686, %v103
    %v2711 = vmul.f32 %v2689, %v103
    %v2712 = vmul.f32 %v2692, %v103
    %v2713 = vmul.f32 %v2695, %v103
    %v2714 = vmul.f32 %v2698, %v103
    %v2715 = vmul.f32 %v2701, %v103
    %v2716 = vmul.f32 %v2704, %v103
    %v2717 = vsub.f32 %v2657, %v2705
    %v2718 = vsub.f32 %v2658, %v2706
    %v2719 = vsub.f32 %v2659, %v2707
    %v2720 = vsub.f32 %v2660, %v2708
    %v2721 = vsub.f32 %v2661, %v2709
    %v2722 = vsub.f32 %v2662, %v2710
    %v2723 = vsub.f32 %v2663, %v2711
    %v2724 = vsub.f32 %v2664, %v2712
    %v2725 = vsub.f32 %v2665, %v2713
    %v2726 = vsub.f32 %v2666, %v2714
    %v2727 = vsub.f32 %v2667, %v2715
    %v2728 = vsub.f32 %v2668, %v2716
    %v2729 = vmul.f32 %v2717, %v2717
    %v2730 = vmul.f32 %v2718, %v2718
    %v2731 = vmul.f32 %v2719, %v2719
    %v2732 = vmul.f32 %v2720, %v2720
    %v2733 = vmul.f32 %v2721, %v2721
    %v2734 = vmul.f32 %v2722, %v2722
    %v2735 = vmul.f32 %v2723, %v2723
    %v2736 = vmul.f32 %v2724, %v2724
    %v2737 = vmul.f32 %v2725, %v2725
    %v2738 = vmul.f32 %v2726, %v2726
    %v2739 = vmul.f32 %v2727, %v2727
    %v2740 = vmul.f32 %v2728, %v2728
    %v2741 = vsel %vm66, %v2729, 0.0
    %2742 = vadd.xlane.f32.xlu0 %v2741
    %v2743 = vpop.xlane.xlu0 %2742
    %v2744 = vsel %vm66, %v2730, 0.0
    %2745 = vadd.xlane.f32.xlu0 %v2744
    %v2746 = vpop.xlane.xlu0 %2745
    %v2747 = vsel %vm66, %v2731, 0.0
    %2748 = vadd.xlane.f32.xlu0 %v2747
    %v2749 = vpop.xlane.xlu0 %2748
    %v2750 = vsel %vm66, %v2732, 0.0
    %2751 = vadd.xlane.f32.xlu0 %v2750
    %v2752 = vpop.xlane.xlu0 %2751
    %v2753 = vsel %vm66, %v2733, 0.0
    %2754 = vadd.xlane.f32.xlu0 %v2753
    %v2755 = vpop.xlane.xlu0 %2754
    %v2756 = vsel %vm66, %v2734, 0.0
    %2757 = vadd.xlane.f32.xlu0 %v2756
    %v2758 = vpop.xlane.xlu0 %2757
    %v2759 = vsel %vm66, %v2735, 0.0
    %2760 = vadd.xlane.f32.xlu0 %v2759
    %v2761 = vpop.xlane.xlu0 %2760
    %v2762 = vsel %vm66, %v2736, 0.0
    %2763 = vadd.xlane.f32.xlu0 %v2762
    %v2764 = vpop.xlane.xlu0 %2763
    %v2765 = vsel %vm66, %v2737, 0.0
    %2766 = vadd.xlane.f32.xlu0 %v2765
    %v2767 = vpop.xlane.xlu0 %2766
    %v2768 = vsel %vm66, %v2738, 0.0
    %2769 = vadd.xlane.f32.xlu0 %v2768
    %v2770 = vpop.xlane.xlu0 %2769
    %v2771 = vsel %vm66, %v2739, 0.0
    %2772 = vadd.xlane.f32.xlu0 %v2771
    %v2773 = vpop.xlane.xlu0 %2772
    %v2774 = vsel %vm66, %v2740, 0.0
    %2775 = vadd.xlane.f32.xlu0 %v2774
    %v2776 = vpop.xlane.xlu0 %2775
    %v2777 = vmul.f32 %v2743, %v103
    %v2778 = vmul.f32 %v2746, %v103
    %v2779 = vmul.f32 %v2749, %v103
    %v2780 = vmul.f32 %v2752, %v103
    %v2781 = vmul.f32 %v2755, %v103
    %v2782 = vmul.f32 %v2758, %v103
    %v2783 = vmul.f32 %v2761, %v103
    %v2784 = vmul.f32 %v2764, %v103
    %v2785 = vmul.f32 %v2767, %v103
    %v2786 = vmul.f32 %v2770, %v103
    %v2787 = vmul.f32 %v2773, %v103
    %v2788 = vmul.f32 %v2776, %v103
    %v2789 = vadd.f32 %v2777, 1e-05
    %v2790 = vadd.f32 %v2778, 1e-05
    %v2791 = vadd.f32 %v2779, 1e-05
    %v2792 = vadd.f32 %v2780, 1e-05
    %v2793 = vadd.f32 %v2781, 1e-05
    %v2794 = vadd.f32 %v2782, 1e-05
    %v2795 = vadd.f32 %v2783, 1e-05
    %v2796 = vadd.f32 %v2784, 1e-05
    %v2797 = vadd.f32 %v2785, 1e-05
    %v2798 = vadd.f32 %v2786, 1e-05
    %v2799 = vadd.f32 %v2787, 1e-05
    %v2800 = vadd.f32 %v2788, 1e-05
    %v2801 = vrsqrt.pop %v2789
    %v2802 = vrsqrt.pop %v2790
    %v2803 = vrsqrt.pop %v2791
    %v2804 = vrsqrt.pop %v2792
    %v2805 = vrsqrt.pop %v2793
    %v2806 = vrsqrt.pop %v2794
    %v2807 = vrsqrt.pop %v2795
    %v2808 = vrsqrt.pop %v2796
    %v2809 = vrsqrt.pop %v2797
    %v2810 = vrsqrt.pop %v2798
    %v2811 = vrsqrt.pop %v2799
    %v2812 = vrsqrt.pop %v2800
    %v2813 = vmul.f32 %v2717, %v2801
    %v2814 = vmul.f32 %v2718, %v2802
    %v2815 = vmul.f32 %v2719, %v2803
    %v2816 = vmul.f32 %v2720, %v2804
    %v2817 = vmul.f32 %v2721, %v2805
    %v2818 = vmul.f32 %v2722, %v2806
    %v2819 = vmul.f32 %v2723, %v2807
    %v2820 = vmul.f32 %v2724, %v2808
    %v2821 = vmul.f32 %v2725, %v2809
    %v2822 = vmul.f32 %v2726, %v2810
    %v2823 = vmul.f32 %v2727, %v2811
    %v2824 = vmul.f32 %v2728, %v2812
    %v2825 = vlaneseq
    %v2826 = vshrl.u32 %v2825, 7
    %v2827 = vsub.s32 0, %v2826
    %v2828 = vrot.slane %v62, %v2827
    %v2829 = vmul.f32 %v2813, %v2828
    %v2830 = vmul.f32 %v2814, %v2828
    %v2831 = vmul.f32 %v2815, %v2828
    %v2832 = vmul.f32 %v2816, %v2828
    %v2833 = vmul.f32 %v2817, %v2828
    %v2834 = vmul.f32 %v2818, %v2828
    %v2835 = vmul.f32 %v2819, %v2828
    %v2836 = vmul.f32 %v2820, %v2828
    %v2837 = vmul.f32 %v2821, %v2828
    %v2838 = vmul.f32 %v2822, %v2828
    %v2839 = vmul.f32 %v2823, %v2828
    %v2840 = vmul.f32 %v2824, %v2828
    %v2841 = vlaneseq
    %v2842 = vshrl.u32 %v2841, 7
    %v2843 = vsub.s32 0, %v2842
    %v2844 = vrot.slane %v63, %v2843
    %v2845 = vadd.f32 %v2829, %v2844
    %v2846 = vadd.f32 %v2830, %v2844
    %v2847 = vadd.f32 %v2831, %v2844
    %v2848 = vadd.f32 %v2832, %v2844
    %v2849 = vadd.f32 %v2833, %v2844
    %v2850 = vadd.f32 %v2834, %v2844
    %v2851 = vadd.f32 %v2835, %v2844
    %v2852 = vadd.f32 %v2836, %v2844
    %v2853 = vadd.f32 %v2837, %v2844
    %v2854 = vadd.f32 %v2838, %v2844
    %v2855 = vadd.f32 %v2839, %v2844
    %v2856 = vadd.f32 %v2840, %v2844
    %v2857 = vpack.c.bf16 %v2846, %v2845
    %v2858 = vpack.c.bf16 %v2848, %v2847
    %v2859 = vpack.c.bf16 %v2850, %v2849
    %v2860 = vpack.c.bf16 %v2852, %v2851
    %v2861 = vpack.c.bf16 %v2854, %v2853
    %v2862 = vpack.c.bf16 %v2856, %v2855
    %v2863 = vld [vmem:[%s3] sm:$0xf]
    %v2864 = vld [vmem:[%s3 + $0x4] sm:$0xf]
    %v2865 = vld [vmem:[%s3 + $0x8] sm:$0xf]
    %v2866 = vld [vmem:[%s3 + $0xc] sm:$0xf]
    %v2867 = vlaneseq
    %v2868 = vshrl.u32 %v2867, 7
    %v2869 = vsub.s32 0, %v2868
    %v2870 = vrot.slane %v65, %v2869
    %v2875 = vunpack.c.l.b16 %v2863
    %v2876 = vunpack.c.l.b16 %v2864
    %v2877 = vunpack.c.l.b16 %v2865
    %v2878 = vunpack.c.l.b16 %v2866
    %v2879 = vpack.c.b16 %v2876, %v2875
    %v2880 = vpack.c.b16 %v2878, %v2877
    %v2884 = vsel %vm66, %v2857, 0
    %v2887 = vsel %vm66, %v2858, 0
    %v2890 = vsel %vm66, %v2859, 0
    %v2893 = vsel %vm66, %v2860, 0
    %v2896 = vsel %vm66, %v2861, 0
    %v2899 = vsel %vm66, %v2862, 0
    %2901 = vmatprep.subr.bf16.mxu0 0
    %2902 = vmatpush1.bf16.msra.mxu0 %v2879
    %2903 = vmatprep.subr.bf16.mxu0 0
    %2904 = vmatpush1.bf16.msra.mxu0 %v2880
    %2905 = vmatprep.subr.bf16.mxu0 0
    %2906 = vmatpush1.bf16.msra.mxu0 0
    %2907 = vmatprep.subr.bf16.mxu0 0
    %2908 = vmatpush1.bf16.msra.mxu0 0
    %2909 = vmatprep.subr.bf16.mxu0 0
    %2910 = vmatpush1.bf16.msra.mxu0 0
    %2911 = vmatprep.subr.bf16.mxu0 0
    %2912 = vmatpush1.bf16.msra.mxu0 0
    %2913 = vmatprep.subr.bf16.mxu0 0
    %2914 = vmatpush1.bf16.msra.mxu0 0
    %2915 = vmatprep.subr.bf16.mxu0 0
    %2916 = vmatpush1.bf16.msra.mxu0 0
    %2917 = vmatprep.subr.bf16.mxu0 0
    %2918 = vmatpush1.bf16.msra.mxu0 0
    %2919 = vmatprep.subr.bf16.mxu0 0
    %2920 = vmatpush1.bf16.msra.mxu0 0
    %2921 = vmatprep.subr.bf16.mxu0 0
    %2922 = vmatpush1.bf16.msra.mxu0 0
    %2923 = vmatprep.subr.bf16.mxu0 0
    %2924 = vmatpush1.bf16.msra.mxu0 0
    %2925 = vmatprep.subr.bf16.mxu0 0
    %2926 = vmatpush1.bf16.msra.mxu0 0
    %2927 = vmatprep.subr.bf16.mxu0 0
    %2928 = vmatpush1.bf16.msra.mxu0 0
    %2929 = vmatprep.subr.bf16.mxu0 0
    %2930 = vmatpush1.bf16.msra.mxu0 0
    %2931 = vmatprep.subr.bf16.mxu0 0
    %2932 = vmatpush1.bf16.msra.mxu0 0
    %2933 = vmatprep.mubr.bf16.mxu0 0
    %2934 = vmatmul.mubr.bf16.gmra.mrb[0].mxu0 %v2884
    %v2935 = vpop.f32.mrb[0].mxu0
    %v2936 = vadd.f32 %v2870, %v2935
    %v2937 = vpop.f32.mrb[0].mxu0
    %v2938 = vpop.f32.mrb[0].mxu0
    %v2939 = vadd.f32 %v2870, %v2938
    %v2940 = vpop.f32.mrb[0].mxu0
    %2941 = vmatprep.mubr.bf16.mxu0 0
    %2942 = vmatmul.mubr.bf16.gmra.mrb[0].mxu0 %v2887
    %v2943 = vpop.f32.mrb[0].mxu0
    %v2944 = vadd.f32 %v2870, %v2943
    %v2945 = vpop.f32.mrb[0].mxu0
    %v2946 = vpop.f32.mrb[0].mxu0
    %v2947 = vadd.f32 %v2870, %v2946
    %v2948 = vpop.f32.mrb[0].mxu0
    %2949 = vmatprep.mubr.bf16.mxu0 0
    %2950 = vmatmul.mubr.bf16.gmra.mrb[0].mxu0 %v2890
    %v2951 = vpop.f32.mrb[0].mxu0
    %v2952 = vadd.f32 %v2870, %v2951
    %v2953 = vpop.f32.mrb[0].mxu0
    %v2954 = vpop.f32.mrb[0].mxu0
    %v2955 = vadd.f32 %v2870, %v2954
    %v2956 = vpop.f32.mrb[0].mxu0
    %2957 = vmatprep.mubr.bf16.mxu0 0
    %2958 = vmatmul.mubr.bf16.gmra.mrb[0].mxu0 %v2893
    %v2959 = vpop.f32.mrb[0].mxu0
    %v2960 = vadd.f32 %v2870, %v2959
    %v2961 = vpop.f32.mrb[0].mxu0
    %v2962 = vpop.f32.mrb[0].mxu0
    %v2963 = vadd.f32 %v2870, %v2962
    %v2964 = vpop.f32.mrb[0].mxu0
    %2965 = vmatprep.mubr.bf16.mxu0 0
    %2966 = vmatmul.mubr.bf16.gmra.mrb[0].mxu0 %v2896
    %v2967 = vpop.f32.mrb[0].mxu0
    %v2968 = vadd.f32 %v2870, %v2967
    %v2969 = vpop.f32.mrb[0].mxu0
    %v2970 = vpop.f32.mrb[0].mxu0
    %v2971 = vadd.f32 %v2870, %v2970
    %v2972 = vpop.f32.mrb[0].mxu0
    %2973 = vmatprep.mubr.bf16.mxu0 0
    %2974 = vmatmul.mubr.bf16.gmra.mrb[0].mxu0 %v2899
    %v2975 = vpop.f32.mrb[0].mxu0
    %v2976 = vadd.f32 %v2870, %v2975
    %v2977 = vpop.f32.mrb[0].mxu0
    %v2978 = vpop.f32.mrb[0].mxu0
    %v2979 = vadd.f32 %v2870, %v2978
    %v2980 = vpop.f32.mrb[0].mxu0
    %2981 = vdwg.mxu0
    %v2982 = vmul.f32 %v2936, %v2936
    %v2983 = vmul.f32 %v2939, %v2939
    %v2984 = vmul.f32 %v2944, %v2944
    %v2985 = vmul.f32 %v2947, %v2947
    %v2986 = vmul.f32 %v2952, %v2952
    %v2987 = vmul.f32 %v2955, %v2955
    %v2988 = vmul.f32 %v2960, %v2960
    %v2989 = vmul.f32 %v2963, %v2963
    %v2990 = vmul.f32 %v2968, %v2968
    %v2991 = vmul.f32 %v2971, %v2971
    %v2992 = vmul.f32 %v2976, %v2976
    %v2993 = vmul.f32 %v2979, %v2979
    %v2994 = vmul.f32 %v2936, %v2982
    %v2995 = vmul.f32 %v2939, %v2983
    %v2996 = vmul.f32 %v2944, %v2984
    %v2997 = vmul.f32 %v2947, %v2985
    %v2998 = vmul.f32 %v2952, %v2986
    %v2999 = vmul.f32 %v2955, %v2987
    %v3000 = vmul.f32 %v2960, %v2988
    %v3001 = vmul.f32 %v2963, %v2989
    %v3002 = vmul.f32 %v2968, %v2990
    %v3003 = vmul.f32 %v2971, %v2991
    %v3004 = vmul.f32 %v2976, %v2992
    %v3005 = vmul.f32 %v2979, %v2993
    %v3006 = vmul.f32 %v2994, 0.044715
    %v3007 = vmul.f32 %v2995, 0.044715
    %v3008 = vmul.f32 %v2996, 0.044715
    %v3009 = vmul.f32 %v2997, 0.044715
    %v3010 = vmul.f32 %v2998, 0.044715
    %v3011 = vmul.f32 %v2999, 0.044715
    %v3012 = vmul.f32 %v3000, 0.044715
    %v3013 = vmul.f32 %v3001, 0.044715
    %v3014 = vmul.f32 %v3002, 0.044715
    %v3015 = vmul.f32 %v3003, 0.044715
    %v3016 = vmul.f32 %v3004, 0.044715
    %v3017 = vmul.f32 %v3005, 0.044715
    %v3018 = vadd.f32 %v2936, %v3006
    %v3019 = vadd.f32 %v2939, %v3007
    %v3020 = vadd.f32 %v2944, %v3008
    %v3021 = vadd.f32 %v2947, %v3009
    %v3022 = vadd.f32 %v2952, %v3010
    %v3023 = vadd.f32 %v2955, %v3011
    %v3024 = vadd.f32 %v2960, %v3012
    %v3025 = vadd.f32 %v2963, %v3013
    %v3026 = vadd.f32 %v2968, %v3014
    %v3027 = vadd.f32 %v2971, %v3015
    %v3028 = vadd.f32 %v2976, %v3016
    %v3029 = vadd.f32 %v2979, %v3017
    %v3030 = vmul.f32 %v3018, 0.7978846
    %v3031 = vmul.f32 %v3019, 0.7978846
    %v3032 = vmul.f32 %v3020, 0.7978846
    %v3033 = vmul.f32 %v3021, 0.7978846
    %v3034 = vmul.f32 %v3022, 0.7978846
    %v3035 = vmul.f32 %v3023, 0.7978846
    %v3036 = vmul.f32 %v3024, 0.7978846
    %v3037 = vmul.f32 %v3025, 0.7978846
    %v3038 = vmul.f32 %v3026, 0.7978846
    %v3039 = vmul.f32 %v3027, 0.7978846
    %v3040 = vmul.f32 %v3028, 0.7978846
    %v3041 = vmul.f32 %v3029, 0.7978846
    %v3042 = vtanh.pop %v3030
    %v3043 = vtanh.pop %v3031
    %v3044 = vtanh.pop %v3032
    %v3045 = vtanh.pop %v3033
    %v3046 = vtanh.pop %v3034
    %v3047 = vtanh.pop %v3035
    %v3048 = vtanh.pop %v3036
    %v3049 = vtanh.pop %v3037
    %v3050 = vtanh.pop %v3038
    %v3051 = vtanh.pop %v3039
    %v3052 = vtanh.pop %v3040
    %v3053 = vtanh.pop %v3041
    %v3054 = vadd.f32 %v3042, 1.0
    %v3055 = vadd.f32 %v3043, 1.0
    %v3056 = vadd.f32 %v3044, 1.0
    %v3057 = vadd.f32 %v3045, 1.0
    %v3058 = vadd.f32 %v3046, 1.0
    %v3059 = vadd.f32 %v3047, 1.0
    %v3060 = vadd.f32 %v3048, 1.0
    %v3061 = vadd.f32 %v3049, 1.0
    %v3062 = vadd.f32 %v3050, 1.0
    %v3063 = vadd.f32 %v3051, 1.0
    %v3064 = vadd.f32 %v3052, 1.0
    %v3065 = vadd.f32 %v3053, 1.0
    %v3066 = vmul.f32 %v3054, 0.5
    %v3067 = vmul.f32 %v3055, 0.5
    %v3068 = vmul.f32 %v3056, 0.5
    %v3069 = vmul.f32 %v3057, 0.5
    %v3070 = vmul.f32 %v3058, 0.5
    %v3071 = vmul.f32 %v3059, 0.5
    %v3072 = vmul.f32 %v3060, 0.5
    %v3073 = vmul.f32 %v3061, 0.5
    %v3074 = vmul.f32 %v3062, 0.5
    %v3075 = vmul.f32 %v3063, 0.5
    %v3076 = vmul.f32 %v3064, 0.5
    %v3077 = vmul.f32 %v3065, 0.5
    %v3078 = vmul.f32 %v2936, %v3066
    %v3079 = vmul.f32 %v2939, %v3067
    %v3080 = vmul.f32 %v2944, %v3068
    %v3081 = vmul.f32 %v2947, %v3069
    %v3082 = vmul.f32 %v2952, %v3070
    %v3083 = vmul.f32 %v2955, %v3071
    %v3084 = vmul.f32 %v2960, %v3072
    %v3085 = vmul.f32 %v2963, %v3073
    %v3086 = vmul.f32 %v2968, %v3074
    %v3087 = vmul.f32 %v2971, %v3075
    %v3088 = vmul.f32 %v2976, %v3076
    %v3089 = vmul.f32 %v2979, %v3077
    %v3090 = vpack.c.bf16 %v3079, %v3078
    %v3091 = vpack.c.bf16 %v3081, %v3080
    %v3092 = vpack.c.bf16 %v3083, %v3082
    %v3093 = vpack.c.bf16 %v3085, %v3084
    %v3094 = vpack.c.bf16 %v3087, %v3086
    %v3095 = vpack.c.bf16 %v3089, %v3088
    %v3096 = vld [vmem:[%s4] sm:$0xf]
    %v3097 = vld [vmem:[%s4 + $0x4] sm:$0xf]
    %v3098 = vld [vmem:[%s4 + $0x8] sm:$0xf]
    %v3099 = vld [vmem:[%s4 + $0xc] sm:$0xf]
    %v3100 = vld [vmem:[%s4 + $0x10] sm:$0xf]
    %v3101 = vld [vmem:[%s4 + $0x14] sm:$0xf]
    %v3102 = vld [vmem:[%s4 + $0x18] sm:$0xf]
    %v3103 = vld [vmem:[%s4 + $0x1c] sm:$0xf]
    %v3104 = vld [vmem:[%s4 + $0x20] sm:$0xf]
    %v3105 = vld [vmem:[%s4 + $0x24] sm:$0xf]
    %v3106 = vld [vmem:[%s4 + $0x28] sm:$0xf]
    %v3107 = vld [vmem:[%s4 + $0x2c] sm:$0xf]
    %v3108 = vld [vmem:[%s4 + $0x30] sm:$0xf]
    %v3109 = vld [vmem:[%s4 + $0x34] sm:$0xf]
    %v3110 = vld [vmem:[%s4 + $0x38] sm:$0xf]
    %v3111 = vld [vmem:[%s4 + $0x3c] sm:$0xf]
    %v3112 = vlaneseq
    %v3113 = vshrl.u32 %v3112, 7
    %v3114 = vsub.s32 0, %v3113
    %v3115 = vrot.slane %v64, %v3114
    %v3132 = vunpack.c.l.b16 %v3096
    %v3133 = vunpack.c.l.b16 %v3097
    %v3134 = vunpack.c.l.b16 %v3098
    %v3135 = vunpack.c.l.b16 %v3099
    %v3136 = vunpack.c.l.b16 %v3100
    %v3137 = vunpack.c.l.b16 %v3101
    %v3138 = vunpack.c.l.b16 %v3102
    %v3139 = vunpack.c.l.b16 %v3103
    %v3140 = vunpack.c.l.b16 %v3104
    %v3141 = vunpack.c.l.b16 %v3105
    %v3142 = vunpack.c.l.b16 %v3106
    %v3143 = vunpack.c.l.b16 %v3107
    %v3144 = vunpack.c.l.b16 %v3108
    %v3145 = vunpack.c.l.b16 %v3109
    %v3146 = vunpack.c.l.b16 %v3110
    %v3147 = vunpack.c.l.b16 %v3111
    %v3148 = vpack.c.b16 %v3133, %v3132
    %v3149 = vpack.c.b16 %v3135, %v3134
    %v3150 = vpack.c.b16 %v3137, %v3136
    %v3151 = vpack.c.b16 %v3139, %v3138
    %v3152 = vpack.c.b16 %v3141, %v3140
    %v3153 = vpack.c.b16 %v3143, %v3142
    %v3154 = vpack.c.b16 %v3145, %v3144
    %v3155 = vpack.c.b16 %v3147, %v3146
    %3164 = vmatprep.subr.bf16.mxu0 0
    %3165 = vmatpush1.bf16.msra.mxu0 %v3148
    %3166 = vmatprep.subr.bf16.mxu0 0
    %3167 = vmatpush1.bf16.msra.mxu0 %v3149
    %3168 = vmatprep.subr.bf16.mxu0 0
    %3169 = vmatpush1.bf16.msra.mxu0 %v3150
    %3170 = vmatprep.subr.bf16.mxu0 0
    %3171 = vmatpush1.bf16.msra.mxu0 %v3151
    %3172 = vmatprep.subr.bf16.mxu0 0
    %3173 = vmatpush1.bf16.msra.mxu0 %v3152
    %3174 = vmatprep.subr.bf16.mxu0 0
    %3175 = vmatpush1.bf16.msra.mxu0 %v3153
    %3176 = vmatprep.subr.bf16.mxu0 0
    %3177 = vmatpush1.bf16.msra.mxu0 %v3154
    %3178 = vmatprep.subr.bf16.mxu0 0
    %3179 = vmatpush1.bf16.msra.mxu0 %v3155
    %3180 = vmatprep.subr.bf16.mxu0 0
    %3181 = vmatpush1.bf16.msra.mxu0 0
    %3182 = vmatprep.subr.bf16.mxu0 0
    %3183 = vmatpush1.bf16.msra.mxu0 0
    %3184 = vmatprep.subr.bf16.mxu0 0
    %3185 = vmatpush1.bf16.msra.mxu0 0
    %3186 = vmatprep.subr.bf16.mxu0 0
    %3187 = vmatpush1.bf16.msra.mxu0 0
    %3188 = vmatprep.subr.bf16.mxu0 0
    %3189 = vmatpush1.bf16.msra.mxu0 0
    %3190 = vmatprep.subr.bf16.mxu0 0
    %3191 = vmatpush1.bf16.msra.mxu0 0
    %3192 = vmatprep.subr.bf16.mxu0 0
    %3193 = vmatpush1.bf16.msra.mxu0 0
    %3194 = vmatprep.subr.bf16.mxu0 0
    %3195 = vmatpush1.bf16.msra.mxu0 0
    %3196 = vmatprep.mubr.bf16.mxu0 0
    %3197 = vmatmul.mubr.bf16.gmra.mrb[0].mxu0 %v3090
    %v3198 = vpop.f32.mrb[0].mxu0
    %v3199 = vadd.f32 %v3115, %v3198
    %v3200 = vpop.f32.mrb[0].mxu0
    %v3201 = vpop.f32.mrb[0].mxu0
    %v3202 = vadd.f32 %v3115, %v3201
    %v3203 = vpop.f32.mrb[0].mxu0
    %3204 = vmatprep.mubr.bf16.mxu0 0
    %3205 = vmatmul.mubr.bf16.gmra.mrb[0].mxu0 %v3091
    %v3206 = vpop.f32.mrb[0].mxu0
    %v3207 = vadd.f32 %v3115, %v3206
    %v3208 = vpop.f32.mrb[0].mxu0
    %v3209 = vpop.f32.mrb[0].mxu0
    %v3210 = vadd.f32 %v3115, %v3209
    %v3211 = vpop.f32.mrb[0].mxu0
    %3212 = vmatprep.mubr.bf16.mxu0 0
    %3213 = vmatmul.mubr.bf16.gmra.mrb[0].mxu0 %v3092
    %v3214 = vpop.f32.mrb[0].mxu0
    %v3215 = vadd.f32 %v3115, %v3214
    %v3216 = vpop.f32.mrb[0].mxu0
    %v3217 = vpop.f32.mrb[0].mxu0
    %v3218 = vadd.f32 %v3115, %v3217
    %v3219 = vpop.f32.mrb[0].mxu0
    %3220 = vmatprep.mubr.bf16.mxu0 0
    %3221 = vmatmul.mubr.bf16.gmra.mrb[0].mxu0 %v3093
    %v3222 = vpop.f32.mrb[0].mxu0
    %v3223 = vadd.f32 %v3115, %v3222
    %v3224 = vpop.f32.mrb[0].mxu0
    %v3225 = vpop.f32.mrb[0].mxu0
    %v3226 = vadd.f32 %v3115, %v3225
    %v3227 = vpop.f32.mrb[0].mxu0
    %3228 = vmatprep.mubr.bf16.mxu0 0
    %3229 = vmatmul.mubr.bf16.gmra.mrb[0].mxu0 %v3094
    %v3230 = vpop.f32.mrb[0].mxu0
    %v3231 = vadd.f32 %v3115, %v3230
    %v3232 = vpop.f32.mrb[0].mxu0
    %v3233 = vpop.f32.mrb[0].mxu0
    %v3234 = vadd.f32 %v3115, %v3233
    %v3235 = vpop.f32.mrb[0].mxu0
    %3236 = vmatprep.mubr.bf16.mxu0 0
    %3237 = vmatmul.mubr.bf16.gmra.mrb[0].mxu0 %v3095
    %v3238 = vpop.f32.mrb[0].mxu0
    %v3239 = vadd.f32 %v3115, %v3238
    %v3240 = vpop.f32.mrb[0].mxu0
    %v3241 = vpop.f32.mrb[0].mxu0
    %v3242 = vadd.f32 %v3115, %v3241
    %v3243 = vpop.f32.mrb[0].mxu0
    %3244 = vdwg.mxu0
    %v3245 = vadd.f32 %v2657, %v3199
    %v3246 = vadd.f32 %v2658, %v3202
    %v3247 = vadd.f32 %v2659, %v3207
    %v3248 = vadd.f32 %v2660, %v3210
    %v3249 = vadd.f32 %v2661, %v3215
    %v3250 = vadd.f32 %v2662, %v3218
    %v3251 = vadd.f32 %v2663, %v3223
    %v3252 = vadd.f32 %v2664, %v3226
    %v3253 = vadd.f32 %v2665, %v3231
    %v3254 = vadd.f32 %v2666, %v3234
    %v3255 = vadd.f32 %v2667, %v3239
    %v3256 = vadd.f32 %v2668, %v3242
    %s3257 = sld [smem:[#allocation2]]
    %v3258 = vstv %s3257
    %v3259 = vmul.f32 %v3258, %v3245
    %v3260 = vmul.f32 %v3258, %v3246
    %s3261 = sld [smem:[#allocation2 + $0x1]]
    %v3262 = vstv %s3261
    %v3263 = vmul.f32 %v3262, %v3247
    %v3264 = vmul.f32 %v3262, %v3248
    %v3265 = vadd.f32 %v3259, %v3263
    %v3266 = vadd.f32 %v3260, %v3264
    %s3267 = sld [smem:[#allocation2 + $0x2]]
    %v3268 = vstv %s3267
    %v3269 = vmul.f32 %v3268, %v3249
    %v3270 = vmul.f32 %v3268, %v3250
    %v3271 = vadd.f32 %v3265, %v3269
    %v3272 = vadd.f32 %v3266, %v3270
    %3273 = vst.msk [vmem:[#allocation5] sm:$0xff] %vm66, %v3271
    %3274 = vst.msk [vmem:[#allocation5 + $0x8] sm:$0xff] %vm66, %v3272
    %s3275 = sld [smem:[#allocation2]]
    %v3276 = vstv %s3275
    %v3277 = vmul.f32 %v3276, %v3251
    %v3278 = vmul.f32 %v3276, %v3252
    %s3279 = sld [smem:[#allocation2 + $0x1]]
    %v3280 = vstv %s3279
    %v3281 = vmul.f32 %v3280, %v3253
    %v3282 = vmul.f32 %v3280, %v3254
    %v3283 = vadd.f32 %v3277, %v3281
    %v3284 = vadd.f32 %v3278, %v3282
    %s3285 = sld [smem:[#allocation2 + $0x2]]
    %v3286 = vstv %s3285
    %v3287 = vmul.f32 %v3286, %v3255
    %v3288 = vmul.f32 %v3286, %v3256
    %v3289 = vadd.f32 %v3283, %v3287
    %v3290 = vadd.f32 %v3284, %v3288
    %s3291 = scalar_lea.vmem [#allocation5], 16
    %3292 = vst.msk [vmem:[%s3291] sm:$0xff] %vm66, %v3289
    %3293 = vst.msk [vmem:[%s3291 + $0x8] sm:$0xff] %vm66, %v3290
    // Predicated region
    $region38: #{tpu_custom_call.1} parent=1 // pred_check
      _
    $region39: #{tpu_custom_call.1} parent=1 // pred_check_branch
      %3295 = sbr.rel (0) target = $region41
    $region40: #{tpu_custom_call.1} parent=1 // pred_region
      %s3297 = ssub.s32 512, 512
      %3298 = vsyncadd [#allocation3], %s3297
      %s3299 = sshll.u32 [#allocation5], 4
      %s3300 = int_to_ptr.vmem [resolvable:$true] %s3299
      %3305 = dma.vmem_to_hbm [thread:$0]  %s3300, 512, %s8, [#allocation3], 128, 128, 8
    $region41: #{tpu_custom_call.1} parent=1 // pred_fallthru
      _
    // Predicated region
    $region42: #{tpu_custom_call.1} parent=1 // pred_check
      _
    $region43: #{tpu_custom_call.1} parent=1 // pred_check_branch
      %3307 = sbr.rel (0) target = $region45
    $region44: #{tpu_custom_call.1} parent=1 // pred_region
      %3308 = dma.done [#allocation3], 512
    $region45: #{tpu_custom_call.1} parent=1 // pred_fallthru
      _
    %3309 = vsyncpa [#allocation3], 1
    %3310 = vsyncpa [#allocation4], 1

</llo_original>
